<compile_context>
chip_gen: v6e
topology: v6e:2x2x1
jax: 0.10.0
libtpu: 0.0.40
codegen_flags: <defaults>
</compile_context>

<pallas_src>
import functools

import numpy as np
import jax
import jax.numpy as jnp
from jax import lax
from jax.experimental import pallas as pl
from jax.experimental.pallas import tpu as pltpu


def _round_up(x, m):
    return ((x + m - 1) // m) * m


# ---------------------------------------------------------------------------
# Fused whole-network kernel (one grid step = one image)
# ---------------------------------------------------------------------------
def _fused_forward_kernel(x_ref, *args, dims):
    """Fused eval-mode forward for one image.

    dims: tuple of (H, W, Cin, Cout) per conv block (pre-pool spatial size).
    args layout:
      inputs : wt_0, b_0, ..., wt_{L-1}, b_{L-1}, w1p, b1p, w2p, b2p
      output : o_ref                                   (1, 1, Cp)
      scratch: col_0, hbuf_0, ..., col_{L-1}, hbuf_{L-1}, pad_1..pad_{L-1}, fbuf
    """
    L = len(dims)
    conv_refs = args[:2 * L]
    w1_ref, b1_ref, w2_ref, b2_ref = args[2 * L: 2 * L + 4]
    o_ref = args[2 * L + 4]
    sc = list(args[2 * L + 5:])
    col_refs = [sc[2 * l] for l in range(L)]
    hbuf_refs = [sc[2 * l + 1] for l in range(L)]
    pad_refs = sc[2 * L: 2 * L + (L - 1)]
    fbuf = sc[-1]

    def conv_block(src, l):
        """3x3 'same' conv + bias + ReLU + 2x2/2 max-pool for layer l.
        src: 3-D (H+2, W+2, Cin) ref (zero-padded input).
        Returns pooled activations as (Ho*Wo, Cout) value (NHWC-flat rows)."""
        H, W, Cin, Cout = dims[l]
        Ho, Wo = H // 2, W // 2
        wt_ref, b_ref = conv_refs[2 * l], conv_refs[2 * l + 1]
        col_ref, hbuf = col_refs[l], hbuf_refs[l]

        y_par = []
        for q in (0, 1):                       # output-row parity (fuses the H-pool)
            # im2col for output rows h = 2m+q (all w): one (Ho*W, 9*Cin) buffer,
            # one MXU matmul against the (9*Cin, Cout) tap matrix.
            for t in range(9):
                dy, dx = t // 3, t % 3
                patch = src[pl.ds(dy + q, Ho, 2), dx:dx + W, :]       # (Ho, W, Cin)
                col_ref[:, t * Cin:(t + 1) * Cin] = patch.reshape(Ho * W, Cin)
            y_par.append(jnp.dot(col_ref[...], wt_ref[...],
                                 preferred_element_type=jnp.float32))
        hmax = jnp.maximum(y_par[0], y_par[1])        # max over h-pairs, rows (ho, w)

        # Max over w-pairs: adjacent rows -> sublane-stride-2 loads from VMEM scratch.
        hbuf[...] = hmax
        wmax = jnp.maximum(hbuf[pl.ds(0, Ho * Wo, 2), :],
                           hbuf[pl.ds(1, Ho * Wo, 2), :])             # (Ho*Wo, Cout)
        # Bias + ReLU once after pooling (exact: both commute with max).
        return jnp.maximum(wmax + b_ref[...], 0.0)

    # ----- feature extractor -------------------------------------------------
    src = x_ref.at[0]                                  # (H0+2, W0+2, Cin0) ref view
    pooled = None
    for l in range(L):
        pooled = conv_block(src, l)
        H, W, _, Cout = dims[l]
        Ho, Wo = H // 2, W // 2
        if l + 1 < L:
            pad_ref = pad_refs[l]                      # (Ho+2, Wo+2, Cout) scratch
            pad_ref[...] = jnp.zeros(pad_ref.shape, pad_ref.dtype)    # zero border
            for ho in range(Ho):
                pad_ref[1 + ho, 1:1 + Wo, :] = pooled[ho * Wo:(ho + 1) * Wo, :]
            src = pad_ref

    # ----- flatten (NHWC order) into one lane-dense row ----------------------
    H, W, _, Cout = dims[-1]
    P = (H // 2) * (W // 2)
    for p in range(P):
        fbuf[0:1, p * Cout:(p + 1) * Cout] = pooled[p:p + 1, :]
    feats = fbuf[...]                                  # (1, flattened_size)

    # ----- classifier head: Linear -> ReLU -> Dropout(eval) -> Linear --------
    # TODO(synk): training-mode dropout (RNG masking) not implemented; eval identity.
    h = jnp.dot(feats, w1_ref[...], preferred_element_type=jnp.float32) + b1_ref[...]
    h = jnp.maximum(h, 0.0)
    out = jnp.dot(h, w2_ref[...], preferred_element_type=jnp.float32) + b2_ref[...]
    o_ref[0] = out.astype(o_ref.dtype)                 # lane-dense (1, Cp) store


# ---------------------------------------------------------------------------
# One-time parameter prep (tap matrices, NCHW-flatten fold, 128-lane FC padding)
# ---------------------------------------------------------------------------
def prepare_params(conv_params, fc1, fc2, *, image_dim):
    dims = []
    taps = []
    H = W = image_dim
    for (w, b) in conv_params:
        Cout, Cin = int(w.shape[0]), int(w.shape[1])
        assert H % 2 == 0 and W % 2 == 0, "MaxPool2d(2,2) assumes even spatial dims"
        dims.append((H, W, Cin, Cout))
        # (Cout, Cin, 3, 3) -> (tap*Cin, Cout), tap = dy*3+dx (matches kernel im2col).
        wt = jnp.asarray(w, jnp.float32).transpose(2, 3, 1, 0).reshape(9 * Cin, Cout)
        taps.append((wt, jnp.asarray(b, jnp.float32).reshape(1, Cout)))
        H //= 2
        W //= 2

    w1, b1 = fc1                              # PyTorch Linear: (out_features, in_features)
    w2, b2 = fc2
    hidden, flat = int(w1.shape[0]), int(w1.shape[1])
    class_count = int(w2.shape[0])
    c_last = int(conv_params[-1][0].shape[0])
    p_last = flat // c_last
    # Fold the NCHW flatten order into fc1 columns (kernel produces NHWC-flat feats).
    w1_nhwc = (jnp.asarray(w1, jnp.float32).reshape(hidden, c_last, p_last)
               .transpose(0, 2, 1).reshape(hidden, flat))

    Hp = _round_up(hidden, 128)               # lane-dense hidden
    Cp = _round_up(class_count, 128)          # lane-dense final output
    w1p = jnp.zeros((flat, Hp), jnp.float32).at[:, :hidden].set(w1_nhwc.T)
    b1p = jnp.zeros((1, Hp), jnp.float32).at[:, :hidden].set(
        jnp.asarray(b1, jnp.float32).reshape(1, hidden))
    w2p = jnp.zeros((Hp, Cp), jnp.float32).at[:hidden, :class_count].set(
        jnp.asarray(w2, jnp.float32).T)
    b2p = jnp.zeros((1, Cp), jnp.float32).at[:, :class_count].set(
        jnp.asarray(b2, jnp.float32).reshape(1, class_count))

    return {"dims": tuple(dims), "taps": taps, "head": (w1p, b1p, w2p, b2p),
            "class_count": class_count, "flat": flat}


# ---------------------------------------------------------------------------
# Forward wrapper: one pallas_call for the whole network
# ---------------------------------------------------------------------------
def neural_image_classifier_forward(x_nchw, params):
    dims = params["dims"]
    taps = params["taps"]
    w1p, b1p, w2p, b2p = params["head"]
    class_count = params["class_count"]
    flat = params["flat"]
    Cp = w2p.shape[1]
    N = x_nchw.shape[0]

    # NCHW -> NHWC once; zero-pad (conv padding=1) once at the input.
    x = jnp.transpose(x_nchw, (0, 2, 3, 1)).astype(jnp.float32)
    xp = jnp.pad(x, ((0, 0), (1, 1), (1, 1), (0, 0)))

    H0, W0, Cin0, _ = dims[0]
    flat_inputs = [xp]
    in_specs = [pl.BlockSpec((1, H0 + 2, W0 + 2, Cin0), lambda n: (n, 0, 0, 0))]
    for (wt, b) in taps:                      # weights VMEM-resident (constant index)
        flat_inputs += [wt, b]
        in_specs += [pl.BlockSpec(wt.shape, lambda n: (0, 0)),
                     pl.BlockSpec(b.shape, lambda n: (0, 0))]
    flat_inputs += [w1p, b1p, w2p, b2p]
    in_specs += [pl.BlockSpec(w1p.shape, lambda n: (0, 0)),
                 pl.BlockSpec(b1p.shape, lambda n: (0, 0)),
                 pl.BlockSpec(w2p.shape, lambda n: (0, 0)),
                 pl.BlockSpec(b2p.shape, lambda n: (0, 0))]

    scratch_shapes = []
    for (H, W, Cin, Cout) in dims:
        scratch_shapes.append(pltpu.VMEM(((H // 2) * W, 9 * Cin), jnp.float32))  # im2col
        scratch_shapes.append(pltpu.VMEM(((H // 2) * W, Cout), jnp.float32))     # h-pooled
    for (H, W, Cin, Cout) in dims[1:]:
        scratch_shapes.append(pltpu.VMEM((H + 2, W + 2, Cin), jnp.float32))      # padded in
    scratch_shapes.append(pltpu.VMEM((1, flat), jnp.float32))                    # flat feats

    kernel = functools.partial(_fused_forward_kernel, dims=dims)
    out = pl.pallas_call(
        kernel,
        out_shape=jax.ShapeDtypeStruct((N, 1, Cp), jnp.float32),
        grid=(N,),   # NOTE: for larger batches, block >1 image per step to pipeline DMA
        in_specs=in_specs,
        out_specs=pl.BlockSpec((1, 1, Cp), lambda n: (n, 0, 0)),
        scratch_shapes=scratch_shapes,
        compiler_params=pltpu.CompilerParams(dimension_semantics=("parallel",)),
    )(*flat_inputs)
    return out[:, 0, :class_count]


# ---------------------------------------------------------------------------
# Pure-JAX reference reproducing the PyTorch forward (eval mode) exactly
# ---------------------------------------------------------------------------
def reference_forward(x_nchw, conv_params, fc1, fc2):
    y = x_nchw
    for (w, b) in conv_params:
        y = lax.conv_general_dilated(
            y, w, window_strides=(1, 1), padding=((1, 1), (1, 1)),
            dimension_numbers=("NCHW", "OIHW", "NCHW"))
        y = jnp.maximum(y + b.reshape(1, -1, 1, 1), 0.0)
        y = lax.reduce_window(y, -jnp.inf, lax.max,
                              window_dimensions=(1, 1, 2, 2),
                              window_strides=(1, 1, 2, 2), padding="VALID")
    f = y.reshape(y.shape[0], -1)
    w1, b1 = fc1
    w2, b2 = fc2
    h = jnp.maximum(f @ w1.T + b1, 0.0)
    return h @ w2.T + b2


# ---------------------------------------------------------------------------
if __name__ == "__main__":
    # Small config: channel_sizes=(4, 8), hidden_size=32, class_count=10,
    # image_dimensions=16, batch=2, activation=ReLU, use_normalization=False.
    batch, image_dim = 2, 16
    channel_sizes = (4, 8)
    hidden_size, class_count = 32, 10

    key = jax.random.PRNGKey(0)
    keys = jax.random.split(key, 12)

    conv_params = []
    in_c = 3
    ki = 0
    for out_c in channel_sizes:
        w = 0.1 * jax.random.normal(keys[ki], (out_c, in_c, 3, 3), jnp.float32)
        b = 0.01 * jax.random.normal(keys[ki + 1], (out_c,), jnp.float32)
        conv_params.append((w, b))
        in_c = out_c
        ki += 2

    spatial = image_dim // (2 ** len(channel_sizes))          # 16 -> 4
    flattened_size = channel_sizes[-1] * spatial * spatial    # 8*4*4 = 128

    fc1_w = 0.1 * jax.random.normal(keys[ki], (hidden_size, flattened_size), jnp.float32)
    fc1_b = 0.01 * jax.random.normal(keys[ki + 1], (hidden_size,), jnp.float32)
    fc2_w = 0.1 * jax.random.normal(keys[ki + 2], (class_count, hidden_size), jnp.float32)
    fc2_b = 0.01 * jax.random.normal(keys[ki + 3], (class_count,), jnp.float32)

    x = jax.random.normal(keys[ki + 4], (batch, 3, image_dim, image_dim), jnp.float32)

    params = prepare_params(conv_params, (fc1_w, fc1_b), (fc2_w, fc2_b),
                            image_dim=image_dim)

    out = jax.block_until_ready(neural_image_classifier_forward(x, params))
    ref = jax.block_until_ready(
        reference_forward(x, conv_params, (fc1_w, fc1_b), (fc2_w, fc2_b)))
    np.testing.assert_allclose(np.asarray(out), np.asarray(ref), rtol=2e-4, atol=2e-4)

    print("KERNEL_OK")
</pallas_src>

<mosaic_0001>
module attributes {stable_mosaic.version = 11 : i64} {
  func.func @_fused_forward_kernel(%arg0: i32, %arg1: memref<1x18x18x3xf32, #tpu.memory_space<vmem>>, %arg2: memref<27x4xf32, #tpu.memory_space<vmem>>, %arg3: memref<1x4xf32, #tpu.memory_space<vmem>>, %arg4: memref<36x8xf32, #tpu.memory_space<vmem>>, %arg5: memref<1x8xf32, #tpu.memory_space<vmem>>, %arg6: memref<128x128xf32, #tpu.memory_space<vmem>>, %arg7: memref<1x128xf32, #tpu.memory_space<vmem>>, %arg8: memref<128x128xf32, #tpu.memory_space<vmem>>, %arg9: memref<1x128xf32, #tpu.memory_space<vmem>>, %arg10: memref<1x1x128xf32, #tpu.memory_space<vmem>>, %arg11: memref<128x27xf32, #tpu.memory_space<vmem>>, %arg12: memref<128x4xf32, #tpu.memory_space<vmem>>, %arg13: memref<32x36xf32, #tpu.memory_space<vmem>>, %arg14: memref<32x8xf32, #tpu.memory_space<vmem>>, %arg15: memref<10x10x4xf32, #tpu.memory_space<vmem>>, %arg16: memref<1x128xf32, #tpu.memory_space<vmem>>) attributes {dimension_semantics = [#tpu.dimension_semantics<parallel>], iteration_bounds = array<i64: 2>, scalar_prefetch = 0 : i64, scratch_operands = 6 : i64, tpu.core_type = #tpu.core_type<tc>, window_params = [{transform_indices = @transform_0, window_bounds = array<i64: 1, 18, 18, 3>}, {pipeline_mode = #tpu.pipeline_mode<synchronous>, transform_indices = @transform_1, window_bounds = array<i64: 27, 4>}, {pipeline_mode = #tpu.pipeline_mode<synchronous>, transform_indices = @transform_2, window_bounds = array<i64: 1, 4>}, {pipeline_mode = #tpu.pipeline_mode<synchronous>, transform_indices = @transform_3, window_bounds = array<i64: 36, 8>}, {pipeline_mode = #tpu.pipeline_mode<synchronous>, transform_indices = @transform_4, window_bounds = array<i64: 1, 8>}, {pipeline_mode = #tpu.pipeline_mode<synchronous>, transform_indices = @transform_5, window_bounds = array<i64: 128, 128>}, {pipeline_mode = #tpu.pipeline_mode<synchronous>, transform_indices = @transform_6, window_bounds = array<i64: 1, 128>}, {pipeline_mode = #tpu.pipeline_mode<synchronous>, transform_indices = @transform_7, window_bounds = array<i64: 128, 128>}, {pipeline_mode = #tpu.pipeline_mode<synchronous>, transform_indices = @transform_8, window_bounds = array<i64: 1, 128>}, {transform_indices = @transform_9, window_bounds = array<i64: 1, 1, 128>}]} {
    %c0_i32 = arith.constant 0 : i32
    %c0_i32_0 = arith.constant 0 : i32
    %c0_i32_1 = arith.constant 0 : i32
    %c0_i32_2 = arith.constant 0 : i32
    %0 = tpu.memref_slice %arg1[%c0_i32, %c0_i32_0, %c0_i32_1, %c0_i32_2] : memref<1x18x18x3xf32, #tpu.memory_space<vmem>> -> memref<1x18x18x3xf32, #tpu.memory_space<vmem>>
    %1 = tpu.memref_squeeze %0 : memref<1x18x18x3xf32, #tpu.memory_space<vmem>> -> memref<18x18x3xf32, #tpu.memory_space<vmem>>
    %c0 = arith.constant 0 : index
    %c0_3 = arith.constant 0 : index
    %c0_4 = arith.constant 0 : index
    %2 = tpu.strided_load %1[%c0, %c0_3, %c0_4] {strides = array<i32: 2, 1, 1>} : memref<18x18x3xf32, #tpu.memory_space<vmem>>, vector<8x16x3xf32>
    %3 = vector.shape_cast %2 : vector<8x16x3xf32> to vector<128x3xf32>
    %c0_5 = arith.constant 0 : index
    %c0_6 = arith.constant 0 : index
    %4 = vector.load %arg11[%c0_5, %c0_6] : memref<128x27xf32, #tpu.memory_space<vmem>>, vector<128x3xf32>
    tpu.vector_store %arg11[%c0_5, %c0_6], %3 {strides = array<i32>} : memref<128x27xf32, #tpu.memory_space<vmem>>, vector<128x3xf32>,
    %c0_i32_7 = arith.constant 0 : i32
    %c0_i32_8 = arith.constant 0 : i32
    %c0_i32_9 = arith.constant 0 : i32
    %c0_i32_10 = arith.constant 0 : i32
    %5 = tpu.memref_slice %arg1[%c0_i32_7, %c0_i32_8, %c0_i32_9, %c0_i32_10] : memref<1x18x18x3xf32, #tpu.memory_space<vmem>> -> memref<1x18x18x3xf32, #tpu.memory_space<vmem>>
    %6 = tpu.memref_squeeze %5 : memref<1x18x18x3xf32, #tpu.memory_space<vmem>> -> memref<18x18x3xf32, #tpu.memory_space<vmem>>
    %c0_11 = arith.constant 0 : index
    %c1 = arith.constant 1 : index
    %c0_12 = arith.constant 0 : index
    %7 = tpu.strided_load %6[%c0_11, %c1, %c0_12] {strides = array<i32: 2, 1, 1>} : memref<18x18x3xf32, #tpu.memory_space<vmem>>, vector<8x16x3xf32>
    %8 = vector.shape_cast %7 : vector<8x16x3xf32> to vector<128x3xf32>
    %c0_13 = arith.constant 0 : index
    %c3 = arith.constant 3 : index
    %9 = vector.load %arg11[%c0_13, %c3] : memref<128x27xf32, #tpu.memory_space<vmem>>, vector<128x3xf32>
    tpu.vector_store %arg11[%c0_13, %c3], %8 {strides = array<i32>} : memref<128x27xf32, #tpu.memory_space<vmem>>, vector<128x3xf32>,
    %c0_i32_14 = arith.constant 0 : i32
    %c0_i32_15 = arith.constant 0 : i32
    %c0_i32_16 = arith.constant 0 : i32
    %c0_i32_17 = arith.constant 0 : i32
    %10 = tpu.memref_slice %arg1[%c0_i32_14, %c0_i32_15, %c0_i32_16, %c0_i32_17] : memref<1x18x18x3xf32, #tpu.memory_space<vmem>> -> memref<1x18x18x3xf32, #tpu.memory_space<vmem>>
    %11 = tpu.memref_squeeze %10 : memref<1x18x18x3xf32, #tpu.memory_space<vmem>> -> memref<18x18x3xf32, #tpu.memory_space<vmem>>
    %c0_18 = arith.constant 0 : index
    %c2 = arith.constant 2 : index
    %c0_19 = arith.constant 0 : index
    %12 = tpu.strided_load %11[%c0_18, %c2, %c0_19] {strides = array<i32: 2, 1, 1>} : memref<18x18x3xf32, #tpu.memory_space<vmem>>, vector<8x16x3xf32>
    %13 = vector.shape_cast %12 : vector<8x16x3xf32> to vector<128x3xf32>
    %c0_20 = arith.constant 0 : index
    %c6 = arith.constant 6 : index
    %14 = vector.load %arg11[%c0_20, %c6] : memref<128x27xf32, #tpu.memory_space<vmem>>, vector<128x3xf32>
    tpu.vector_store %arg11[%c0_20, %c6], %13 {strides = array<i32>} : memref<128x27xf32, #tpu.memory_space<vmem>>, vector<128x3xf32>,
    %c0_i32_21 = arith.constant 0 : i32
    %c0_i32_22 = arith.constant 0 : i32
    %c0_i32_23 = arith.constant 0 : i32
    %c0_i32_24 = arith.constant 0 : i32
    %15 = tpu.memref_slice %arg1[%c0_i32_21, %c0_i32_22, %c0_i32_23, %c0_i32_24] : memref<1x18x18x3xf32, #tpu.memory_space<vmem>> -> memref<1x18x18x3xf32, #tpu.memory_space<vmem>>
    %16 = tpu.memref_squeeze %15 : memref<1x18x18x3xf32, #tpu.memory_space<vmem>> -> memref<18x18x3xf32, #tpu.memory_space<vmem>>
    %c1_25 = arith.constant 1 : index
    %c0_26 = arith.constant 0 : index
    %c0_27 = arith.constant 0 : index
    %17 = tpu.strided_load %16[%c1_25, %c0_26, %c0_27] {strides = array<i32: 2, 1, 1>} : memref<18x18x3xf32, #tpu.memory_space<vmem>>, vector<8x16x3xf32>
    %18 = vector.shape_cast %17 : vector<8x16x3xf32> to vector<128x3xf32>
    %c0_28 = arith.constant 0 : index
    %c9 = arith.constant 9 : index
    %19 = vector.load %arg11[%c0_28, %c9] : memref<128x27xf32, #tpu.memory_space<vmem>>, vector<128x3xf32>
    tpu.vector_store %arg11[%c0_28, %c9], %18 {strides = array<i32>} : memref<128x27xf32, #tpu.memory_space<vmem>>, vector<128x3xf32>,
    %c0_i32_29 = arith.constant 0 : i32
    %c0_i32_30 = arith.constant 0 : i32
    %c0_i32_31 = arith.constant 0 : i32
    %c0_i32_32 = arith.constant 0 : i32
    %20 = tpu.memref_slice %arg1[%c0_i32_29, %c0_i32_30, %c0_i32_31, %c0_i32_32] : memref<1x18x18x3xf32, #tpu.memory_space<vmem>> -> memref<1x18x18x3xf32, #tpu.memory_space<vmem>>
    %21 = tpu.memref_squeeze %20 : memref<1x18x18x3xf32, #tpu.memory_space<vmem>> -> memref<18x18x3xf32, #tpu.memory_space<vmem>>
    %c1_33 = arith.constant 1 : index
    %c1_34 = arith.constant 1 : index
    %c0_35 = arith.constant 0 : index
    %22 = tpu.strided_load %21[%c1_33, %c1_34, %c0_35] {strides = array<i32: 2, 1, 1>} : memref<18x18x3xf32, #tpu.memory_space<vmem>>, vector<8x16x3xf32>
    %23 = vector.shape_cast %22 : vector<8x16x3xf32> to vector<128x3xf32>
    %c0_36 = arith.constant 0 : index
    %c12 = arith.constant 12 : index
    %24 = vector.load %arg11[%c0_36, %c12] : memref<128x27xf32, #tpu.memory_space<vmem>>, vector<128x3xf32>
    tpu.vector_store %arg11[%c0_36, %c12], %23 {strides = array<i32>} : memref<128x27xf32, #tpu.memory_space<vmem>>, vector<128x3xf32>,
    %c0_i32_37 = arith.constant 0 : i32
    %c0_i32_38 = arith.constant 0 : i32
    %c0_i32_39 = arith.constant 0 : i32
    %c0_i32_40 = arith.constant 0 : i32
    %25 = tpu.memref_slice %arg1[%c0_i32_37, %c0_i32_38, %c0_i32_39, %c0_i32_40] : memref<1x18x18x3xf32, #tpu.memory_space<vmem>> -> memref<1x18x18x3xf32, #tpu.memory_space<vmem>>
    %26 = tpu.memref_squeeze %25 : memref<1x18x18x3xf32, #tpu.memory_space<vmem>> -> memref<18x18x3xf32, #tpu.memory_space<vmem>>
    %c1_41 = arith.constant 1 : index
    %c2_42 = arith.constant 2 : index
    %c0_43 = arith.constant 0 : index
    %27 = tpu.strided_load %26[%c1_41, %c2_42, %c0_43] {strides = array<i32: 2, 1, 1>} : memref<18x18x3xf32, #tpu.memory_space<vmem>>, vector<8x16x3xf32>
    %28 = vector.shape_cast %27 : vector<8x16x3xf32> to vector<128x3xf32>
    %c0_44 = arith.constant 0 : index
    %c15 = arith.constant 15 : index
    %29 = vector.load %arg11[%c0_44, %c15] : memref<128x27xf32, #tpu.memory_space<vmem>>, vector<128x3xf32>
    tpu.vector_store %arg11[%c0_44, %c15], %28 {strides = array<i32>} : memref<128x27xf32, #tpu.memory_space<vmem>>, vector<128x3xf32>,
    %c0_i32_45 = arith.constant 0 : i32
    %c0_i32_46 = arith.constant 0 : i32
    %c0_i32_47 = arith.constant 0 : i32
    %c0_i32_48 = arith.constant 0 : i32
    %30 = tpu.memref_slice %arg1[%c0_i32_45, %c0_i32_46, %c0_i32_47, %c0_i32_48] : memref<1x18x18x3xf32, #tpu.memory_space<vmem>> -> memref<1x18x18x3xf32, #tpu.memory_space<vmem>>
    %31 = tpu.memref_squeeze %30 : memref<1x18x18x3xf32, #tpu.memory_space<vmem>> -> memref<18x18x3xf32, #tpu.memory_space<vmem>>
    %c2_49 = arith.constant 2 : index
    %c0_50 = arith.constant 0 : index
    %c0_51 = arith.constant 0 : index
    %32 = tpu.strided_load %31[%c2_49, %c0_50, %c0_51] {strides = array<i32: 2, 1, 1>} : memref<18x18x3xf32, #tpu.memory_space<vmem>>, vector<8x16x3xf32>
    %33 = vector.shape_cast %32 : vector<8x16x3xf32> to vector<128x3xf32>
    %c0_52 = arith.constant 0 : index
    %c18 = arith.constant 18 : index
    %34 = vector.load %arg11[%c0_52, %c18] : memref<128x27xf32, #tpu.memory_space<vmem>>, vector<128x3xf32>
    tpu.vector_store %arg11[%c0_52, %c18], %33 {strides = array<i32>} : memref<128x27xf32, #tpu.memory_space<vmem>>, vector<128x3xf32>,
    %c0_i32_53 = arith.constant 0 : i32
    %c0_i32_54 = arith.constant 0 : i32
    %c0_i32_55 = arith.constant 0 : i32
    %c0_i32_56 = arith.constant 0 : i32
    %35 = tpu.memref_slice %arg1[%c0_i32_53, %c0_i32_54, %c0_i32_55, %c0_i32_56] : memref<1x18x18x3xf32, #tpu.memory_space<vmem>> -> memref<1x18x18x3xf32, #tpu.memory_space<vmem>>
    %36 = tpu.memref_squeeze %35 : memref<1x18x18x3xf32, #tpu.memory_space<vmem>> -> memref<18x18x3xf32, #tpu.memory_space<vmem>>
    %c2_57 = arith.constant 2 : index
    %c1_58 = arith.constant 1 : index
    %c0_59 = arith.constant 0 : index
    %37 = tpu.strided_load %36[%c2_57, %c1_58, %c0_59] {strides = array<i32: 2, 1, 1>} : memref<18x18x3xf32, #tpu.memory_space<vmem>>, vector<8x16x3xf32>
    %38 = vector.shape_cast %37 : vector<8x16x3xf32> to vector<128x3xf32>
    %c0_60 = arith.constant 0 : index
    %c21 = arith.constant 21 : index
    %39 = vector.load %arg11[%c0_60, %c21] : memref<128x27xf32, #tpu.memory_space<vmem>>, vector<128x3xf32>
    tpu.vector_store %arg11[%c0_60, %c21], %38 {strides = array<i32>} : memref<128x27xf32, #tpu.memory_space<vmem>>, vector<128x3xf32>,
    %c0_i32_61 = arith.constant 0 : i32
    %c0_i32_62 = arith.constant 0 : i32
    %c0_i32_63 = arith.constant 0 : i32
    %c0_i32_64 = arith.constant 0 : i32
    %40 = tpu.memref_slice %arg1[%c0_i32_61, %c0_i32_62, %c0_i32_63, %c0_i32_64] : memref<1x18x18x3xf32, #tpu.memory_space<vmem>> -> memref<1x18x18x3xf32, #tpu.memory_space<vmem>>
    %41 = tpu.memref_squeeze %40 : memref<1x18x18x3xf32, #tpu.memory_space<vmem>> -> memref<18x18x3xf32, #tpu.memory_space<vmem>>
    %c2_65 = arith.constant 2 : index
    %c2_66 = arith.constant 2 : index
    %c0_67 = arith.constant 0 : index
    %42 = tpu.strided_load %41[%c2_65, %c2_66, %c0_67] {strides = array<i32: 2, 1, 1>} : memref<18x18x3xf32, #tpu.memory_space<vmem>>, vector<8x16x3xf32>
    %43 = vector.shape_cast %42 : vector<8x16x3xf32> to vector<128x3xf32>
    %c0_68 = arith.constant 0 : index
    %c24 = arith.constant 24 : index
    %44 = vector.load %arg11[%c0_68, %c24] : memref<128x27xf32, #tpu.memory_space<vmem>>, vector<128x3xf32>
    tpu.vector_store %arg11[%c0_68, %c24], %43 {strides = array<i32>} : memref<128x27xf32, #tpu.memory_space<vmem>>, vector<128x3xf32>,
    %c0_69 = arith.constant 0 : index
    %c0_70 = arith.constant 0 : index
    %45 = vector.load %arg11[%c0_69, %c0_70] : memref<128x27xf32, #tpu.memory_space<vmem>>, vector<128x27xf32>
    %c0_71 = arith.constant 0 : index
    %c0_72 = arith.constant 0 : index
    %46 = vector.load %arg2[%c0_71, %c0_72] : memref<27x4xf32, #tpu.memory_space<vmem>>, vector<27x4xf32>
    %cst = arith.constant dense<0.000000e+00> : vector<128x4xf32>
    %47 = tpu.matmul %45, %46, %cst {dimension_numbers = #tpu.dot_dimension_numbers<[1], [0], [0], [1], [0, 0, 1, 1], [], []>} : vector<128x27xf32>, vector<27x4xf32>, vector<128x4xf32> -> vector<128x4xf32>
    %c0_i32_73 = arith.constant 0 : i32
    %c0_i32_74 = arith.constant 0 : i32
    %c0_i32_75 = arith.constant 0 : i32
    %c0_i32_76 = arith.constant 0 : i32
    %48 = tpu.memref_slice %arg1[%c0_i32_73, %c0_i32_74, %c0_i32_75, %c0_i32_76] : memref<1x18x18x3xf32, #tpu.memory_space<vmem>> -> memref<1x18x18x3xf32, #tpu.memory_space<vmem>>
    %49 = tpu.memref_squeeze %48 : memref<1x18x18x3xf32, #tpu.memory_space<vmem>> -> memref<18x18x3xf32, #tpu.memory_space<vmem>>
    %c1_77 = arith.constant 1 : index
    %c0_78 = arith.constant 0 : index
    %c0_79 = arith.constant 0 : index
    %50 = tpu.strided_load %49[%c1_77, %c0_78, %c0_79] {strides = array<i32: 2, 1, 1>} : memref<18x18x3xf32, #tpu.memory_space<vmem>>, vector<8x16x3xf32>
    %51 = vector.shape_cast %50 : vector<8x16x3xf32> to vector<128x3xf32>
    %c0_80 = arith.constant 0 : index
    %c0_81 = arith.constant 0 : index
    %52 = vector.load %arg11[%c0_80, %c0_81] : memref<128x27xf32, #tpu.memory_space<vmem>>, vector<128x3xf32>
    tpu.vector_store %arg11[%c0_80, %c0_81], %51 {strides = array<i32>} : memref<128x27xf32, #tpu.memory_space<vmem>>, vector<128x3xf32>,
    %c0_i32_82 = arith.constant 0 : i32
    %c0_i32_83 = arith.constant 0 : i32
    %c0_i32_84 = arith.constant 0 : i32
    %c0_i32_85 = arith.constant 0 : i32
    %53 = tpu.memref_slice %arg1[%c0_i32_82, %c0_i32_83, %c0_i32_84, %c0_i32_85] : memref<1x18x18x3xf32, #tpu.memory_space<vmem>> -> memref<1x18x18x3xf32, #tpu.memory_space<vmem>>
    %54 = tpu.memref_squeeze %53 : memref<1x18x18x3xf32, #tpu.memory_space<vmem>> -> memref<18x18x3xf32, #tpu.memory_space<vmem>>
    %c1_86 = arith.constant 1 : index
    %c1_87 = arith.constant 1 : index
    %c0_88 = arith.constant 0 : index
    %55 = tpu.strided_load %54[%c1_86, %c1_87, %c0_88] {strides = array<i32: 2, 1, 1>} : memref<18x18x3xf32, #tpu.memory_space<vmem>>, vector<8x16x3xf32>
    %56 = vector.shape_cast %55 : vector<8x16x3xf32> to vector<128x3xf32>
    %c0_89 = arith.constant 0 : index
    %c3_90 = arith.constant 3 : index
    %57 = vector.load %arg11[%c0_89, %c3_90] : memref<128x27xf32, #tpu.memory_space<vmem>>, vector<128x3xf32>
    tpu.vector_store %arg11[%c0_89, %c3_90], %56 {strides = array<i32>} : memref<128x27xf32, #tpu.memory_space<vmem>>, vector<128x3xf32>,
    %c0_i32_91 = arith.constant 0 : i32
    %c0_i32_92 = arith.constant 0 : i32
    %c0_i32_93 = arith.constant 0 : i32
    %c0_i32_94 = arith.constant 0 : i32
    %58 = tpu.memref_slice %arg1[%c0_i32_91, %c0_i32_92, %c0_i32_93, %c0_i32_94] : memref<1x18x18x3xf32, #tpu.memory_space<vmem>> -> memref<1x18x18x3xf32, #tpu.memory_space<vmem>>
    %59 = tpu.memref_squeeze %58 : memref<1x18x18x3xf32, #tpu.memory_space<vmem>> -> memref<18x18x3xf32, #tpu.memory_space<vmem>>
    %c1_95 = arith.constant 1 : index
    %c2_96 = arith.constant 2 : index
    %c0_97 = arith.constant 0 : index
    %60 = tpu.strided_load %59[%c1_95, %c2_96, %c0_97] {strides = array<i32: 2, 1, 1>} : memref<18x18x3xf32, #tpu.memory_space<vmem>>, vector<8x16x3xf32>
    %61 = vector.shape_cast %60 : vector<8x16x3xf32> to vector<128x3xf32>
    %c0_98 = arith.constant 0 : index
    %c6_99 = arith.constant 6 : index
    %62 = vector.load %arg11[%c0_98, %c6_99] : memref<128x27xf32, #tpu.memory_space<vmem>>, vector<128x3xf32>
    tpu.vector_store %arg11[%c0_98, %c6_99], %61 {strides = array<i32>} : memref<128x27xf32, #tpu.memory_space<vmem>>, vector<128x3xf32>,
    %c0_i32_100 = arith.constant 0 : i32
    %c0_i32_101 = arith.constant 0 : i32
    %c0_i32_102 = arith.constant 0 : i32
    %c0_i32_103 = arith.constant 0 : i32
    %63 = tpu.memref_slice %arg1[%c0_i32_100, %c0_i32_101, %c0_i32_102, %c0_i32_103] : memref<1x18x18x3xf32, #tpu.memory_space<vmem>> -> memref<1x18x18x3xf32, #tpu.memory_space<vmem>>
    %64 = tpu.memref_squeeze %63 : memref<1x18x18x3xf32, #tpu.memory_space<vmem>> -> memref<18x18x3xf32, #tpu.memory_space<vmem>>
    %c2_104 = arith.constant 2 : index
    %c0_105 = arith.constant 0 : index
    %c0_106 = arith.constant 0 : index
    %65 = tpu.strided_load %64[%c2_104, %c0_105, %c0_106] {strides = array<i32: 2, 1, 1>} : memref<18x18x3xf32, #tpu.memory_space<vmem>>, vector<8x16x3xf32>
    %66 = vector.shape_cast %65 : vector<8x16x3xf32> to vector<128x3xf32>
    %c0_107 = arith.constant 0 : index
    %c9_108 = arith.constant 9 : index
    %67 = vector.load %arg11[%c0_107, %c9_108] : memref<128x27xf32, #tpu.memory_space<vmem>>, vector<128x3xf32>
    tpu.vector_store %arg11[%c0_107, %c9_108], %66 {strides = array<i32>} : memref<128x27xf32, #tpu.memory_space<vmem>>, vector<128x3xf32>,
    %c0_i32_109 = arith.constant 0 : i32
    %c0_i32_110 = arith.constant 0 : i32
    %c0_i32_111 = arith.constant 0 : i32
    %c0_i32_112 = arith.constant 0 : i32
    %68 = tpu.memref_slice %arg1[%c0_i32_109, %c0_i32_110, %c0_i32_111, %c0_i32_112] : memref<1x18x18x3xf32, #tpu.memory_space<vmem>> -> memref<1x18x18x3xf32, #tpu.memory_space<vmem>>
    %69 = tpu.memref_squeeze %68 : memref<1x18x18x3xf32, #tpu.memory_space<vmem>> -> memref<18x18x3xf32, #tpu.memory_space<vmem>>
    %c2_113 = arith.constant 2 : index
    %c1_114 = arith.constant 1 : index
    %c0_115 = arith.constant 0 : index
    %70 = tpu.strided_load %69[%c2_113, %c1_114, %c0_115] {strides = array<i32: 2, 1, 1>} : memref<18x18x3xf32, #tpu.memory_space<vmem>>, vector<8x16x3xf32>
    %71 = vector.shape_cast %70 : vector<8x16x3xf32> to vector<128x3xf32>
    %c0_116 = arith.constant 0 : index
    %c12_117 = arith.constant 12 : index
    %72 = vector.load %arg11[%c0_116, %c12_117] : memref<128x27xf32, #tpu.memory_space<vmem>>, vector<128x3xf32>
    tpu.vector_store %arg11[%c0_116, %c12_117], %71 {strides = array<i32>} : memref<128x27xf32, #tpu.memory_space<vmem>>, vector<128x3xf32>,
    %c0_i32_118 = arith.constant 0 : i32
    %c0_i32_119 = arith.constant 0 : i32
    %c0_i32_120 = arith.constant 0 : i32
    %c0_i32_121 = arith.constant 0 : i32
    %73 = tpu.memref_slice %arg1[%c0_i32_118, %c0_i32_119, %c0_i32_120, %c0_i32_121] : memref<1x18x18x3xf32, #tpu.memory_space<vmem>> -> memref<1x18x18x3xf32, #tpu.memory_space<vmem>>
    %74 = tpu.memref_squeeze %73 : memref<1x18x18x3xf32, #tpu.memory_space<vmem>> -> memref<18x18x3xf32, #tpu.memory_space<vmem>>
    %c2_122 = arith.constant 2 : index
    %c2_123 = arith.constant 2 : index
    %c0_124 = arith.constant 0 : index
    %75 = tpu.strided_load %74[%c2_122, %c2_123, %c0_124] {strides = array<i32: 2, 1, 1>} : memref<18x18x3xf32, #tpu.memory_space<vmem>>, vector<8x16x3xf32>
    %76 = vector.shape_cast %75 : vector<8x16x3xf32> to vector<128x3xf32>
    %c0_125 = arith.constant 0 : index
    %c15_126 = arith.constant 15 : index
    %77 = vector.load %arg11[%c0_125, %c15_126] : memref<128x27xf32, #tpu.memory_space<vmem>>, vector<128x3xf32>
    tpu.vector_store %arg11[%c0_125, %c15_126], %76 {strides = array<i32>} : memref<128x27xf32, #tpu.memory_space<vmem>>, vector<128x3xf32>,
    %c0_i32_127 = arith.constant 0 : i32
    %c0_i32_128 = arith.constant 0 : i32
    %c0_i32_129 = arith.constant 0 : i32
    %c0_i32_130 = arith.constant 0 : i32
    %78 = tpu.memref_slice %arg1[%c0_i32_127, %c0_i32_128, %c0_i32_129, %c0_i32_130] : memref<1x18x18x3xf32, #tpu.memory_space<vmem>> -> memref<1x18x18x3xf32, #tpu.memory_space<vmem>>
    %79 = tpu.memref_squeeze %78 : memref<1x18x18x3xf32, #tpu.memory_space<vmem>> -> memref<18x18x3xf32, #tpu.memory_space<vmem>>
    %c3_131 = arith.constant 3 : index
    %c0_132 = arith.constant 0 : index
    %c0_133 = arith.constant 0 : index
    %80 = tpu.strided_load %79[%c3_131, %c0_132, %c0_133] {strides = array<i32: 2, 1, 1>} : memref<18x18x3xf32, #tpu.memory_space<vmem>>, vector<8x16x3xf32>
    %81 = vector.shape_cast %80 : vector<8x16x3xf32> to vector<128x3xf32>
    %c0_134 = arith.constant 0 : index
    %c18_135 = arith.constant 18 : index
    %82 = vector.load %arg11[%c0_134, %c18_135] : memref<128x27xf32, #tpu.memory_space<vmem>>, vector<128x3xf32>
    tpu.vector_store %arg11[%c0_134, %c18_135], %81 {strides = array<i32>} : memref<128x27xf32, #tpu.memory_space<vmem>>, vector<128x3xf32>,
    %c0_i32_136 = arith.constant 0 : i32
    %c0_i32_137 = arith.constant 0 : i32
    %c0_i32_138 = arith.constant 0 : i32
    %c0_i32_139 = arith.constant 0 : i32
    %83 = tpu.memref_slice %arg1[%c0_i32_136, %c0_i32_137, %c0_i32_138, %c0_i32_139] : memref<1x18x18x3xf32, #tpu.memory_space<vmem>> -> memref<1x18x18x3xf32, #tpu.memory_space<vmem>>
    %84 = tpu.memref_squeeze %83 : memref<1x18x18x3xf32, #tpu.memory_space<vmem>> -> memref<18x18x3xf32, #tpu.memory_space<vmem>>
    %c3_140 = arith.constant 3 : index
    %c1_141 = arith.constant 1 : index
    %c0_142 = arith.constant 0 : index
    %85 = tpu.strided_load %84[%c3_140, %c1_141, %c0_142] {strides = array<i32: 2, 1, 1>} : memref<18x18x3xf32, #tpu.memory_space<vmem>>, vector<8x16x3xf32>
    %86 = vector.shape_cast %85 : vector<8x16x3xf32> to vector<128x3xf32>
    %c0_143 = arith.constant 0 : index
    %c21_144 = arith.constant 21 : index
    %87 = vector.load %arg11[%c0_143, %c21_144] : memref<128x27xf32, #tpu.memory_space<vmem>>, vector<128x3xf32>
    tpu.vector_store %arg11[%c0_143, %c21_144], %86 {strides = array<i32>} : memref<128x27xf32, #tpu.memory_space<vmem>>, vector<128x3xf32>,
    %c0_i32_145 = arith.constant 0 : i32
    %c0_i32_146 = arith.constant 0 : i32
    %c0_i32_147 = arith.constant 0 : i32
    %c0_i32_148 = arith.constant 0 : i32
    %88 = tpu.memref_slice %arg1[%c0_i32_145, %c0_i32_146, %c0_i32_147, %c0_i32_148] : memref<1x18x18x3xf32, #tpu.memory_space<vmem>> -> memref<1x18x18x3xf32, #tpu.memory_space<vmem>>
    %89 = tpu.memref_squeeze %88 : memref<1x18x18x3xf32, #tpu.memory_space<vmem>> -> memref<18x18x3xf32, #tpu.memory_space<vmem>>
    %c3_149 = arith.constant 3 : index
    %c2_150 = arith.constant 2 : index
    %c0_151 = arith.constant 0 : index
    %90 = tpu.strided_load %89[%c3_149, %c2_150, %c0_151] {strides = array<i32: 2, 1, 1>} : memref<18x18x3xf32, #tpu.memory_space<vmem>>, vector<8x16x3xf32>
    %91 = vector.shape_cast %90 : vector<8x16x3xf32> to vector<128x3xf32>
    %c0_152 = arith.constant 0 : index
    %c24_153 = arith.constant 24 : index
    %92 = vector.load %arg11[%c0_152, %c24_153] : memref<128x27xf32, #tpu.memory_space<vmem>>, vector<128x3xf32>
    tpu.vector_store %arg11[%c0_152, %c24_153], %91 {strides = array<i32>} : memref<128x27xf32, #tpu.memory_space<vmem>>, vector<128x3xf32>,
    %c0_154 = arith.constant 0 : index
    %c0_155 = arith.constant 0 : index
    %93 = vector.load %arg11[%c0_154, %c0_155] : memref<128x27xf32, #tpu.memory_space<vmem>>, vector<128x27xf32>
    %c0_156 = arith.constant 0 : index
    %c0_157 = arith.constant 0 : index
    %94 = vector.load %arg2[%c0_156, %c0_157] : memref<27x4xf32, #tpu.memory_space<vmem>>, vector<27x4xf32>
    %cst_158 = arith.constant dense<0.000000e+00> : vector<128x4xf32>
    %95 = tpu.matmul %93, %94, %cst_158 {dimension_numbers = #tpu.dot_dimension_numbers<[1], [0], [0], [1], [0, 0, 1, 1], [], []>} : vector<128x27xf32>, vector<27x4xf32>, vector<128x4xf32> -> vector<128x4xf32>
    %96 = arith.maximumf %47, %95 : vector<128x4xf32>
    %c0_159 = arith.constant 0 : index
    %c0_160 = arith.constant 0 : index
    %97 = vector.load %arg12[%c0_159, %c0_160] : memref<128x4xf32, #tpu.memory_space<vmem>>, vector<128x4xf32>
    tpu.vector_store %arg12[%c0_159, %c0_160], %96 {strides = array<i32>} : memref<128x4xf32, #tpu.memory_space<vmem>>, vector<128x4xf32>,
    %c0_161 = arith.constant 0 : index
    %c0_162 = arith.constant 0 : index
    %98 = tpu.strided_load %arg12[%c0_161, %c0_162] {strides = array<i32: 2, 1>} : memref<128x4xf32, #tpu.memory_space<vmem>>, vector<64x4xf32>
    %c1_163 = arith.constant 1 : index
    %c0_164 = arith.constant 0 : index
    %99 = tpu.strided_load %arg12[%c1_163, %c0_164] {strides = array<i32: 2, 1>} : memref<128x4xf32, #tpu.memory_space<vmem>>, vector<64x4xf32>
    %100 = arith.maximumf %98, %99 : vector<64x4xf32>
    %c0_165 = arith.constant 0 : index
    %c0_166 = arith.constant 0 : index
    %101 = vector.load %arg3[%c0_165, %c0_166] : memref<1x4xf32, #tpu.memory_space<vmem>>, vector<1x4xf32>
    %102 = vector.broadcast %101 : vector<1x4xf32> to vector<64x4xf32>
    %103 = arith.addf %100, %102 : vector<64x4xf32>
    %cst_167 = arith.constant 0.000000e+00 : f32
    %104 = vector.broadcast %cst_167 : f32 to vector<64x4xf32>
    %105 = arith.maximumf %103, %104 : vector<64x4xf32>
    %cst_168 = arith.constant 0.000000e+00 : f32
    %106 = vector.broadcast %cst_168 : f32 to vector<10x10x4xf32>
    %c0_169 = arith.constant 0 : index
    %c0_170 = arith.constant 0 : index
    %c0_171 = arith.constant 0 : index
    %107 = vector.load %arg15[%c0_169, %c0_170, %c0_171] : memref<10x10x4xf32, #tpu.memory_space<vmem>>, vector<10x10x4xf32>
    tpu.vector_store %arg15[%c0_169, %c0_170, %c0_171], %106 {strides = array<i32>} : memref<10x10x4xf32, #tpu.memory_space<vmem>>, vector<10x10x4xf32>,
    %108 = vector.extract_strided_slice %105 {offsets = [0, 0], sizes = [8, 4], strides = [1, 1]} : vector<64x4xf32> to vector<8x4xf32>
    %c1_172 = arith.constant 1 : index
    %c1_173 = arith.constant 1 : index
    %c0_174 = arith.constant 0 : index
    %109 = vector.load %arg15[%c1_172, %c1_173, %c0_174] : memref<10x10x4xf32, #tpu.memory_space<vmem>>, vector<1x8x4xf32>
    %110 = vector.shape_cast %109 : vector<1x8x4xf32> to vector<8x4xf32>
    %111 = vector.shape_cast %108 : vector<8x4xf32> to vector<1x8x4xf32>
    tpu.vector_store %arg15[%c1_172, %c1_173, %c0_174], %111 {strides = array<i32>} : memref<10x10x4xf32, #tpu.memory_space<vmem>>, vector<1x8x4xf32>,
    %112 = vector.extract_strided_slice %105 {offsets = [8, 0], sizes = [8, 4], strides = [1, 1]} : vector<64x4xf32> to vector<8x4xf32>
    %c2_175 = arith.constant 2 : index
    %c1_176 = arith.constant 1 : index
    %c0_177 = arith.constant 0 : index
    %113 = vector.load %arg15[%c2_175, %c1_176, %c0_177] : memref<10x10x4xf32, #tpu.memory_space<vmem>>, vector<1x8x4xf32>
    %114 = vector.shape_cast %113 : vector<1x8x4xf32> to vector<8x4xf32>
    %115 = vector.shape_cast %112 : vector<8x4xf32> to vector<1x8x4xf32>
    tpu.vector_store %arg15[%c2_175, %c1_176, %c0_177], %115 {strides = array<i32>} : memref<10x10x4xf32, #tpu.memory_space<vmem>>, vector<1x8x4xf32>,
    %116 = vector.extract_strided_slice %105 {offsets = [16, 0], sizes = [8, 4], strides = [1, 1]} : vector<64x4xf32> to vector<8x4xf32>
    %c3_178 = arith.constant 3 : index
    %c1_179 = arith.constant 1 : index
    %c0_180 = arith.constant 0 : index
    %117 = vector.load %arg15[%c3_178, %c1_179, %c0_180] : memref<10x10x4xf32, #tpu.memory_space<vmem>>, vector<1x8x4xf32>
    %118 = vector.shape_cast %117 : vector<1x8x4xf32> to vector<8x4xf32>
    %119 = vector.shape_cast %116 : vector<8x4xf32> to vector<1x8x4xf32>
    tpu.vector_store %arg15[%c3_178, %c1_179, %c0_180], %119 {strides = array<i32>} : memref<10x10x4xf32, #tpu.memory_space<vmem>>, vector<1x8x4xf32>,
    %120 = vector.extract_strided_slice %105 {offsets = [24, 0], sizes = [8, 4], strides = [1, 1]} : vector<64x4xf32> to vector<8x4xf32>
    %c4 = arith.constant 4 : index
    %c1_181 = arith.constant 1 : index
    %c0_182 = arith.constant 0 : index
    %121 = vector.load %arg15[%c4, %c1_181, %c0_182] : memref<10x10x4xf32, #tpu.memory_space<vmem>>, vector<1x8x4xf32>
    %122 = vector.shape_cast %121 : vector<1x8x4xf32> to vector<8x4xf32>
    %123 = vector.shape_cast %120 : vector<8x4xf32> to vector<1x8x4xf32>
    tpu.vector_store %arg15[%c4, %c1_181, %c0_182], %123 {strides = array<i32>} : memref<10x10x4xf32, #tpu.memory_space<vmem>>, vector<1x8x4xf32>,
    %124 = vector.extract_strided_slice %105 {offsets = [32, 0], sizes = [8, 4], strides = [1, 1]} : vector<64x4xf32> to vector<8x4xf32>
    %c5 = arith.constant 5 : index
    %c1_183 = arith.constant 1 : index
    %c0_184 = arith.constant 0 : index
    %125 = vector.load %arg15[%c5, %c1_183, %c0_184] : memref<10x10x4xf32, #tpu.memory_space<vmem>>, vector<1x8x4xf32>
    %126 = vector.shape_cast %125 : vector<1x8x4xf32> to vector<8x4xf32>
    %127 = vector.shape_cast %124 : vector<8x4xf32> to vector<1x8x4xf32>
    tpu.vector_store %arg15[%c5, %c1_183, %c0_184], %127 {strides = array<i32>} : memref<10x10x4xf32, #tpu.memory_space<vmem>>, vector<1x8x4xf32>,
    %128 = vector.extract_strided_slice %105 {offsets = [40, 0], sizes = [8, 4], strides = [1, 1]} : vector<64x4xf32> to vector<8x4xf32>
    %c6_185 = arith.constant 6 : index
    %c1_186 = arith.constant 1 : index
    %c0_187 = arith.constant 0 : index
    %129 = vector.load %arg15[%c6_185, %c1_186, %c0_187] : memref<10x10x4xf32, #tpu.memory_space<vmem>>, vector<1x8x4xf32>
    %130 = vector.shape_cast %129 : vector<1x8x4xf32> to vector<8x4xf32>
    %131 = vector.shape_cast %128 : vector<8x4xf32> to vector<1x8x4xf32>
    tpu.vector_store %arg15[%c6_185, %c1_186, %c0_187], %131 {strides = array<i32>} : memref<10x10x4xf32, #tpu.memory_space<vmem>>, vector<1x8x4xf32>,
    %132 = vector.extract_strided_slice %105 {offsets = [48, 0], sizes = [8, 4], strides = [1, 1]} : vector<64x4xf32> to vector<8x4xf32>
    %c7 = arith.constant 7 : index
    %c1_188 = arith.constant 1 : index
    %c0_189 = arith.constant 0 : index
    %133 = vector.load %arg15[%c7, %c1_188, %c0_189] : memref<10x10x4xf32, #tpu.memory_space<vmem>>, vector<1x8x4xf32>
    %134 = vector.shape_cast %133 : vector<1x8x4xf32> to vector<8x4xf32>
    %135 = vector.shape_cast %132 : vector<8x4xf32> to vector<1x8x4xf32>
    tpu.vector_store %arg15[%c7, %c1_188, %c0_189], %135 {strides = array<i32>} : memref<10x10x4xf32, #tpu.memory_space<vmem>>, vector<1x8x4xf32>,
    %136 = vector.extract_strided_slice %105 {offsets = [56, 0], sizes = [8, 4], strides = [1, 1]} : vector<64x4xf32> to vector<8x4xf32>
    %c8 = arith.constant 8 : index
    %c1_190 = arith.constant 1 : index
    %c0_191 = arith.constant 0 : index
    %137 = vector.load %arg15[%c8, %c1_190, %c0_191] : memref<10x10x4xf32, #tpu.memory_space<vmem>>, vector<1x8x4xf32>
    %138 = vector.shape_cast %137 : vector<1x8x4xf32> to vector<8x4xf32>
    %139 = vector.shape_cast %136 : vector<8x4xf32> to vector<1x8x4xf32>
    tpu.vector_store %arg15[%c8, %c1_190, %c0_191], %139 {strides = array<i32>} : memref<10x10x4xf32, #tpu.memory_space<vmem>>, vector<1x8x4xf32>,
    %c0_192 = arith.constant 0 : index
    %c0_193 = arith.constant 0 : index
    %c0_194 = arith.constant 0 : index
    %140 = tpu.strided_load %arg15[%c0_192, %c0_193, %c0_194] {strides = array<i32: 2, 1, 1>} : memref<10x10x4xf32, #tpu.memory_space<vmem>>, vector<4x8x4xf32>
    %141 = vector.shape_cast %140 : vector<4x8x4xf32> to vector<32x4xf32>
    %c0_195 = arith.constant 0 : index
    %c0_196 = arith.constant 0 : index
    %142 = vector.load %arg13[%c0_195, %c0_196] : memref<32x36xf32, #tpu.memory_space<vmem>>, vector<32x4xf32>
    tpu.vector_store %arg13[%c0_195, %c0_196], %141 {strides = array<i32>} : memref<32x36xf32, #tpu.memory_space<vmem>>, vector<32x4xf32>,
    %c0_197 = arith.constant 0 : index
    %c1_198 = arith.constant 1 : index
    %c0_199 = arith.constant 0 : index
    %143 = tpu.strided_load %arg15[%c0_197, %c1_198, %c0_199] {strides = array<i32: 2, 1, 1>} : memref<10x10x4xf32, #tpu.memory_space<vmem>>, vector<4x8x4xf32>
    %144 = vector.shape_cast %143 : vector<4x8x4xf32> to vector<32x4xf32>
    %c0_200 = arith.constant 0 : index
    %c4_201 = arith.constant 4 : index
    %145 = vector.load %arg13[%c0_200, %c4_201] : memref<32x36xf32, #tpu.memory_space<vmem>>, vector<32x4xf32>
    tpu.vector_store %arg13[%c0_200, %c4_201], %144 {strides = array<i32>} : memref<32x36xf32, #tpu.memory_space<vmem>>, vector<32x4xf32>,
    %c0_202 = arith.constant 0 : index
    %c2_203 = arith.constant 2 : index
    %c0_204 = arith.constant 0 : index
    %146 = tpu.strided_load %arg15[%c0_202, %c2_203, %c0_204] {strides = array<i32: 2, 1, 1>} : memref<10x10x4xf32, #tpu.memory_space<vmem>>, vector<4x8x4xf32>
    %147 = vector.shape_cast %146 : vector<4x8x4xf32> to vector<32x4xf32>
    %c0_205 = arith.constant 0 : index
    %c8_206 = arith.constant 8 : index
    %148 = vector.load %arg13[%c0_205, %c8_206] : memref<32x36xf32, #tpu.memory_space<vmem>>, vector<32x4xf32>
    tpu.vector_store %arg13[%c0_205, %c8_206], %147 {strides = array<i32>} : memref<32x36xf32, #tpu.memory_space<vmem>>, vector<32x4xf32>,
    %c1_207 = arith.constant 1 : index
    %c0_208 = arith.constant 0 : index
    %c0_209 = arith.constant 0 : index
    %149 = tpu.strided_load %arg15[%c1_207, %c0_208, %c0_209] {strides = array<i32: 2, 1, 1>} : memref<10x10x4xf32, #tpu.memory_space<vmem>>, vector<4x8x4xf32>
    %150 = vector.shape_cast %149 : vector<4x8x4xf32> to vector<32x4xf32>
    %c0_210 = arith.constant 0 : index
    %c12_211 = arith.constant 12 : index
    %151 = vector.load %arg13[%c0_210, %c12_211] : memref<32x36xf32, #tpu.memory_space<vmem>>, vector<32x4xf32>
    tpu.vector_store %arg13[%c0_210, %c12_211], %150 {strides = array<i32>} : memref<32x36xf32, #tpu.memory_space<vmem>>, vector<32x4xf32>,
    %c1_212 = arith.constant 1 : index
    %c1_213 = arith.constant 1 : index
    %c0_214 = arith.constant 0 : index
    %152 = tpu.strided_load %arg15[%c1_212, %c1_213, %c0_214] {strides = array<i32: 2, 1, 1>} : memref<10x10x4xf32, #tpu.memory_space<vmem>>, vector<4x8x4xf32>
    %153 = vector.shape_cast %152 : vector<4x8x4xf32> to vector<32x4xf32>
    %c0_215 = arith.constant 0 : index
    %c16 = arith.constant 16 : index
    %154 = vector.load %arg13[%c0_215, %c16] : memref<32x36xf32, #tpu.memory_space<vmem>>, vector<32x4xf32>
    tpu.vector_store %arg13[%c0_215, %c16], %153 {strides = array<i32>} : memref<32x36xf32, #tpu.memory_space<vmem>>, vector<32x4xf32>,
    %c1_216 = arith.constant 1 : index
    %c2_217 = arith.constant 2 : index
    %c0_218 = arith.constant 0 : index
    %155 = tpu.strided_load %arg15[%c1_216, %c2_217, %c0_218] {strides = array<i32: 2, 1, 1>} : memref<10x10x4xf32, #tpu.memory_space<vmem>>, vector<4x8x4xf32>
    %156 = vector.shape_cast %155 : vector<4x8x4xf32> to vector<32x4xf32>
    %c0_219 = arith.constant 0 : index
    %c20 = arith.constant 20 : index
    %157 = vector.load %arg13[%c0_219, %c20] : memref<32x36xf32, #tpu.memory_space<vmem>>, vector<32x4xf32>
    tpu.vector_store %arg13[%c0_219, %c20], %156 {strides = array<i32>} : memref<32x36xf32, #tpu.memory_space<vmem>>, vector<32x4xf32>,
    %c2_220 = arith.constant 2 : index
    %c0_221 = arith.constant 0 : index
    %c0_222 = arith.constant 0 : index
    %158 = tpu.strided_load %arg15[%c2_220, %c0_221, %c0_222] {strides = array<i32: 2, 1, 1>} : memref<10x10x4xf32, #tpu.memory_space<vmem>>, vector<4x8x4xf32>
    %159 = vector.shape_cast %158 : vector<4x8x4xf32> to vector<32x4xf32>
    %c0_223 = arith.constant 0 : index
    %c24_224 = arith.constant 24 : index
    %160 = vector.load %arg13[%c0_223, %c24_224] : memref<32x36xf32, #tpu.memory_space<vmem>>, vector<32x4xf32>
    tpu.vector_store %arg13[%c0_223, %c24_224], %159 {strides = array<i32>} : memref<32x36xf32, #tpu.memory_space<vmem>>, vector<32x4xf32>,
    %c2_225 = arith.constant 2 : index
    %c1_226 = arith.constant 1 : index
    %c0_227 = arith.constant 0 : index
    %161 = tpu.strided_load %arg15[%c2_225, %c1_226, %c0_227] {strides = array<i32: 2, 1, 1>} : memref<10x10x4xf32, #tpu.memory_space<vmem>>, vector<4x8x4xf32>
    %162 = vector.shape_cast %161 : vector<4x8x4xf32> to vector<32x4xf32>
    %c0_228 = arith.constant 0 : index
    %c28 = arith.constant 28 : index
    %163 = vector.load %arg13[%c0_228, %c28] : memref<32x36xf32, #tpu.memory_space<vmem>>, vector<32x4xf32>
    tpu.vector_store %arg13[%c0_228, %c28], %162 {strides = array<i32>} : memref<32x36xf32, #tpu.memory_space<vmem>>, vector<32x4xf32>,
    %c2_229 = arith.constant 2 : index
    %c2_230 = arith.constant 2 : index
    %c0_231 = arith.constant 0 : index
    %164 = tpu.strided_load %arg15[%c2_229, %c2_230, %c0_231] {strides = array<i32: 2, 1, 1>} : memref<10x10x4xf32, #tpu.memory_space<vmem>>, vector<4x8x4xf32>
    %165 = vector.shape_cast %164 : vector<4x8x4xf32> to vector<32x4xf32>
    %c0_232 = arith.constant 0 : index
    %c32 = arith.constant 32 : index
    %166 = vector.load %arg13[%c0_232, %c32] : memref<32x36xf32, #tpu.memory_space<vmem>>, vector<32x4xf32>
    tpu.vector_store %arg13[%c0_232, %c32], %165 {strides = array<i32>} : memref<32x36xf32, #tpu.memory_space<vmem>>, vector<32x4xf32>,
    %c0_233 = arith.constant 0 : index
    %c0_234 = arith.constant 0 : index
    %167 = vector.load %arg13[%c0_233, %c0_234] : memref<32x36xf32, #tpu.memory_space<vmem>>, vector<32x36xf32>
    %c0_235 = arith.constant 0 : index
    %c0_236 = arith.constant 0 : index
    %168 = vector.load %arg4[%c0_235, %c0_236] : memref<36x8xf32, #tpu.memory_space<vmem>>, vector<36x8xf32>
    %cst_237 = arith.constant dense<0.000000e+00> : vector<32x8xf32>
    %169 = tpu.matmul %167, %168, %cst_237 {dimension_numbers = #tpu.dot_dimension_numbers<[1], [0], [0], [1], [0, 0, 1, 1], [], []>} : vector<32x36xf32>, vector<36x8xf32>, vector<32x8xf32> -> vector<32x8xf32>
    %c1_238 = arith.constant 1 : index
    %c0_239 = arith.constant 0 : index
    %c0_240 = arith.constant 0 : index
    %170 = tpu.strided_load %arg15[%c1_238, %c0_239, %c0_240] {strides = array<i32: 2, 1, 1>} : memref<10x10x4xf32, #tpu.memory_space<vmem>>, vector<4x8x4xf32>
    %171 = vector.shape_cast %170 : vector<4x8x4xf32> to vector<32x4xf32>
    %c0_241 = arith.constant 0 : index
    %c0_242 = arith.constant 0 : index
    %172 = vector.load %arg13[%c0_241, %c0_242] : memref<32x36xf32, #tpu.memory_space<vmem>>, vector<32x4xf32>
    tpu.vector_store %arg13[%c0_241, %c0_242], %171 {strides = array<i32>} : memref<32x36xf32, #tpu.memory_space<vmem>>, vector<32x4xf32>,
    %c1_243 = arith.constant 1 : index
    %c1_244 = arith.constant 1 : index
    %c0_245 = arith.constant 0 : index
    %173 = tpu.strided_load %arg15[%c1_243, %c1_244, %c0_245] {strides = array<i32: 2, 1, 1>} : memref<10x10x4xf32, #tpu.memory_space<vmem>>, vector<4x8x4xf32>
    %174 = vector.shape_cast %173 : vector<4x8x4xf32> to vector<32x4xf32>
    %c0_246 = arith.constant 0 : index
    %c4_247 = arith.constant 4 : index
    %175 = vector.load %arg13[%c0_246, %c4_247] : memref<32x36xf32, #tpu.memory_space<vmem>>, vector<32x4xf32>
    tpu.vector_store %arg13[%c0_246, %c4_247], %174 {strides = array<i32>} : memref<32x36xf32, #tpu.memory_space<vmem>>, vector<32x4xf32>,
    %c1_248 = arith.constant 1 : index
    %c2_249 = arith.constant 2 : index
    %c0_250 = arith.constant 0 : index
    %176 = tpu.strided_load %arg15[%c1_248, %c2_249, %c0_250] {strides = array<i32: 2, 1, 1>} : memref<10x10x4xf32, #tpu.memory_space<vmem>>, vector<4x8x4xf32>
    %177 = vector.shape_cast %176 : vector<4x8x4xf32> to vector<32x4xf32>
    %c0_251 = arith.constant 0 : index
    %c8_252 = arith.constant 8 : index
    %178 = vector.load %arg13[%c0_251, %c8_252] : memref<32x36xf32, #tpu.memory_space<vmem>>, vector<32x4xf32>
    tpu.vector_store %arg13[%c0_251, %c8_252], %177 {strides = array<i32>} : memref<32x36xf32, #tpu.memory_space<vmem>>, vector<32x4xf32>,
    %c2_253 = arith.constant 2 : index
    %c0_254 = arith.constant 0 : index
    %c0_255 = arith.constant 0 : index
    %179 = tpu.strided_load %arg15[%c2_253, %c0_254, %c0_255] {strides = array<i32: 2, 1, 1>} : memref<10x10x4xf32, #tpu.memory_space<vmem>>, vector<4x8x4xf32>
    %180 = vector.shape_cast %179 : vector<4x8x4xf32> to vector<32x4xf32>
    %c0_256 = arith.constant 0 : index
    %c12_257 = arith.constant 12 : index
    %181 = vector.load %arg13[%c0_256, %c12_257] : memref<32x36xf32, #tpu.memory_space<vmem>>, vector<32x4xf32>
    tpu.vector_store %arg13[%c0_256, %c12_257], %180 {strides = array<i32>} : memref<32x36xf32, #tpu.memory_space<vmem>>, vector<32x4xf32>,
    %c2_258 = arith.constant 2 : index
    %c1_259 = arith.constant 1 : index
    %c0_260 = arith.constant 0 : index
    %182 = tpu.strided_load %arg15[%c2_258, %c1_259, %c0_260] {strides = array<i32: 2, 1, 1>} : memref<10x10x4xf32, #tpu.memory_space<vmem>>, vector<4x8x4xf32>
    %183 = vector.shape_cast %182 : vector<4x8x4xf32> to vector<32x4xf32>
    %c0_261 = arith.constant 0 : index
    %c16_262 = arith.constant 16 : index
    %184 = vector.load %arg13[%c0_261, %c16_262] : memref<32x36xf32, #tpu.memory_space<vmem>>, vector<32x4xf32>
    tpu.vector_store %arg13[%c0_261, %c16_262], %183 {strides = array<i32>} : memref<32x36xf32, #tpu.memory_space<vmem>>, vector<32x4xf32>,
    %c2_263 = arith.constant 2 : index
    %c2_264 = arith.constant 2 : index
    %c0_265 = arith.constant 0 : index
    %185 = tpu.strided_load %arg15[%c2_263, %c2_264, %c0_265] {strides = array<i32: 2, 1, 1>} : memref<10x10x4xf32, #tpu.memory_space<vmem>>, vector<4x8x4xf32>
    %186 = vector.shape_cast %185 : vector<4x8x4xf32> to vector<32x4xf32>
    %c0_266 = arith.constant 0 : index
    %c20_267 = arith.constant 20 : index
    %187 = vector.load %arg13[%c0_266, %c20_267] : memref<32x36xf32, #tpu.memory_space<vmem>>, vector<32x4xf32>
    tpu.vector_store %arg13[%c0_266, %c20_267], %186 {strides = array<i32>} : memref<32x36xf32, #tpu.memory_space<vmem>>, vector<32x4xf32>,
    %c3_268 = arith.constant 3 : index
    %c0_269 = arith.constant 0 : index
    %c0_270 = arith.constant 0 : index
    %188 = tpu.strided_load %arg15[%c3_268, %c0_269, %c0_270] {strides = array<i32: 2, 1, 1>} : memref<10x10x4xf32, #tpu.memory_space<vmem>>, vector<4x8x4xf32>
    %189 = vector.shape_cast %188 : vector<4x8x4xf32> to vector<32x4xf32>
    %c0_271 = arith.constant 0 : index
    %c24_272 = arith.constant 24 : index
    %190 = vector.load %arg13[%c0_271, %c24_272] : memref<32x36xf32, #tpu.memory_space<vmem>>, vector<32x4xf32>
    tpu.vector_store %arg13[%c0_271, %c24_272], %189 {strides = array<i32>} : memref<32x36xf32, #tpu.memory_space<vmem>>, vector<32x4xf32>,
    %c3_273 = arith.constant 3 : index
    %c1_274 = arith.constant 1 : index
    %c0_275 = arith.constant 0 : index
    %191 = tpu.strided_load %arg15[%c3_273, %c1_274, %c0_275] {strides = array<i32: 2, 1, 1>} : memref<10x10x4xf32, #tpu.memory_space<vmem>>, vector<4x8x4xf32>
    %192 = vector.shape_cast %191 : vector<4x8x4xf32> to vector<32x4xf32>
    %c0_276 = arith.constant 0 : index
    %c28_277 = arith.constant 28 : index
    %193 = vector.load %arg13[%c0_276, %c28_277] : memref<32x36xf32, #tpu.memory_space<vmem>>, vector<32x4xf32>
    tpu.vector_store %arg13[%c0_276, %c28_277], %192 {strides = array<i32>} : memref<32x36xf32, #tpu.memory_space<vmem>>, vector<32x4xf32>,
    %c3_278 = arith.constant 3 : index
    %c2_279 = arith.constant 2 : index
    %c0_280 = arith.constant 0 : index
    %194 = tpu.strided_load %arg15[%c3_278, %c2_279, %c0_280] {strides = array<i32: 2, 1, 1>} : memref<10x10x4xf32, #tpu.memory_space<vmem>>, vector<4x8x4xf32>
    %195 = vector.shape_cast %194 : vector<4x8x4xf32> to vector<32x4xf32>
    %c0_281 = arith.constant 0 : index
    %c32_282 = arith.constant 32 : index
    %196 = vector.load %arg13[%c0_281, %c32_282] : memref<32x36xf32, #tpu.memory_space<vmem>>, vector<32x4xf32>
    tpu.vector_store %arg13[%c0_281, %c32_282], %195 {strides = array<i32>} : memref<32x36xf32, #tpu.memory_space<vmem>>, vector<32x4xf32>,
    %c0_283 = arith.constant 0 : index
    %c0_284 = arith.constant 0 : index
    %197 = vector.load %arg13[%c0_283, %c0_284] : memref<32x36xf32, #tpu.memory_space<vmem>>, vector<32x36xf32>
    %c0_285 = arith.constant 0 : index
    %c0_286 = arith.constant 0 : index
    %198 = vector.load %arg4[%c0_285, %c0_286] : memref<36x8xf32, #tpu.memory_space<vmem>>, vector<36x8xf32>
    %cst_287 = arith.constant dense<0.000000e+00> : vector<32x8xf32>
    %199 = tpu.matmul %197, %198, %cst_287 {dimension_numbers = #tpu.dot_dimension_numbers<[1], [0], [0], [1], [0, 0, 1, 1], [], []>} : vector<32x36xf32>, vector<36x8xf32>, vector<32x8xf32> -> vector<32x8xf32>
    %200 = arith.maximumf %169, %199 : vector<32x8xf32>
    %c0_288 = arith.constant 0 : index
    %c0_289 = arith.constant 0 : index
    %201 = vector.load %arg14[%c0_288, %c0_289] : memref<32x8xf32, #tpu.memory_space<vmem>>, vector<32x8xf32>
    tpu.vector_store %arg14[%c0_288, %c0_289], %200 {strides = array<i32>} : memref<32x8xf32, #tpu.memory_space<vmem>>, vector<32x8xf32>,
    %c0_290 = arith.constant 0 : index
    %c0_291 = arith.constant 0 : index
    %202 = tpu.strided_load %arg14[%c0_290, %c0_291] {strides = array<i32: 2, 1>} : memref<32x8xf32, #tpu.memory_space<vmem>>, vector<16x8xf32>
    %c1_292 = arith.constant 1 : index
    %c0_293 = arith.constant 0 : index
    %203 = tpu.strided_load %arg14[%c1_292, %c0_293] {strides = array<i32: 2, 1>} : memref<32x8xf32, #tpu.memory_space<vmem>>, vector<16x8xf32>
    %204 = arith.maximumf %202, %203 : vector<16x8xf32>
    %c0_294 = arith.constant 0 : index
    %c0_295 = arith.constant 0 : index
    %205 = vector.load %arg5[%c0_294, %c0_295] : memref<1x8xf32, #tpu.memory_space<vmem>>, vector<1x8xf32>
    %206 = vector.broadcast %205 : vector<1x8xf32> to vector<16x8xf32>
    %207 = arith.addf %204, %206 : vector<16x8xf32>
    %cst_296 = arith.constant 0.000000e+00 : f32
    %208 = vector.broadcast %cst_296 : f32 to vector<16x8xf32>
    %209 = arith.maximumf %207, %208 : vector<16x8xf32>
    %210 = vector.extract_strided_slice %209 {offsets = [0, 0], sizes = [1, 8], strides = [1, 1]} : vector<16x8xf32> to vector<1x8xf32>
    %c0_297 = arith.constant 0 : index
    %c0_298 = arith.constant 0 : index
    %211 = vector.load %arg16[%c0_297, %c0_298] : memref<1x128xf32, #tpu.memory_space<vmem>>, vector<1x8xf32>
    tpu.vector_store %arg16[%c0_297, %c0_298], %210 {strides = array<i32>} : memref<1x128xf32, #tpu.memory_space<vmem>>, vector<1x8xf32>,
    %212 = vector.extract_strided_slice %209 {offsets = [1, 0], sizes = [1, 8], strides = [1, 1]} : vector<16x8xf32> to vector<1x8xf32>
    %c0_299 = arith.constant 0 : index
    %c8_300 = arith.constant 8 : index
    %213 = vector.load %arg16[%c0_299, %c8_300] : memref<1x128xf32, #tpu.memory_space<vmem>>, vector<1x8xf32>
    tpu.vector_store %arg16[%c0_299, %c8_300], %212 {strides = array<i32>} : memref<1x128xf32, #tpu.memory_space<vmem>>, vector<1x8xf32>,
    %214 = vector.extract_strided_slice %209 {offsets = [2, 0], sizes = [1, 8], strides = [1, 1]} : vector<16x8xf32> to vector<1x8xf32>
    %c0_301 = arith.constant 0 : index
    %c16_302 = arith.constant 16 : index
    %215 = vector.load %arg16[%c0_301, %c16_302] : memref<1x128xf32, #tpu.memory_space<vmem>>, vector<1x8xf32>
    tpu.vector_store %arg16[%c0_301, %c16_302], %214 {strides = array<i32>} : memref<1x128xf32, #tpu.memory_space<vmem>>, vector<1x8xf32>,
    %216 = vector.extract_strided_slice %209 {offsets = [3, 0], sizes = [1, 8], strides = [1, 1]} : vector<16x8xf32> to vector<1x8xf32>
    %c0_303 = arith.constant 0 : index
    %c24_304 = arith.constant 24 : index
    %217 = vector.load %arg16[%c0_303, %c24_304] : memref<1x128xf32, #tpu.memory_space<vmem>>, vector<1x8xf32>
    tpu.vector_store %arg16[%c0_303, %c24_304], %216 {strides = array<i32>} : memref<1x128xf32, #tpu.memory_space<vmem>>, vector<1x8xf32>,
    %218 = vector.extract_strided_slice %209 {offsets = [4, 0], sizes = [1, 8], strides = [1, 1]} : vector<16x8xf32> to vector<1x8xf32>
    %c0_305 = arith.constant 0 : index
    %c32_306 = arith.constant 32 : index
    %219 = vector.load %arg16[%c0_305, %c32_306] : memref<1x128xf32, #tpu.memory_space<vmem>>, vector<1x8xf32>
    tpu.vector_store %arg16[%c0_305, %c32_306], %218 {strides = array<i32>} : memref<1x128xf32, #tpu.memory_space<vmem>>, vector<1x8xf32>,
    %220 = vector.extract_strided_slice %209 {offsets = [5, 0], sizes = [1, 8], strides = [1, 1]} : vector<16x8xf32> to vector<1x8xf32>
    %c0_307 = arith.constant 0 : index
    %c40 = arith.constant 40 : index
    %221 = vector.load %arg16[%c0_307, %c40] : memref<1x128xf32, #tpu.memory_space<vmem>>, vector<1x8xf32>
    tpu.vector_store %arg16[%c0_307, %c40], %220 {strides = array<i32>} : memref<1x128xf32, #tpu.memory_space<vmem>>, vector<1x8xf32>,
    %222 = vector.extract_strided_slice %209 {offsets = [6, 0], sizes = [1, 8], strides = [1, 1]} : vector<16x8xf32> to vector<1x8xf32>
    %c0_308 = arith.constant 0 : index
    %c48 = arith.constant 48 : index
    %223 = vector.load %arg16[%c0_308, %c48] : memref<1x128xf32, #tpu.memory_space<vmem>>, vector<1x8xf32>
    tpu.vector_store %arg16[%c0_308, %c48], %222 {strides = array<i32>} : memref<1x128xf32, #tpu.memory_space<vmem>>, vector<1x8xf32>,
    %224 = vector.extract_strided_slice %209 {offsets = [7, 0], sizes = [1, 8], strides = [1, 1]} : vector<16x8xf32> to vector<1x8xf32>
    %c0_309 = arith.constant 0 : index
    %c56 = arith.constant 56 : index
    %225 = vector.load %arg16[%c0_309, %c56] : memref<1x128xf32, #tpu.memory_space<vmem>>, vector<1x8xf32>
    tpu.vector_store %arg16[%c0_309, %c56], %224 {strides = array<i32>} : memref<1x128xf32, #tpu.memory_space<vmem>>, vector<1x8xf32>,
    %226 = vector.extract_strided_slice %209 {offsets = [8, 0], sizes = [1, 8], strides = [1, 1]} : vector<16x8xf32> to vector<1x8xf32>
    %c0_310 = arith.constant 0 : index
    %c64 = arith.constant 64 : index
    %227 = vector.load %arg16[%c0_310, %c64] : memref<1x128xf32, #tpu.memory_space<vmem>>, vector<1x8xf32>
    tpu.vector_store %arg16[%c0_310, %c64], %226 {strides = array<i32>} : memref<1x128xf32, #tpu.memory_space<vmem>>, vector<1x8xf32>,
    %228 = vector.extract_strided_slice %209 {offsets = [9, 0], sizes = [1, 8], strides = [1, 1]} : vector<16x8xf32> to vector<1x8xf32>
    %c0_311 = arith.constant 0 : index
    %c72 = arith.constant 72 : index
    %229 = vector.load %arg16[%c0_311, %c72] : memref<1x128xf32, #tpu.memory_space<vmem>>, vector<1x8xf32>
    tpu.vector_store %arg16[%c0_311, %c72], %228 {strides = array<i32>} : memref<1x128xf32, #tpu.memory_space<vmem>>, vector<1x8xf32>,
    %230 = vector.extract_strided_slice %209 {offsets = [10, 0], sizes = [1, 8], strides = [1, 1]} : vector<16x8xf32> to vector<1x8xf32>
    %c0_312 = arith.constant 0 : index
    %c80 = arith.constant 80 : index
    %231 = vector.load %arg16[%c0_312, %c80] : memref<1x128xf32, #tpu.memory_space<vmem>>, vector<1x8xf32>
    tpu.vector_store %arg16[%c0_312, %c80], %230 {strides = array<i32>} : memref<1x128xf32, #tpu.memory_space<vmem>>, vector<1x8xf32>,
    %232 = vector.extract_strided_slice %209 {offsets = [11, 0], sizes = [1, 8], strides = [1, 1]} : vector<16x8xf32> to vector<1x8xf32>
    %c0_313 = arith.constant 0 : index
    %c88 = arith.constant 88 : index
    %233 = vector.load %arg16[%c0_313, %c88] : memref<1x128xf32, #tpu.memory_space<vmem>>, vector<1x8xf32>
    tpu.vector_store %arg16[%c0_313, %c88], %232 {strides = array<i32>} : memref<1x128xf32, #tpu.memory_space<vmem>>, vector<1x8xf32>,
    %234 = vector.extract_strided_slice %209 {offsets = [12, 0], sizes = [1, 8], strides = [1, 1]} : vector<16x8xf32> to vector<1x8xf32>
    %c0_314 = arith.constant 0 : index
    %c96 = arith.constant 96 : index
    %235 = vector.load %arg16[%c0_314, %c96] : memref<1x128xf32, #tpu.memory_space<vmem>>, vector<1x8xf32>
    tpu.vector_store %arg16[%c0_314, %c96], %234 {strides = array<i32>} : memref<1x128xf32, #tpu.memory_space<vmem>>, vector<1x8xf32>,
    %236 = vector.extract_strided_slice %209 {offsets = [13, 0], sizes = [1, 8], strides = [1, 1]} : vector<16x8xf32> to vector<1x8xf32>
    %c0_315 = arith.constant 0 : index
    %c104 = arith.constant 104 : index
    %237 = vector.load %arg16[%c0_315, %c104] : memref<1x128xf32, #tpu.memory_space<vmem>>, vector<1x8xf32>
    tpu.vector_store %arg16[%c0_315, %c104], %236 {strides = array<i32>} : memref<1x128xf32, #tpu.memory_space<vmem>>, vector<1x8xf32>,
    %238 = vector.extract_strided_slice %209 {offsets = [14, 0], sizes = [1, 8], strides = [1, 1]} : vector<16x8xf32> to vector<1x8xf32>
    %c0_316 = arith.constant 0 : index
    %c112 = arith.constant 112 : index
    %239 = vector.load %arg16[%c0_316, %c112] : memref<1x128xf32, #tpu.memory_space<vmem>>, vector<1x8xf32>
    tpu.vector_store %arg16[%c0_316, %c112], %238 {strides = array<i32>} : memref<1x128xf32, #tpu.memory_space<vmem>>, vector<1x8xf32>,
    %240 = vector.extract_strided_slice %209 {offsets = [15, 0], sizes = [1, 8], strides = [1, 1]} : vector<16x8xf32> to vector<1x8xf32>
    %c0_317 = arith.constant 0 : index
    %c120 = arith.constant 120 : index
    %241 = vector.load %arg16[%c0_317, %c120] : memref<1x128xf32, #tpu.memory_space<vmem>>, vector<1x8xf32>
    tpu.vector_store %arg16[%c0_317, %c120], %240 {strides = array<i32>} : memref<1x128xf32, #tpu.memory_space<vmem>>, vector<1x8xf32>,
    %c0_318 = arith.constant 0 : index
    %c0_319 = arith.constant 0 : index
    %242 = vector.load %arg16[%c0_318, %c0_319] : memref<1x128xf32, #tpu.memory_space<vmem>>, vector<1x128xf32>
    %c0_320 = arith.constant 0 : index
    %c0_321 = arith.constant 0 : index
    %243 = vector.load %arg6[%c0_320, %c0_321] : memref<128x128xf32, #tpu.memory_space<vmem>>, vector<128x128xf32>
    %cst_322 = arith.constant dense<0.000000e+00> : vector<1x128xf32>
    %244 = tpu.matmul %242, %243, %cst_322 {dimension_numbers = #tpu.dot_dimension_numbers<[1], [0], [0], [1], [0, 0, 1, 1], [], []>} : vector<1x128xf32>, vector<128x128xf32>, vector<1x128xf32> -> vector<1x128xf32>
    %c0_323 = arith.constant 0 : index
    %c0_324 = arith.constant 0 : index
    %245 = vector.load %arg7[%c0_323, %c0_324] : memref<1x128xf32, #tpu.memory_space<vmem>>, vector<1x128xf32>
    %246 = arith.addf %244, %245 : vector<1x128xf32>
    %cst_325 = arith.constant 0.000000e+00 : f32
    %247 = vector.broadcast %cst_325 : f32 to vector<1x128xf32>
    %248 = arith.maximumf %246, %247 : vector<1x128xf32>
    %c0_326 = arith.constant 0 : index
    %c0_327 = arith.constant 0 : index
    %249 = vector.load %arg8[%c0_326, %c0_327] : memref<128x128xf32, #tpu.memory_space<vmem>>, vector<128x128xf32>
    %cst_328 = arith.constant dense<0.000000e+00> : vector<1x128xf32>
    %250 = tpu.matmul %248, %249, %cst_328 {dimension_numbers = #tpu.dot_dimension_numbers<[1], [0], [0], [1], [0, 0, 1, 1], [], []>} : vector<1x128xf32>, vector<128x128xf32>, vector<1x128xf32> -> vector<1x128xf32>
    %c0_329 = arith.constant 0 : index
    %c0_330 = arith.constant 0 : index
    %251 = vector.load %arg9[%c0_329, %c0_330] : memref<1x128xf32, #tpu.memory_space<vmem>>, vector<1x128xf32>
    %252 = arith.addf %250, %251 : vector<1x128xf32>
    %c0_331 = arith.constant 0 : index
    %c0_332 = arith.constant 0 : index
    %c0_333 = arith.constant 0 : index
    %253 = vector.load %arg10[%c0_331, %c0_332, %c0_333] : memref<1x1x128xf32, #tpu.memory_space<vmem>>, vector<1x1x128xf32>
    %254 = vector.shape_cast %253 : vector<1x1x128xf32> to vector<1x128xf32>
    %255 = vector.shape_cast %252 : vector<1x128xf32> to vector<1x1x128xf32>
    tpu.vector_store %arg10[%c0_331, %c0_332, %c0_333], %255 {strides = array<i32>} : memref<1x1x128xf32, #tpu.memory_space<vmem>>, vector<1x1x128xf32>,
    return
  }
  func.func @transform_0(%arg0: i32) -> (i32, i32, i32, i32) {
    %c0_i32 = arith.constant 0 : i32
    %c0_i32_0 = arith.constant 0 : i32
    %c0_i32_1 = arith.constant 0 : i32
    %c0_i32_2 = arith.constant 0 : i32
    return %arg0, %c0_i32, %c0_i32_0, %c0_i32_1 : i32, i32, i32, i32
  }
  func.func @transform_1(%arg0: i32) -> (i32, i32) {
    %c0_i32 = arith.constant 0 : i32
    %c0_i32_0 = arith.constant 0 : i32
    %c0_i32_1 = arith.constant 0 : i32
    return %c0_i32, %c0_i32_0 : i32, i32
  }
  func.func @transform_2(%arg0: i32) -> (i32, i32) {
    %c0_i32 = arith.constant 0 : i32
    %c0_i32_0 = arith.constant 0 : i32
    %c0_i32_1 = arith.constant 0 : i32
    return %c0_i32, %c0_i32_0 : i32, i32
  }
  func.func @transform_3(%arg0: i32) -> (i32, i32) {
    %c0_i32 = arith.constant 0 : i32
    %c0_i32_0 = arith.constant 0 : i32
    %c0_i32_1 = arith.constant 0 : i32
    return %c0_i32, %c0_i32_0 : i32, i32
  }
  func.func @transform_4(%arg0: i32) -> (i32, i32) {
    %c0_i32 = arith.constant 0 : i32
    %c0_i32_0 = arith.constant 0 : i32
    %c0_i32_1 = arith.constant 0 : i32
    return %c0_i32, %c0_i32_0 : i32, i32
  }
  func.func @transform_5(%arg0: i32) -> (i32, i32) {
    %c0_i32 = arith.constant 0 : i32
    %c0_i32_0 = arith.constant 0 : i32
    %c0_i32_1 = arith.constant 0 : i32
    return %c0_i32, %c0_i32_0 : i32, i32
  }
  func.func @transform_6(%arg0: i32) -> (i32, i32) {
    %c0_i32 = arith.constant 0 : i32
    %c0_i32_0 = arith.constant 0 : i32
    %c0_i32_1 = arith.constant 0 : i32
    return %c0_i32, %c0_i32_0 : i32, i32
  }
  func.func @transform_7(%arg0: i32) -> (i32, i32) {
    %c0_i32 = arith.constant 0 : i32
    %c0_i32_0 = arith.constant 0 : i32
    %c0_i32_1 = arith.constant 0 : i32
    return %c0_i32, %c0_i32_0 : i32, i32
  }
  func.func @transform_8(%arg0: i32) -> (i32, i32) {
    %c0_i32 = arith.constant 0 : i32
    %c0_i32_0 = arith.constant 0 : i32
    %c0_i32_1 = arith.constant 0 : i32
    return %c0_i32, %c0_i32_0 : i32, i32
  }
  func.func @transform_9(%arg0: i32) -> (i32, i32, i32) {
    %c0_i32 = arith.constant 0 : i32
    %c0_i32_0 = arith.constant 0 : i32
    %c0_i32_1 = arith.constant 0 : i32
    return %arg0, %c0_i32, %c0_i32_0 : i32, i32, i32
  }
}

</mosaic_0001>

<llo_original>
// kernel: tpu_custom_call.1
$region0: #{tpu_custom_call.1}
  #allocation0 [shape = 'u32[]', space=smem, size = 0x4, offset = 0x4, fixed_abs, tag = 'smem constant byte address 0x4 - core index']
  #allocation1 [shape = 'u32[144,128]{1,0:T(1,128)}', space=vmem, size = 0x12000, scoped, tag = 'internal scratch']
  #allocation2 [shape = 'f32[128,27]{1,0:T(8,128)}', space=vmem, size = 0x10000, scoped, tag = 'scratch operand']
  #allocation3 [shape = 'f32[128,4]{1,0:T(8,128)}', space=vmem, size = 0x10000, scoped, tag = 'scratch operand']
  #allocation4 [shape = 'f32[32,36]{1,0:T(8,128)}', space=vmem, size = 0x4000, scoped, tag = 'scratch operand']
  #allocation5 [shape = 'f32[32,8]{1,0:T(8,128)}', space=vmem, size = 0x4000, scoped, tag = 'scratch operand']
  #allocation6 [shape = 'f32[10,10,4]{2,1,0:T(8,128)}', space=vmem, size = 0x14000, scoped, tag = 'scratch operand']
  #allocation7 [shape = 'f32[1,128]{1,0:T(1,128)}', space=vmem, size = 0x200, scoped, tag = 'scratch operand']
  %s0 = inlined_call_operand.vmem [shape: f32[2,18,18,3], index: 0, kind: input, shape index: {}]
  %s1 = inlined_call_operand.vmem [shape: f32[27,4], index: 1, kind: input, shape index: {}]
  %s2 = inlined_call_operand.vmem [shape: f32[1,4], index: 2, kind: input, shape index: {}]
  %s3 = inlined_call_operand.vmem [shape: f32[36,8], index: 3, kind: input, shape index: {}]
  %s4 = inlined_call_operand.vmem [shape: f32[1,8], index: 4, kind: input, shape index: {}]
  %s5 = inlined_call_operand.vmem [shape: f32[128,128], index: 5, kind: input, shape index: {}]
  %s6 = inlined_call_operand.vmem [shape: f32[1,128], index: 6, kind: input, shape index: {}]
  %s7 = inlined_call_operand.vmem [shape: f32[128,128], index: 7, kind: input, shape index: {}]
  %s8 = inlined_call_operand.vmem [shape: f32[1,128], index: 8, kind: input, shape index: {}]
  %s9 = inlined_call_operand.hbm [shape: f32[2,1,128], index: 9, kind: output, shape index: {}]
  %s10 = sld [smem:[#allocation0]]
  $region69: #{tpu_custom_call.1} parent=0
    _
  %s12 = ssub.s32 1, %s10
  %s13 = scalar_select 0, %s12, %s10
  $region1: #{tpu_custom_call.1} parent=0
    #allocation8 [shape = 'u8[1024]{0}', space=vmem, size = 0x400, scoped, tag = 'output window, operand 0']
    #allocation9 [shape = 's32[2]{0}', space=sflag, size = 0x8, scoped, tag = 'scoped memory for tpu_custom_call.1']
    %14 = vsyncpa [#allocation9], 0
    %s15 = scalar_lea.sflag [#allocation9], 1
    %16 = vsyncpa %s15, 0
    loop: start=0, step=1, limit=4
    $region2: #{tpu_custom_call.1} parent=1 // loop_pre_header
      _
    $region3: #{tpu_custom_call.1} parent=1 // loop_header
      %s18 = sphi 0, %s22
      %p19 = scmp.ge.s32.totalorder %s18, 4
      %s28 = sphi 0, %s30
      %s31 = sphi 0, %s28
      %s32 = sphi 0, %s31
      %s48 = sphi 0, %s32
      %s52 = sphi 0, %s52
      %s54 = sphi 0, %s52
      %s55 = sphi 0, %s54
      %s69 = sphi 0, %s55
      %s73 = sphi 0, %s73
      %s75 = sphi 0, %s73
      %s76 = sphi 0, %s75
      %s90 = sphi 0, %s76
      %s94 = sphi 0, %s94
      %s96 = sphi 0, %s94
      %s97 = sphi 0, %s96
      %s111 = sphi 0, %s97
      %s115 = sphi 0, %s115
      %s117 = sphi 0, %s115
      %s118 = sphi 0, %s117
      %s132 = sphi 0, %s118
      %s136 = sphi 0, %s136
      %s138 = sphi 0, %s136
      %s139 = sphi 0, %s138
      %s153 = sphi 0, %s139
      %s157 = sphi 0, %s157
      %s159 = sphi 0, %s157
      %s160 = sphi 0, %s159
      %s174 = sphi 0, %s160
      %s178 = sphi 0, %s178
      %s180 = sphi 0, %s178
      %s181 = sphi 0, %s180
      %s195 = sphi 0, %s181
      %s199 = sphi 0, %s199
      %s201 = sphi 0, %s199
      %s202 = sphi 0, %s201
      %s216 = sphi 0, %s202
      %s222 = sphi 0, %s224
      %s225 = sphi 0, %s222
      %s226 = sphi 0, %s225
      %s242 = sphi 0, %s226
    $region4: #{tpu_custom_call.1} parent=1 // loop_header_branch
      %21 = sbr.rel (%p19) target = $region8
    $region5: #{tpu_custom_call.1} parent=1 // loop_body
      %s23 = ssub.s32 %s18, 1
      %s24 = ssub.s32 %s18, 2
      %s25 = sadd.s32 %s18, 1
      %s26 = ssub.s32 %s18, %s25
      %p27 = scmp.eq.s32.totalorder %s26, 0
      %s29 = sadd.s32 %s28, 1
      %s30 = scalar_select %p27, %s28, %s29
      %p33 = pneg %p27
      %p34 = scmp.eq.s32.totalorder %s18, 1
      %p35 = por %p33, %p34
      %p36 = scmp.ne.s32.totalorder %s28, %s31
      %p37 = scmp.eq.s32.totalorder %s18, 0
      %p38 = por %p36, %p37
      %p39 = scmp.ne.s32.totalorder %s28, %s31
      %p40 = scmp.eq.s32.totalorder %s23, 1
      %p41 = por %p39, %p40
      %p42 = scmp.ne.s32.totalorder %s31, %s32
      %p43 = scmp.eq.s32.totalorder %s23, 0
      %p44 = por %p42, %p43
      %p45 = scmp.ne.s32.totalorder %s31, %s32
      %p46 = scmp.eq.s32.totalorder %s24, 1
      %p47 = por %p45, %p46
      %p49 = scmp.ne.s32.totalorder %s32, %s48
      %p50 = scmp.eq.s32.totalorder %s24, 0
      %p51 = por %p49, %p50
      %s53 = sadd.s32 %s52, 1
      %p56 = scmp.eq.s32.totalorder %s18, 1
      %p57 = scmp.ne.s32.totalorder %s52, %s54
      %p58 = scmp.eq.s32.totalorder %s18, 0
      %p59 = por %p57, %p58
      %p60 = scmp.ne.s32.totalorder %s52, %s54
      %p61 = scmp.eq.s32.totalorder %s23, 1
      %p62 = por %p60, %p61
      %p63 = scmp.ne.s32.totalorder %s54, %s55
      %p64 = scmp.eq.s32.totalorder %s23, 0
      %p65 = por %p63, %p64
      %p66 = scmp.ne.s32.totalorder %s54, %s55
      %p67 = scmp.eq.s32.totalorder %s24, 1
      %p68 = por %p66, %p67
      %p70 = scmp.ne.s32.totalorder %s55, %s69
      %p71 = scmp.eq.s32.totalorder %s24, 0
      %p72 = por %p70, %p71
      %s74 = sadd.s32 %s73, 1
      %p77 = scmp.eq.s32.totalorder %s18, 1
      %p78 = scmp.ne.s32.totalorder %s73, %s75
      %p79 = scmp.eq.s32.totalorder %s18, 0
      %p80 = por %p78, %p79
      %p81 = scmp.ne.s32.totalorder %s73, %s75
      %p82 = scmp.eq.s32.totalorder %s23, 1
      %p83 = por %p81, %p82
      %p84 = scmp.ne.s32.totalorder %s75, %s76
      %p85 = scmp.eq.s32.totalorder %s23, 0
      %p86 = por %p84, %p85
      %p87 = scmp.ne.s32.totalorder %s75, %s76
      %p88 = scmp.eq.s32.totalorder %s24, 1
      %p89 = por %p87, %p88
      %p91 = scmp.ne.s32.totalorder %s76, %s90
      %p92 = scmp.eq.s32.totalorder %s24, 0
      %p93 = por %p91, %p92
      %s95 = sadd.s32 %s94, 1
      %p98 = scmp.eq.s32.totalorder %s18, 1
      %p99 = scmp.ne.s32.totalorder %s94, %s96
      %p100 = scmp.eq.s32.totalorder %s18, 0
      %p101 = por %p99, %p100
      %p102 = scmp.ne.s32.totalorder %s94, %s96
      %p103 = scmp.eq.s32.totalorder %s23, 1
      %p104 = por %p102, %p103
      %p105 = scmp.ne.s32.totalorder %s96, %s97
      %p106 = scmp.eq.s32.totalorder %s23, 0
      %p107 = por %p105, %p106
      %p108 = scmp.ne.s32.totalorder %s96, %s97
      %p109 = scmp.eq.s32.totalorder %s24, 1
      %p110 = por %p108, %p109
      %p112 = scmp.ne.s32.totalorder %s97, %s111
      %p113 = scmp.eq.s32.totalorder %s24, 0
      %p114 = por %p112, %p113
      %s116 = sadd.s32 %s115, 1
      %p119 = scmp.eq.s32.totalorder %s18, 1
      %p120 = scmp.ne.s32.totalorder %s115, %s117
      %p121 = scmp.eq.s32.totalorder %s18, 0
      %p122 = por %p120, %p121
      %p123 = scmp.ne.s32.totalorder %s115, %s117
      %p124 = scmp.eq.s32.totalorder %s23, 1
      %p125 = por %p123, %p124
      %p126 = scmp.ne.s32.totalorder %s117, %s118
      %p127 = scmp.eq.s32.totalorder %s23, 0
      %p128 = por %p126, %p127
      %p129 = scmp.ne.s32.totalorder %s117, %s118
      %p130 = scmp.eq.s32.totalorder %s24, 1
      %p131 = por %p129, %p130
      %p133 = scmp.ne.s32.totalorder %s118, %s132
      %p134 = scmp.eq.s32.totalorder %s24, 0
      %p135 = por %p133, %p134
      %s137 = sadd.s32 %s136, 1
      %p140 = scmp.eq.s32.totalorder %s18, 1
      %p141 = scmp.ne.s32.totalorder %s136, %s138
      %p142 = scmp.eq.s32.totalorder %s18, 0
      %p143 = por %p141, %p142
      %p144 = scmp.ne.s32.totalorder %s136, %s138
      %p145 = scmp.eq.s32.totalorder %s23, 1
      %p146 = por %p144, %p145
      %p147 = scmp.ne.s32.totalorder %s138, %s139
      %p148 = scmp.eq.s32.totalorder %s23, 0
      %p149 = por %p147, %p148
      %p150 = scmp.ne.s32.totalorder %s138, %s139
      %p151 = scmp.eq.s32.totalorder %s24, 1
      %p152 = por %p150, %p151
      %p154 = scmp.ne.s32.totalorder %s139, %s153
      %p155 = scmp.eq.s32.totalorder %s24, 0
      %p156 = por %p154, %p155
      %s158 = sadd.s32 %s157, 1
      %p161 = scmp.eq.s32.totalorder %s18, 1
      %p162 = scmp.ne.s32.totalorder %s157, %s159
      %p163 = scmp.eq.s32.totalorder %s18, 0
      %p164 = por %p162, %p163
      %p165 = scmp.ne.s32.totalorder %s157, %s159
      %p166 = scmp.eq.s32.totalorder %s23, 1
      %p167 = por %p165, %p166
      %p168 = scmp.ne.s32.totalorder %s159, %s160
      %p169 = scmp.eq.s32.totalorder %s23, 0
      %p170 = por %p168, %p169
      %p171 = scmp.ne.s32.totalorder %s159, %s160
      %p172 = scmp.eq.s32.totalorder %s24, 1
      %p173 = por %p171, %p172
      %p175 = scmp.ne.s32.totalorder %s160, %s174
      %p176 = scmp.eq.s32.totalorder %s24, 0
      %p177 = por %p175, %p176
      %s179 = sadd.s32 %s178, 1
      %p182 = scmp.eq.s32.totalorder %s18, 1
      %p183 = scmp.ne.s32.totalorder %s178, %s180
      %p184 = scmp.eq.s32.totalorder %s18, 0
      %p185 = por %p183, %p184
      %p186 = scmp.ne.s32.totalorder %s178, %s180
      %p187 = scmp.eq.s32.totalorder %s23, 1
      %p188 = por %p186, %p187
      %p189 = scmp.ne.s32.totalorder %s180, %s181
      %p190 = scmp.eq.s32.totalorder %s23, 0
      %p191 = por %p189, %p190
      %p192 = scmp.ne.s32.totalorder %s180, %s181
      %p193 = scmp.eq.s32.totalorder %s24, 1
      %p194 = por %p192, %p193
      %p196 = scmp.ne.s32.totalorder %s181, %s195
      %p197 = scmp.eq.s32.totalorder %s24, 0
      %p198 = por %p196, %p197
      %s200 = sadd.s32 %s199, 1
      %p203 = scmp.eq.s32.totalorder %s18, 1
      %p204 = scmp.ne.s32.totalorder %s199, %s201
      %p205 = scmp.eq.s32.totalorder %s18, 0
      %p206 = por %p204, %p205
      %p207 = scmp.ne.s32.totalorder %s199, %s201
      %p208 = scmp.eq.s32.totalorder %s23, 1
      %p209 = por %p207, %p208
      %p210 = scmp.ne.s32.totalorder %s201, %s202
      %p211 = scmp.eq.s32.totalorder %s23, 0
      %p212 = por %p210, %p211
      %p213 = scmp.ne.s32.totalorder %s201, %s202
      %p214 = scmp.eq.s32.totalorder %s24, 1
      %p215 = por %p213, %p214
      %p217 = scmp.ne.s32.totalorder %s202, %s216
      %p218 = scmp.eq.s32.totalorder %s24, 0
      %p219 = por %p217, %p218
      %s220 = ssub.s32 %s18, %s25
      %p221 = scmp.eq.s32.totalorder %s220, 0
      %s223 = sadd.s32 %s222, 1
      %s224 = scalar_select %p221, %s222, %s223
      %p227 = pneg %p221
      %p228 = scmp.eq.s32.totalorder %s18, 1
      %p229 = por %p227, %p228
      %p230 = scmp.ne.s32.totalorder %s222, %s225
      %p231 = scmp.eq.s32.totalorder %s18, 0
      %p232 = por %p230, %p231
      %p233 = scmp.ne.s32.totalorder %s222, %s225
      %p234 = scmp.eq.s32.totalorder %s23, 1
      %p235 = por %p233, %p234
      %p236 = scmp.ne.s32.totalorder %s225, %s226
      %p237 = scmp.eq.s32.totalorder %s23, 0
      %p238 = por %p236, %p237
      %p239 = scmp.ne.s32.totalorder %s225, %s226
      %p240 = scmp.eq.s32.totalorder %s24, 1
      %p241 = por %p239, %p240
      %p243 = scmp.ne.s32.totalorder %s226, %s242
      %p244 = scmp.eq.s32.totalorder %s24, 0
      %p245 = por %p243, %p244
      %p246 = scmp.le.s32.totalorder 1, %s18
      %p247 = scmp.lt.s32.totalorder %s18, 3
      %p248 = pnand %p246, %p247
      %p249 = pneg %p248
      // Predicated region
      $region9: #{tpu_custom_call.1} parent=5 // pred_check
        _
      $region10: #{tpu_custom_call.1} parent=5 // pred_check_branch
        %251 = sbr.rel (%p248) target = $region12
      $region11: #{tpu_custom_call.1} parent=5 // pred_region
        %s252 = ssub.s32 %s18, 1
        // Predicated region
        $region13: #{tpu_custom_call.1} parent=11 // pred_check
          %p253 = pneg %p65
        $region14: #{tpu_custom_call.1} parent=11 // pred_check_branch
          %255 = sbr.rel (%p253) target = $region16
        $region15: #{tpu_custom_call.1} parent=11 // pred_region
          _
        $region16: #{tpu_custom_call.1} parent=11 // pred_fallthru
          _
        // Predicated region
        $region17: #{tpu_custom_call.1} parent=11 // pred_check
          %p256 = pneg %p86
        $region18: #{tpu_custom_call.1} parent=11 // pred_check_branch
          %258 = sbr.rel (%p256) target = $region20
        $region19: #{tpu_custom_call.1} parent=11 // pred_region
          _
        $region20: #{tpu_custom_call.1} parent=11 // pred_fallthru
          _
        // Predicated region
        $region21: #{tpu_custom_call.1} parent=11 // pred_check
          %p259 = pneg %p107
        $region22: #{tpu_custom_call.1} parent=11 // pred_check_branch
          %261 = sbr.rel (%p259) target = $region24
        $region23: #{tpu_custom_call.1} parent=11 // pred_region
          _
        $region24: #{tpu_custom_call.1} parent=11 // pred_fallthru
          _
        // Predicated region
        $region25: #{tpu_custom_call.1} parent=11 // pred_check
          %p262 = pneg %p128
        $region26: #{tpu_custom_call.1} parent=11 // pred_check_branch
          %264 = sbr.rel (%p262) target = $region28
        $region27: #{tpu_custom_call.1} parent=11 // pred_region
          _
        $region28: #{tpu_custom_call.1} parent=11 // pred_fallthru
          _
        // Predicated region
        $region29: #{tpu_custom_call.1} parent=11 // pred_check
          %p265 = pneg %p149
        $region30: #{tpu_custom_call.1} parent=11 // pred_check_branch
          %267 = sbr.rel (%p265) target = $region32
        $region31: #{tpu_custom_call.1} parent=11 // pred_region
          _
        $region32: #{tpu_custom_call.1} parent=11 // pred_fallthru
          _
        // Predicated region
        $region33: #{tpu_custom_call.1} parent=11 // pred_check
          %p268 = pneg %p170
        $region34: #{tpu_custom_call.1} parent=11 // pred_check_branch
          %270 = sbr.rel (%p268) target = $region36
        $region35: #{tpu_custom_call.1} parent=11 // pred_region
          _
        $region36: #{tpu_custom_call.1} parent=11 // pred_fallthru
          _
        // Predicated region
        $region37: #{tpu_custom_call.1} parent=11 // pred_check
          %p271 = pneg %p191
        $region38: #{tpu_custom_call.1} parent=11 // pred_check_branch
          %273 = sbr.rel (%p271) target = $region40
        $region39: #{tpu_custom_call.1} parent=11 // pred_region
          _
        $region40: #{tpu_custom_call.1} parent=11 // pred_fallthru
          _
        // Predicated region
        $region41: #{tpu_custom_call.1} parent=11 // pred_check
          %p274 = pneg %p212
        $region42: #{tpu_custom_call.1} parent=11 // pred_check_branch
          %276 = sbr.rel (%p274) target = $region44
        $region43: #{tpu_custom_call.1} parent=11 // pred_region
          _
        $region44: #{tpu_custom_call.1} parent=11 // pred_fallthru
          _
      $region12: #{tpu_custom_call.1} parent=5 // pred_fallthru
        _
      %p277 = scmp.lt.s32.totalorder %s18, 2
      // Predicated region
      $region45: #{tpu_custom_call.1} parent=5 // pred_check
        %p278 = pneg %p277
      $region46: #{tpu_custom_call.1} parent=5 // pred_check_branch
        %280 = sbr.rel (%p278) target = $region48
      $region47: #{tpu_custom_call.1} parent=5 // pred_region
        // Predicated region
        $region49: #{tpu_custom_call.1} parent=47 // pred_check
          %p281 = pneg %p38
        $region50: #{tpu_custom_call.1} parent=47 // pred_check_branch
          %283 = sbr.rel (%p281) target = $region52
        $region51: #{tpu_custom_call.1} parent=47 // pred_region
          %p284 = scmp.lt.s32.totalorder %s18, 1
          %s285 = scalar_select %p284, %s18, 1
          %s286 = smul.addr %s285, 54
          %s287 = smul.addr %s286, 8
          %s288 = scalar_lea.vmem %s0, %s287
        $region52: #{tpu_custom_call.1} parent=47 // pred_fallthru
          _
      $region48: #{tpu_custom_call.1} parent=5 // pred_fallthru
        _
      %p289 = scmp.le.s32.totalorder 1, %s18
      %p290 = scmp.lt.s32.totalorder %s18, 3
      %p291 = pnand %p289, %p290
      %p292 = pneg %p291
      // Predicated region
      $region53: #{tpu_custom_call.1} parent=5 // pred_check
        _
      $region54: #{tpu_custom_call.1} parent=5 // pred_check_branch
        %294 = sbr.rel (%p291) target = $region56
      $region55: #{tpu_custom_call.1} parent=5 // pred_region
        %s295 = ssub.s32 %s18, 1
        %p296 = scmp.lt.s32.totalorder %s23, 1
        %s297 = scalar_select %p296, %s23, 1
        %s298 = smul.addr %s297, 54
        %s299 = smul.addr %s298, 8
        %s300 = scalar_lea.vmem %s0, %s299
        %p301 = pneg %p44
        %p302 = pneg %p41
        %p303 = pneg %p65
        %p304 = pneg %p62
        %p305 = pneg %p86
        %p306 = pneg %p83
        %p307 = pneg %p107
        %p308 = pneg %p104
        %p309 = pneg %p128
        %p310 = pneg %p125
        %p311 = pneg %p149
        %p312 = pneg %p146
        %p313 = pneg %p170
        %p314 = pneg %p167
        %p315 = pneg %p191
        %p316 = pneg %p188
        %p317 = pneg %p212
        %p318 = pneg %p209
        %p319 = pneg %p238
        %p320 = pneg %p235
        %s321 = sand.u32 %s225, 1
        %s322 = scalar_lea.sflag [#allocation9], %s321
        %s323 = sand.u32 %s225, 1
        %s324 = scalar_lea.vmem [#allocation8], %s323
        %p325 = scmp.lt.s32.totalorder %s23, 1
        %s326 = scalar_select %p325, %s23, 1
        %s327 = smul.addr %s326, 54
        %s328 = smul.addr %s327, 8
        %s329 = scalar_lea.vmem %s0, %s328
        %v330 = vld [vmem:[%s329] sm:$0xff]
        %v331 = vld [vmem:[%s329 + $0x8] sm:$0xff]
        %v332 = vld [vmem:[%s329 + $0x30] sm:$0xff]
        %v333 = vld [vmem:[%s329 + $0x38] sm:$0xff]
        %v334 = vld [vmem:[%s329 + $0x60] sm:$0xff]
        %v335 = vld [vmem:[%s329 + $0x68] sm:$0xff]
        %v336 = vld [vmem:[%s329 + $0x90] sm:$0xff]
        %v337 = vld [vmem:[%s329 + $0x98] sm:$0xff]
        %v338 = vld [vmem:[%s329 + $0xc0] sm:$0xff]
        %v339 = vld [vmem:[%s329 + $0xc8] sm:$0xff]
        %v340 = vld [vmem:[%s329 + $0xf0] sm:$0xff]
        %v341 = vld [vmem:[%s329 + $0xf8] sm:$0xff]
        %v342 = vld [vmem:[%s329 + $0x120] sm:$0xff]
        %v343 = vld [vmem:[%s329 + $0x128] sm:$0xff]
        %v344 = vld [vmem:[%s329 + $0x150] sm:$0xff]
        %v345 = vld [vmem:[%s329 + $0x158] sm:$0xff]
        %vm346 = vcmask 23552
        %347 = vst.msk [vmem:[#allocation2] sm:$0xff] %vm346, %v330
        %348 = vst.msk [vmem:[#allocation2 + $0x8] sm:$0xff] %vm346, %v331
        %349 = vst.msk [vmem:[#allocation2 + $0x10] sm:$0xff] %vm346, %v332
        %350 = vst.msk [vmem:[#allocation2 + $0x18] sm:$0xff] %vm346, %v333
        %351 = vst.msk [vmem:[#allocation2 + $0x20] sm:$0xff] %vm346, %v334
        %352 = vst.msk [vmem:[#allocation2 + $0x28] sm:$0xff] %vm346, %v335
        %353 = vst.msk [vmem:[#allocation2 + $0x30] sm:$0xff] %vm346, %v336
        %354 = vst.msk [vmem:[#allocation2 + $0x38] sm:$0xff] %vm346, %v337
        %355 = vst.msk [vmem:[#allocation2 + $0x40] sm:$0xff] %vm346, %v338
        %356 = vst.msk [vmem:[#allocation2 + $0x48] sm:$0xff] %vm346, %v339
        %357 = vst.msk [vmem:[#allocation2 + $0x50] sm:$0xff] %vm346, %v340
        %358 = vst.msk [vmem:[#allocation2 + $0x58] sm:$0xff] %vm346, %v341
        %359 = vst.msk [vmem:[#allocation2 + $0x60] sm:$0xff] %vm346, %v342
        %360 = vst.msk [vmem:[#allocation2 + $0x68] sm:$0xff] %vm346, %v343
        %361 = vst.msk [vmem:[#allocation2 + $0x70] sm:$0xff] %vm346, %v344
        %362 = vst.msk [vmem:[#allocation2 + $0x78] sm:$0xff] %vm346, %v345
        %v363 = vld [vmem:[%s329 + $0x1] sm:$0xff]
        %v364 = vld [vmem:[%s329 + $0x9] sm:$0xff]
        %v365 = vld [vmem:[%s329 + $0x31] sm:$0xff]
        %v366 = vld [vmem:[%s329 + $0x39] sm:$0xff]
        %v367 = vld [vmem:[%s329 + $0x61] sm:$0xff]
        %v368 = vld [vmem:[%s329 + $0x69] sm:$0xff]
        %v369 = vld [vmem:[%s329 + $0x91] sm:$0xff]
        %v370 = vld [vmem:[%s329 + $0x99] sm:$0xff]
        %v371 = vld [vmem:[%s329 + $0xc1] sm:$0xff]
        %v372 = vld [vmem:[%s329 + $0xc9] sm:$0xff]
        %v373 = vld [vmem:[%s329 + $0xf1] sm:$0xff]
        %v374 = vld [vmem:[%s329 + $0xf9] sm:$0xff]
        %v375 = vld [vmem:[%s329 + $0x121] sm:$0xff]
        %v376 = vld [vmem:[%s329 + $0x129] sm:$0xff]
        %v377 = vld [vmem:[%s329 + $0x151] sm:$0xff]
        %v378 = vld [vmem:[%s329 + $0x159] sm:$0xff]
        %395 = vrot.lane.b32.xlu0 %v363, 3
        %v396 = vpop.permute.xlu0 %395
        %397 = vrot.lane.b32.xlu0 %v364, 3
        %v398 = vpop.permute.xlu0 %397
        %399 = vrot.lane.b32.xlu0 %v365, 3
        %v400 = vpop.permute.xlu0 %399
        %401 = vrot.lane.b32.xlu0 %v366, 3
        %v402 = vpop.permute.xlu0 %401
        %403 = vrot.lane.b32.xlu0 %v367, 3
        %v404 = vpop.permute.xlu0 %403
        %405 = vrot.lane.b32.xlu0 %v368, 3
        %v406 = vpop.permute.xlu0 %405
        %407 = vrot.lane.b32.xlu0 %v369, 3
        %v408 = vpop.permute.xlu0 %407
        %409 = vrot.lane.b32.xlu0 %v370, 3
        %v410 = vpop.permute.xlu0 %409
        %411 = vrot.lane.b32.xlu0 %v371, 3
        %v412 = vpop.permute.xlu0 %411
        %413 = vrot.lane.b32.xlu0 %v372, 3
        %v414 = vpop.permute.xlu0 %413
        %415 = vrot.lane.b32.xlu0 %v373, 3
        %v416 = vpop.permute.xlu0 %415
        %417 = vrot.lane.b32.xlu0 %v374, 3
        %v418 = vpop.permute.xlu0 %417
        %419 = vrot.lane.b32.xlu0 %v375, 3
        %v420 = vpop.permute.xlu0 %419
        %421 = vrot.lane.b32.xlu0 %v376, 3
        %v422 = vpop.permute.xlu0 %421
        %423 = vrot.lane.b32.xlu0 %v377, 3
        %v424 = vpop.permute.xlu0 %423
        %425 = vrot.lane.b32.xlu0 %v378, 3
        %v426 = vpop.permute.xlu0 %425
        %vm443 = vcmask 48152
        %444 = vst.msk [vmem:[#allocation2] sm:$0xff] %vm443, %v396
        %445 = vst.msk [vmem:[#allocation2 + $0x8] sm:$0xff] %vm443, %v398
        %446 = vst.msk [vmem:[#allocation2 + $0x10] sm:$0xff] %vm443, %v400
        %447 = vst.msk [vmem:[#allocation2 + $0x18] sm:$0xff] %vm443, %v402
        %448 = vst.msk [vmem:[#allocation2 + $0x20] sm:$0xff] %vm443, %v404
        %449 = vst.msk [vmem:[#allocation2 + $0x28] sm:$0xff] %vm443, %v406
        %450 = vst.msk [vmem:[#allocation2 + $0x30] sm:$0xff] %vm443, %v408
        %451 = vst.msk [vmem:[#allocation2 + $0x38] sm:$0xff] %vm443, %v410
        %452 = vst.msk [vmem:[#allocation2 + $0x40] sm:$0xff] %vm443, %v412
        %453 = vst.msk [vmem:[#allocation2 + $0x48] sm:$0xff] %vm443, %v414
        %454 = vst.msk [vmem:[#allocation2 + $0x50] sm:$0xff] %vm443, %v416
        %455 = vst.msk [vmem:[#allocation2 + $0x58] sm:$0xff] %vm443, %v418
        %456 = vst.msk [vmem:[#allocation2 + $0x60] sm:$0xff] %vm443, %v420
        %457 = vst.msk [vmem:[#allocation2 + $0x68] sm:$0xff] %vm443, %v422
        %458 = vst.msk [vmem:[#allocation2 + $0x70] sm:$0xff] %vm443, %v424
        %459 = vst.msk [vmem:[#allocation2 + $0x78] sm:$0xff] %vm443, %v426
        %v460 = vld [vmem:[%s329 + $0x2] sm:$0xff]
        %v461 = vld [vmem:[%s329 + $0xa] sm:$0xff]
        %v462 = vld [vmem:[%s329 + $0x32] sm:$0xff]
        %v463 = vld [vmem:[%s329 + $0x3a] sm:$0xff]
        %v464 = vld [vmem:[%s329 + $0x62] sm:$0xff]
        %v465 = vld [vmem:[%s329 + $0x6a] sm:$0xff]
        %v466 = vld [vmem:[%s329 + $0x92] sm:$0xff]
        %v467 = vld [vmem:[%s329 + $0x9a] sm:$0xff]
        %v468 = vld [vmem:[%s329 + $0xc2] sm:$0xff]
        %v469 = vld [vmem:[%s329 + $0xca] sm:$0xff]
        %v470 = vld [vmem:[%s329 + $0xf2] sm:$0xff]
        %v471 = vld [vmem:[%s329 + $0xfa] sm:$0xff]
        %v472 = vld [vmem:[%s329 + $0x122] sm:$0xff]
        %v473 = vld [vmem:[%s329 + $0x12a] sm:$0xff]
        %v474 = vld [vmem:[%s329 + $0x152] sm:$0xff]
        %v475 = vld [vmem:[%s329 + $0x15a] sm:$0xff]
        %492 = vrot.lane.b32.xlu0 %v460, 6
        %v493 = vpop.permute.xlu0 %492
        %494 = vrot.lane.b32.xlu0 %v461, 6
        %v495 = vpop.permute.xlu0 %494
        %496 = vrot.lane.b32.xlu0 %v462, 6
        %v497 = vpop.permute.xlu0 %496
        %498 = vrot.lane.b32.xlu0 %v463, 6
        %v499 = vpop.permute.xlu0 %498
        %500 = vrot.lane.b32.xlu0 %v464, 6
        %v501 = vpop.permute.xlu0 %500
        %502 = vrot.lane.b32.xlu0 %v465, 6
        %v503 = vpop.permute.xlu0 %502
        %504 = vrot.lane.b32.xlu0 %v466, 6
        %v505 = vpop.permute.xlu0 %504
        %506 = vrot.lane.b32.xlu0 %v467, 6
        %v507 = vpop.permute.xlu0 %506
        %508 = vrot.lane.b32.xlu0 %v468, 6
        %v509 = vpop.permute.xlu0 %508
        %510 = vrot.lane.b32.xlu0 %v469, 6
        %v511 = vpop.permute.xlu0 %510
        %512 = vrot.lane.b32.xlu0 %v470, 6
        %v513 = vpop.permute.xlu0 %512
        %514 = vrot.lane.b32.xlu0 %v471, 6
        %v515 = vpop.permute.xlu0 %514
        %516 = vrot.lane.b32.xlu0 %v472, 6
        %v517 = vpop.permute.xlu0 %516
        %518 = vrot.lane.b32.xlu0 %v473, 6
        %v519 = vpop.permute.xlu0 %518
        %520 = vrot.lane.b32.xlu0 %v474, 6
        %v521 = vpop.permute.xlu0 %520
        %522 = vrot.lane.b32.xlu0 %v475, 6
        %v523 = vpop.permute.xlu0 %522
        %vm540 = vcmask 72752
        %541 = vst.msk [vmem:[#allocation2] sm:$0xff] %vm540, %v493
        %542 = vst.msk [vmem:[#allocation2 + $0x8] sm:$0xff] %vm540, %v495
        %543 = vst.msk [vmem:[#allocation2 + $0x10] sm:$0xff] %vm540, %v497
        %544 = vst.msk [vmem:[#allocation2 + $0x18] sm:$0xff] %vm540, %v499
        %545 = vst.msk [vmem:[#allocation2 + $0x20] sm:$0xff] %vm540, %v501
        %546 = vst.msk [vmem:[#allocation2 + $0x28] sm:$0xff] %vm540, %v503
        %547 = vst.msk [vmem:[#allocation2 + $0x30] sm:$0xff] %vm540, %v505
        %548 = vst.msk [vmem:[#allocation2 + $0x38] sm:$0xff] %vm540, %v507
        %549 = vst.msk [vmem:[#allocation2 + $0x40] sm:$0xff] %vm540, %v509
        %550 = vst.msk [vmem:[#allocation2 + $0x48] sm:$0xff] %vm540, %v511
        %551 = vst.msk [vmem:[#allocation2 + $0x50] sm:$0xff] %vm540, %v513
        %552 = vst.msk [vmem:[#allocation2 + $0x58] sm:$0xff] %vm540, %v515
        %553 = vst.msk [vmem:[#allocation2 + $0x60] sm:$0xff] %vm540, %v517
        %554 = vst.msk [vmem:[#allocation2 + $0x68] sm:$0xff] %vm540, %v519
        %555 = vst.msk [vmem:[#allocation2 + $0x70] sm:$0xff] %vm540, %v521
        %556 = vst.msk [vmem:[#allocation2 + $0x78] sm:$0xff] %vm540, %v523
        %s557 = scalar_lea.vmem %s329, 24
        %v558 = vld [vmem:[%s557] sm:$0xff]
        %v559 = vld [vmem:[%s557 + $0x8] sm:$0xff]
        %v560 = vld [vmem:[%s557 + $0x30] sm:$0xff]
        %v561 = vld [vmem:[%s557 + $0x38] sm:$0xff]
        %v562 = vld [vmem:[%s557 + $0x60] sm:$0xff]
        %v563 = vld [vmem:[%s557 + $0x68] sm:$0xff]
        %v564 = vld [vmem:[%s557 + $0x90] sm:$0xff]
        %v565 = vld [vmem:[%s557 + $0x98] sm:$0xff]
        %v566 = vld [vmem:[%s557 + $0xc0] sm:$0xff]
        %v567 = vld [vmem:[%s557 + $0xc8] sm:$0xff]
        %v568 = vld [vmem:[%s557 + $0xf0] sm:$0xff]
        %v569 = vld [vmem:[%s557 + $0xf8] sm:$0xff]
        %v570 = vld [vmem:[%s557 + $0x120] sm:$0xff]
        %v571 = vld [vmem:[%s557 + $0x128] sm:$0xff]
        %v572 = vld [vmem:[%s557 + $0x150] sm:$0xff]
        %v573 = vld [vmem:[%s557 + $0x158] sm:$0xff]
        %590 = vrot.lane.b32.xlu0 %v558, 9
        %v591 = vpop.permute.xlu0 %590
        %592 = vrot.lane.b32.xlu0 %v559, 9
        %v593 = vpop.permute.xlu0 %592
        %594 = vrot.lane.b32.xlu0 %v560, 9
        %v595 = vpop.permute.xlu0 %594
        %596 = vrot.lane.b32.xlu0 %v561, 9
        %v597 = vpop.permute.xlu0 %596
        %598 = vrot.lane.b32.xlu0 %v562, 9
        %v599 = vpop.permute.xlu0 %598
        %600 = vrot.lane.b32.xlu0 %v563, 9
        %v601 = vpop.permute.xlu0 %600
        %602 = vrot.lane.b32.xlu0 %v564, 9
        %v603 = vpop.permute.xlu0 %602
        %604 = vrot.lane.b32.xlu0 %v565, 9
        %v605 = vpop.permute.xlu0 %604
        %606 = vrot.lane.b32.xlu0 %v566, 9
        %v607 = vpop.permute.xlu0 %606
        %608 = vrot.lane.b32.xlu0 %v567, 9
        %v609 = vpop.permute.xlu0 %608
        %610 = vrot.lane.b32.xlu0 %v568, 9
        %v611 = vpop.permute.xlu0 %610
        %612 = vrot.lane.b32.xlu0 %v569, 9
        %v613 = vpop.permute.xlu0 %612
        %614 = vrot.lane.b32.xlu0 %v570, 9
        %v615 = vpop.permute.xlu0 %614
        %616 = vrot.lane.b32.xlu0 %v571, 9
        %v617 = vpop.permute.xlu0 %616
        %618 = vrot.lane.b32.xlu0 %v572, 9
        %v619 = vpop.permute.xlu0 %618
        %620 = vrot.lane.b32.xlu0 %v573, 9
        %v621 = vpop.permute.xlu0 %620
        %vm638 = vcmask 97352
        %639 = vst.msk [vmem:[#allocation2] sm:$0xff] %vm638, %v591
        %640 = vst.msk [vmem:[#allocation2 + $0x8] sm:$0xff] %vm638, %v593
        %641 = vst.msk [vmem:[#allocation2 + $0x10] sm:$0xff] %vm638, %v595
        %642 = vst.msk [vmem:[#allocation2 + $0x18] sm:$0xff] %vm638, %v597
        %643 = vst.msk [vmem:[#allocation2 + $0x20] sm:$0xff] %vm638, %v599
        %644 = vst.msk [vmem:[#allocation2 + $0x28] sm:$0xff] %vm638, %v601
        %645 = vst.msk [vmem:[#allocation2 + $0x30] sm:$0xff] %vm638, %v603
        %646 = vst.msk [vmem:[#allocation2 + $0x38] sm:$0xff] %vm638, %v605
        %647 = vst.msk [vmem:[#allocation2 + $0x40] sm:$0xff] %vm638, %v607
        %648 = vst.msk [vmem:[#allocation2 + $0x48] sm:$0xff] %vm638, %v609
        %649 = vst.msk [vmem:[#allocation2 + $0x50] sm:$0xff] %vm638, %v611
        %650 = vst.msk [vmem:[#allocation2 + $0x58] sm:$0xff] %vm638, %v613
        %651 = vst.msk [vmem:[#allocation2 + $0x60] sm:$0xff] %vm638, %v615
        %652 = vst.msk [vmem:[#allocation2 + $0x68] sm:$0xff] %vm638, %v617
        %653 = vst.msk [vmem:[#allocation2 + $0x70] sm:$0xff] %vm638, %v619
        %654 = vst.msk [vmem:[#allocation2 + $0x78] sm:$0xff] %vm638, %v621
        %v655 = vld [vmem:[%s557 + $0x1] sm:$0xff]
        %v656 = vld [vmem:[%s557 + $0x9] sm:$0xff]
        %v657 = vld [vmem:[%s557 + $0x31] sm:$0xff]
        %v658 = vld [vmem:[%s557 + $0x39] sm:$0xff]
        %v659 = vld [vmem:[%s557 + $0x61] sm:$0xff]
        %v660 = vld [vmem:[%s557 + $0x69] sm:$0xff]
        %v661 = vld [vmem:[%s557 + $0x91] sm:$0xff]
        %v662 = vld [vmem:[%s557 + $0x99] sm:$0xff]
        %v663 = vld [vmem:[%s557 + $0xc1] sm:$0xff]
        %v664 = vld [vmem:[%s557 + $0xc9] sm:$0xff]
        %v665 = vld [vmem:[%s557 + $0xf1] sm:$0xff]
        %v666 = vld [vmem:[%s557 + $0xf9] sm:$0xff]
        %v667 = vld [vmem:[%s557 + $0x121] sm:$0xff]
        %v668 = vld [vmem:[%s557 + $0x129] sm:$0xff]
        %v669 = vld [vmem:[%s557 + $0x151] sm:$0xff]
        %v670 = vld [vmem:[%s557 + $0x159] sm:$0xff]
        %687 = vrot.lane.b32.xlu0 %v655, 12
        %v688 = vpop.permute.xlu0 %687
        %689 = vrot.lane.b32.xlu0 %v656, 12
        %v690 = vpop.permute.xlu0 %689
        %691 = vrot.lane.b32.xlu0 %v657, 12
        %v692 = vpop.permute.xlu0 %691
        %693 = vrot.lane.b32.xlu0 %v658, 12
        %v694 = vpop.permute.xlu0 %693
        %695 = vrot.lane.b32.xlu0 %v659, 12
        %v696 = vpop.permute.xlu0 %695
        %697 = vrot.lane.b32.xlu0 %v660, 12
        %v698 = vpop.permute.xlu0 %697
        %699 = vrot.lane.b32.xlu0 %v661, 12
        %v700 = vpop.permute.xlu0 %699
        %701 = vrot.lane.b32.xlu0 %v662, 12
        %v702 = vpop.permute.xlu0 %701
        %703 = vrot.lane.b32.xlu0 %v663, 12
        %v704 = vpop.permute.xlu0 %703
        %705 = vrot.lane.b32.xlu0 %v664, 12
        %v706 = vpop.permute.xlu0 %705
        %707 = vrot.lane.b32.xlu0 %v665, 12
        %v708 = vpop.permute.xlu0 %707
        %709 = vrot.lane.b32.xlu0 %v666, 12
        %v710 = vpop.permute.xlu0 %709
        %711 = vrot.lane.b32.xlu0 %v667, 12
        %v712 = vpop.permute.xlu0 %711
        %713 = vrot.lane.b32.xlu0 %v668, 12
        %v714 = vpop.permute.xlu0 %713
        %715 = vrot.lane.b32.xlu0 %v669, 12
        %v716 = vpop.permute.xlu0 %715
        %717 = vrot.lane.b32.xlu0 %v670, 12
        %v718 = vpop.permute.xlu0 %717
        %vm735 = vcmask 121952
        %736 = vst.msk [vmem:[#allocation2] sm:$0xff] %vm735, %v688
        %737 = vst.msk [vmem:[#allocation2 + $0x8] sm:$0xff] %vm735, %v690
        %738 = vst.msk [vmem:[#allocation2 + $0x10] sm:$0xff] %vm735, %v692
        %739 = vst.msk [vmem:[#allocation2 + $0x18] sm:$0xff] %vm735, %v694
        %740 = vst.msk [vmem:[#allocation2 + $0x20] sm:$0xff] %vm735, %v696
        %741 = vst.msk [vmem:[#allocation2 + $0x28] sm:$0xff] %vm735, %v698
        %742 = vst.msk [vmem:[#allocation2 + $0x30] sm:$0xff] %vm735, %v700
        %743 = vst.msk [vmem:[#allocation2 + $0x38] sm:$0xff] %vm735, %v702
        %744 = vst.msk [vmem:[#allocation2 + $0x40] sm:$0xff] %vm735, %v704
        %745 = vst.msk [vmem:[#allocation2 + $0x48] sm:$0xff] %vm735, %v706
        %746 = vst.msk [vmem:[#allocation2 + $0x50] sm:$0xff] %vm735, %v708
        %747 = vst.msk [vmem:[#allocation2 + $0x58] sm:$0xff] %vm735, %v710
        %748 = vst.msk [vmem:[#allocation2 + $0x60] sm:$0xff] %vm735, %v712
        %749 = vst.msk [vmem:[#allocation2 + $0x68] sm:$0xff] %vm735, %v714
        %750 = vst.msk [vmem:[#allocation2 + $0x70] sm:$0xff] %vm735, %v716
        %751 = vst.msk [vmem:[#allocation2 + $0x78] sm:$0xff] %vm735, %v718
        %v752 = vld [vmem:[%s557 + $0x2] sm:$0xff]
        %v753 = vld [vmem:[%s557 + $0xa] sm:$0xff]
        %v754 = vld [vmem:[%s557 + $0x32] sm:$0xff]
        %v755 = vld [vmem:[%s557 + $0x3a] sm:$0xff]
        %v756 = vld [vmem:[%s557 + $0x62] sm:$0xff]
        %v757 = vld [vmem:[%s557 + $0x6a] sm:$0xff]
        %v758 = vld [vmem:[%s557 + $0x92] sm:$0xff]
        %v759 = vld [vmem:[%s557 + $0x9a] sm:$0xff]
        %v760 = vld [vmem:[%s557 + $0xc2] sm:$0xff]
        %v761 = vld [vmem:[%s557 + $0xca] sm:$0xff]
        %v762 = vld [vmem:[%s557 + $0xf2] sm:$0xff]
        %v763 = vld [vmem:[%s557 + $0xfa] sm:$0xff]
        %v764 = vld [vmem:[%s557 + $0x122] sm:$0xff]
        %v765 = vld [vmem:[%s557 + $0x12a] sm:$0xff]
        %v766 = vld [vmem:[%s557 + $0x152] sm:$0xff]
        %v767 = vld [vmem:[%s557 + $0x15a] sm:$0xff]
        %784 = vrot.lane.b32.xlu0 %v752, 15
        %v785 = vpop.permute.xlu0 %784
        %786 = vrot.lane.b32.xlu0 %v753, 15
        %v787 = vpop.permute.xlu0 %786
        %788 = vrot.lane.b32.xlu0 %v754, 15
        %v789 = vpop.permute.xlu0 %788
        %790 = vrot.lane.b32.xlu0 %v755, 15
        %v791 = vpop.permute.xlu0 %790
        %792 = vrot.lane.b32.xlu0 %v756, 15
        %v793 = vpop.permute.xlu0 %792
        %794 = vrot.lane.b32.xlu0 %v757, 15
        %v795 = vpop.permute.xlu0 %794
        %796 = vrot.lane.b32.xlu0 %v758, 15
        %v797 = vpop.permute.xlu0 %796
        %798 = vrot.lane.b32.xlu0 %v759, 15
        %v799 = vpop.permute.xlu0 %798
        %800 = vrot.lane.b32.xlu0 %v760, 15
        %v801 = vpop.permute.xlu0 %800
        %802 = vrot.lane.b32.xlu0 %v761, 15
        %v803 = vpop.permute.xlu0 %802
        %804 = vrot.lane.b32.xlu0 %v762, 15
        %v805 = vpop.permute.xlu0 %804
        %806 = vrot.lane.b32.xlu0 %v763, 15
        %v807 = vpop.permute.xlu0 %806
        %808 = vrot.lane.b32.xlu0 %v764, 15
        %v809 = vpop.permute.xlu0 %808
        %810 = vrot.lane.b32.xlu0 %v765, 15
        %v811 = vpop.permute.xlu0 %810
        %812 = vrot.lane.b32.xlu0 %v766, 15
        %v813 = vpop.permute.xlu0 %812
        %814 = vrot.lane.b32.xlu0 %v767, 15
        %v815 = vpop.permute.xlu0 %814
        %vm832 = vcmask 146552
        %833 = vst.msk [vmem:[#allocation2] sm:$0xff] %vm832, %v785
        %834 = vst.msk [vmem:[#allocation2 + $0x8] sm:$0xff] %vm832, %v787
        %835 = vst.msk [vmem:[#allocation2 + $0x10] sm:$0xff] %vm832, %v789
        %836 = vst.msk [vmem:[#allocation2 + $0x18] sm:$0xff] %vm832, %v791
        %837 = vst.msk [vmem:[#allocation2 + $0x20] sm:$0xff] %vm832, %v793
        %838 = vst.msk [vmem:[#allocation2 + $0x28] sm:$0xff] %vm832, %v795
        %839 = vst.msk [vmem:[#allocation2 + $0x30] sm:$0xff] %vm832, %v797
        %840 = vst.msk [vmem:[#allocation2 + $0x38] sm:$0xff] %vm832, %v799
        %841 = vst.msk [vmem:[#allocation2 + $0x40] sm:$0xff] %vm832, %v801
        %842 = vst.msk [vmem:[#allocation2 + $0x48] sm:$0xff] %vm832, %v803
        %843 = vst.msk [vmem:[#allocation2 + $0x50] sm:$0xff] %vm832, %v805
        %844 = vst.msk [vmem:[#allocation2 + $0x58] sm:$0xff] %vm832, %v807
        %845 = vst.msk [vmem:[#allocation2 + $0x60] sm:$0xff] %vm832, %v809
        %846 = vst.msk [vmem:[#allocation2 + $0x68] sm:$0xff] %vm832, %v811
        %847 = vst.msk [vmem:[#allocation2 + $0x70] sm:$0xff] %vm832, %v813
        %848 = vst.msk [vmem:[#allocation2 + $0x78] sm:$0xff] %vm832, %v815
        %s849 = scalar_lea.vmem %s329, 48
        %v850 = vld [vmem:[%s849] sm:$0xff]
        %v851 = vld [vmem:[%s849 + $0x8] sm:$0xff]
        %v852 = vld [vmem:[%s849 + $0x30] sm:$0xff]
        %v853 = vld [vmem:[%s849 + $0x38] sm:$0xff]
        %v854 = vld [vmem:[%s849 + $0x60] sm:$0xff]
        %v855 = vld [vmem:[%s849 + $0x68] sm:$0xff]
        %v856 = vld [vmem:[%s849 + $0x90] sm:$0xff]
        %v857 = vld [vmem:[%s849 + $0x98] sm:$0xff]
        %v858 = vld [vmem:[%s849 + $0xc0] sm:$0xff]
        %v859 = vld [vmem:[%s849 + $0xc8] sm:$0xff]
        %v860 = vld [vmem:[%s849 + $0xf0] sm:$0xff]
        %v861 = vld [vmem:[%s849 + $0xf8] sm:$0xff]
        %v862 = vld [vmem:[%s849 + $0x120] sm:$0xff]
        %v863 = vld [vmem:[%s849 + $0x128] sm:$0xff]
        %v864 = vld [vmem:[%s849 + $0x150] sm:$0xff]
        %v865 = vld [vmem:[%s849 + $0x158] sm:$0xff]
        %882 = vrot.lane.b32.xlu0 %v850, 18
        %v883 = vpop.permute.xlu0 %882
        %884 = vrot.lane.b32.xlu0 %v851, 18
        %v885 = vpop.permute.xlu0 %884
        %886 = vrot.lane.b32.xlu0 %v852, 18
        %v887 = vpop.permute.xlu0 %886
        %888 = vrot.lane.b32.xlu0 %v853, 18
        %v889 = vpop.permute.xlu0 %888
        %890 = vrot.lane.b32.xlu0 %v854, 18
        %v891 = vpop.permute.xlu0 %890
        %892 = vrot.lane.b32.xlu0 %v855, 18
        %v893 = vpop.permute.xlu0 %892
        %894 = vrot.lane.b32.xlu0 %v856, 18
        %v895 = vpop.permute.xlu0 %894
        %896 = vrot.lane.b32.xlu0 %v857, 18
        %v897 = vpop.permute.xlu0 %896
        %898 = vrot.lane.b32.xlu0 %v858, 18
        %v899 = vpop.permute.xlu0 %898
        %900 = vrot.lane.b32.xlu0 %v859, 18
        %v901 = vpop.permute.xlu0 %900
        %902 = vrot.lane.b32.xlu0 %v860, 18
        %v903 = vpop.permute.xlu0 %902
        %904 = vrot.lane.b32.xlu0 %v861, 18
        %v905 = vpop.permute.xlu0 %904
        %906 = vrot.lane.b32.xlu0 %v862, 18
        %v907 = vpop.permute.xlu0 %906
        %908 = vrot.lane.b32.xlu0 %v863, 18
        %v909 = vpop.permute.xlu0 %908
        %910 = vrot.lane.b32.xlu0 %v864, 18
        %v911 = vpop.permute.xlu0 %910
        %912 = vrot.lane.b32.xlu0 %v865, 18
        %v913 = vpop.permute.xlu0 %912
        %vm930 = vcmask 171152
        %931 = vst.msk [vmem:[#allocation2] sm:$0xff] %vm930, %v883
        %932 = vst.msk [vmem:[#allocation2 + $0x8] sm:$0xff] %vm930, %v885
        %933 = vst.msk [vmem:[#allocation2 + $0x10] sm:$0xff] %vm930, %v887
        %934 = vst.msk [vmem:[#allocation2 + $0x18] sm:$0xff] %vm930, %v889
        %935 = vst.msk [vmem:[#allocation2 + $0x20] sm:$0xff] %vm930, %v891
        %936 = vst.msk [vmem:[#allocation2 + $0x28] sm:$0xff] %vm930, %v893
        %937 = vst.msk [vmem:[#allocation2 + $0x30] sm:$0xff] %vm930, %v895
        %938 = vst.msk [vmem:[#allocation2 + $0x38] sm:$0xff] %vm930, %v897
        %939 = vst.msk [vmem:[#allocation2 + $0x40] sm:$0xff] %vm930, %v899
        %940 = vst.msk [vmem:[#allocation2 + $0x48] sm:$0xff] %vm930, %v901
        %941 = vst.msk [vmem:[#allocation2 + $0x50] sm:$0xff] %vm930, %v903
        %942 = vst.msk [vmem:[#allocation2 + $0x58] sm:$0xff] %vm930, %v905
        %943 = vst.msk [vmem:[#allocation2 + $0x60] sm:$0xff] %vm930, %v907
        %944 = vst.msk [vmem:[#allocation2 + $0x68] sm:$0xff] %vm930, %v909
        %945 = vst.msk [vmem:[#allocation2 + $0x70] sm:$0xff] %vm930, %v911
        %946 = vst.msk [vmem:[#allocation2 + $0x78] sm:$0xff] %vm930, %v913
        %v947 = vld [vmem:[%s849 + $0x1] sm:$0xff]
        %v948 = vld [vmem:[%s849 + $0x9] sm:$0xff]
        %v949 = vld [vmem:[%s849 + $0x31] sm:$0xff]
        %v950 = vld [vmem:[%s849 + $0x39] sm:$0xff]
        %v951 = vld [vmem:[%s849 + $0x61] sm:$0xff]
        %v952 = vld [vmem:[%s849 + $0x69] sm:$0xff]
        %v953 = vld [vmem:[%s849 + $0x91] sm:$0xff]
        %v954 = vld [vmem:[%s849 + $0x99] sm:$0xff]
        %v955 = vld [vmem:[%s849 + $0xc1] sm:$0xff]
        %v956 = vld [vmem:[%s849 + $0xc9] sm:$0xff]
        %v957 = vld [vmem:[%s849 + $0xf1] sm:$0xff]
        %v958 = vld [vmem:[%s849 + $0xf9] sm:$0xff]
        %v959 = vld [vmem:[%s849 + $0x121] sm:$0xff]
        %v960 = vld [vmem:[%s849 + $0x129] sm:$0xff]
        %v961 = vld [vmem:[%s849 + $0x151] sm:$0xff]
        %v962 = vld [vmem:[%s849 + $0x159] sm:$0xff]
        %979 = vrot.lane.b32.xlu0 %v947, 21
        %v980 = vpop.permute.xlu0 %979
        %981 = vrot.lane.b32.xlu0 %v948, 21
        %v982 = vpop.permute.xlu0 %981
        %983 = vrot.lane.b32.xlu0 %v949, 21
        %v984 = vpop.permute.xlu0 %983
        %985 = vrot.lane.b32.xlu0 %v950, 21
        %v986 = vpop.permute.xlu0 %985
        %987 = vrot.lane.b32.xlu0 %v951, 21
        %v988 = vpop.permute.xlu0 %987
        %989 = vrot.lane.b32.xlu0 %v952, 21
        %v990 = vpop.permute.xlu0 %989
        %991 = vrot.lane.b32.xlu0 %v953, 21
        %v992 = vpop.permute.xlu0 %991
        %993 = vrot.lane.b32.xlu0 %v954, 21
        %v994 = vpop.permute.xlu0 %993
        %995 = vrot.lane.b32.xlu0 %v955, 21
        %v996 = vpop.permute.xlu0 %995
        %997 = vrot.lane.b32.xlu0 %v956, 21
        %v998 = vpop.permute.xlu0 %997
        %999 = vrot.lane.b32.xlu0 %v957, 21
        %v1000 = vpop.permute.xlu0 %999
        %1001 = vrot.lane.b32.xlu0 %v958, 21
        %v1002 = vpop.permute.xlu0 %1001
        %1003 = vrot.lane.b32.xlu0 %v959, 21
        %v1004 = vpop.permute.xlu0 %1003
        %1005 = vrot.lane.b32.xlu0 %v960, 21
        %v1006 = vpop.permute.xlu0 %1005
        %1007 = vrot.lane.b32.xlu0 %v961, 21
        %v1008 = vpop.permute.xlu0 %1007
        %1009 = vrot.lane.b32.xlu0 %v962, 21
        %v1010 = vpop.permute.xlu0 %1009
        %vm1027 = vcmask 195752
        %1028 = vst.msk [vmem:[#allocation2] sm:$0xff] %vm1027, %v980
        %1029 = vst.msk [vmem:[#allocation2 + $0x8] sm:$0xff] %vm1027, %v982
        %1030 = vst.msk [vmem:[#allocation2 + $0x10] sm:$0xff] %vm1027, %v984
        %1031 = vst.msk [vmem:[#allocation2 + $0x18] sm:$0xff] %vm1027, %v986
        %1032 = vst.msk [vmem:[#allocation2 + $0x20] sm:$0xff] %vm1027, %v988
        %1033 = vst.msk [vmem:[#allocation2 + $0x28] sm:$0xff] %vm1027, %v990
        %1034 = vst.msk [vmem:[#allocation2 + $0x30] sm:$0xff] %vm1027, %v992
        %1035 = vst.msk [vmem:[#allocation2 + $0x38] sm:$0xff] %vm1027, %v994
        %1036 = vst.msk [vmem:[#allocation2 + $0x40] sm:$0xff] %vm1027, %v996
        %1037 = vst.msk [vmem:[#allocation2 + $0x48] sm:$0xff] %vm1027, %v998
        %1038 = vst.msk [vmem:[#allocation2 + $0x50] sm:$0xff] %vm1027, %v1000
        %1039 = vst.msk [vmem:[#allocation2 + $0x58] sm:$0xff] %vm1027, %v1002
        %1040 = vst.msk [vmem:[#allocation2 + $0x60] sm:$0xff] %vm1027, %v1004
        %1041 = vst.msk [vmem:[#allocation2 + $0x68] sm:$0xff] %vm1027, %v1006
        %1042 = vst.msk [vmem:[#allocation2 + $0x70] sm:$0xff] %vm1027, %v1008
        %1043 = vst.msk [vmem:[#allocation2 + $0x78] sm:$0xff] %vm1027, %v1010
        %v1044 = vld [vmem:[%s849 + $0x2] sm:$0xff]
        %v1045 = vld [vmem:[%s849 + $0xa] sm:$0xff]
        %v1046 = vld [vmem:[%s849 + $0x32] sm:$0xff]
        %v1047 = vld [vmem:[%s849 + $0x3a] sm:$0xff]
        %v1048 = vld [vmem:[%s849 + $0x62] sm:$0xff]
        %v1049 = vld [vmem:[%s849 + $0x6a] sm:$0xff]
        %v1050 = vld [vmem:[%s849 + $0x92] sm:$0xff]
        %v1051 = vld [vmem:[%s849 + $0x9a] sm:$0xff]
        %v1052 = vld [vmem:[%s849 + $0xc2] sm:$0xff]
        %v1053 = vld [vmem:[%s849 + $0xca] sm:$0xff]
        %v1054 = vld [vmem:[%s849 + $0xf2] sm:$0xff]
        %v1055 = vld [vmem:[%s849 + $0xfa] sm:$0xff]
        %v1056 = vld [vmem:[%s849 + $0x122] sm:$0xff]
        %v1057 = vld [vmem:[%s849 + $0x12a] sm:$0xff]
        %v1058 = vld [vmem:[%s849 + $0x152] sm:$0xff]
        %v1059 = vld [vmem:[%s849 + $0x15a] sm:$0xff]
        %1076 = vrot.lane.b32.xlu0 %v1044, 24
        %v1077 = vpop.permute.xlu0 %1076
        %1078 = vrot.lane.b32.xlu0 %v1045, 24
        %v1079 = vpop.permute.xlu0 %1078
        %1080 = vrot.lane.b32.xlu0 %v1046, 24
        %v1081 = vpop.permute.xlu0 %1080
        %1082 = vrot.lane.b32.xlu0 %v1047, 24
        %v1083 = vpop.permute.xlu0 %1082
        %1084 = vrot.lane.b32.xlu0 %v1048, 24
        %v1085 = vpop.permute.xlu0 %1084
        %1086 = vrot.lane.b32.xlu0 %v1049, 24
        %v1087 = vpop.permute.xlu0 %1086
        %1088 = vrot.lane.b32.xlu0 %v1050, 24
        %v1089 = vpop.permute.xlu0 %1088
        %1090 = vrot.lane.b32.xlu0 %v1051, 24
        %v1091 = vpop.permute.xlu0 %1090
        %1092 = vrot.lane.b32.xlu0 %v1052, 24
        %v1093 = vpop.permute.xlu0 %1092
        %1094 = vrot.lane.b32.xlu0 %v1053, 24
        %v1095 = vpop.permute.xlu0 %1094
        %1096 = vrot.lane.b32.xlu0 %v1054, 24
        %v1097 = vpop.permute.xlu0 %1096
        %1098 = vrot.lane.b32.xlu0 %v1055, 24
        %v1099 = vpop.permute.xlu0 %1098
        %1100 = vrot.lane.b32.xlu0 %v1056, 24
        %v1101 = vpop.permute.xlu0 %1100
        %1102 = vrot.lane.b32.xlu0 %v1057, 24
        %v1103 = vpop.permute.xlu0 %1102
        %1104 = vrot.lane.b32.xlu0 %v1058, 24
        %v1105 = vpop.permute.xlu0 %1104
        %1106 = vrot.lane.b32.xlu0 %v1059, 24
        %v1107 = vpop.permute.xlu0 %1106
        %vm1124 = vcmask 220352
        %1125 = vst.msk [vmem:[#allocation2] sm:$0xff] %vm1124, %v1077
        %1126 = vst.msk [vmem:[#allocation2 + $0x8] sm:$0xff] %vm1124, %v1079
        %1127 = vst.msk [vmem:[#allocation2 + $0x10] sm:$0xff] %vm1124, %v1081
        %1128 = vst.msk [vmem:[#allocation2 + $0x18] sm:$0xff] %vm1124, %v1083
        %1129 = vst.msk [vmem:[#allocation2 + $0x20] sm:$0xff] %vm1124, %v1085
        %1130 = vst.msk [vmem:[#allocation2 + $0x28] sm:$0xff] %vm1124, %v1087
        %1131 = vst.msk [vmem:[#allocation2 + $0x30] sm:$0xff] %vm1124, %v1089
        %1132 = vst.msk [vmem:[#allocation2 + $0x38] sm:$0xff] %vm1124, %v1091
        %1133 = vst.msk [vmem:[#allocation2 + $0x40] sm:$0xff] %vm1124, %v1093
        %1134 = vst.msk [vmem:[#allocation2 + $0x48] sm:$0xff] %vm1124, %v1095
        %1135 = vst.msk [vmem:[#allocation2 + $0x50] sm:$0xff] %vm1124, %v1097
        %1136 = vst.msk [vmem:[#allocation2 + $0x58] sm:$0xff] %vm1124, %v1099
        %1137 = vst.msk [vmem:[#allocation2 + $0x60] sm:$0xff] %vm1124, %v1101
        %1138 = vst.msk [vmem:[#allocation2 + $0x68] sm:$0xff] %vm1124, %v1103
        %1139 = vst.msk [vmem:[#allocation2 + $0x70] sm:$0xff] %vm1124, %v1105
        %1140 = vst.msk [vmem:[#allocation2 + $0x78] sm:$0xff] %vm1124, %v1107
        %v1141 = vld [vmem:[#allocation2] sm:$0xff]
        %v1142 = vld [vmem:[#allocation2 + $0x8] sm:$0xff]
        %v1143 = vld [vmem:[#allocation2 + $0x10] sm:$0xff]
        %v1144 = vld [vmem:[#allocation2 + $0x18] sm:$0xff]
        %v1145 = vld [vmem:[#allocation2 + $0x20] sm:$0xff]
        %v1146 = vld [vmem:[#allocation2 + $0x28] sm:$0xff]
        %v1147 = vld [vmem:[#allocation2 + $0x30] sm:$0xff]
        %v1148 = vld [vmem:[#allocation2 + $0x38] sm:$0xff]
        %v1149 = vld [vmem:[#allocation2 + $0x40] sm:$0xff]
        %v1150 = vld [vmem:[#allocation2 + $0x48] sm:$0xff]
        %v1151 = vld [vmem:[#allocation2 + $0x50] sm:$0xff]
        %v1152 = vld [vmem:[#allocation2 + $0x58] sm:$0xff]
        %v1153 = vld [vmem:[#allocation2 + $0x60] sm:$0xff]
        %v1154 = vld [vmem:[#allocation2 + $0x68] sm:$0xff]
        %v1155 = vld [vmem:[#allocation2 + $0x70] sm:$0xff]
        %v1156 = vld [vmem:[#allocation2 + $0x78] sm:$0xff]
        %v1157 = vld [vmem:[%s1] sm:$0xff]
        %v1158 = vld [vmem:[%s1 + $0x8] sm:$0xff]
        %v1159 = vld [vmem:[%s1 + $0x10] sm:$0xff]
        %v1160 = vld [vmem:[%s1 + $0x18] sm:$0x7]
        %vm1161 = vcmask 220160
        %v1163 = vsel %vm1161, %v1141, 0
        %v1166 = vsel %vm1161, %v1142, 0
        %v1169 = vsel %vm1161, %v1143, 0
        %v1172 = vsel %vm1161, %v1144, 0
        %v1175 = vsel %vm1161, %v1145, 0
        %v1178 = vsel %vm1161, %v1146, 0
        %v1181 = vsel %vm1161, %v1147, 0
        %v1184 = vsel %vm1161, %v1148, 0
        %v1187 = vsel %vm1161, %v1149, 0
        %v1190 = vsel %vm1161, %v1150, 0
        %v1193 = vsel %vm1161, %v1151, 0
        %v1196 = vsel %vm1161, %v1152, 0
        %v1199 = vsel %vm1161, %v1153, 0
        %v1202 = vsel %vm1161, %v1154, 0
        %v1205 = vsel %vm1161, %v1155, 0
        %v1208 = vsel %vm1161, %v1156, 0
        %vm1210 = vcmask 1042432
        %v1212 = vsel %vm1210, %v1160, 0
        %1214 = vmatprep.subr.mxu0 0.0
        %1215 = vmatpush1.msra.mxu0 0.0
        %1216 = vmatprep.subr.mxu0 0.0
        %1217 = vmatpush1.msra.mxu0 0.0
        %1218 = vmatprep.subr.mxu0 0.0
        %1219 = vmatpush1.msra.mxu0 0.0
        %1220 = vmatprep.subr.mxu0 0.0
        %1221 = vmatpush1.msra.mxu0 0.0
        %1222 = vmatprep.subr.mxu0 0.0
        %1223 = vmatpush1.msra.mxu0 0.0
        %1224 = vmatprep.subr.mxu0 0.0
        %1225 = vmatpush1.msra.mxu0 0.0
        %1226 = vmatprep.subr.mxu0 0.0
        %1227 = vmatpush1.msra.mxu0 0.0
        %1228 = vmatprep.subr.mxu0 0.0
        %1229 = vmatpush1.msra.mxu0 0.0
        %1230 = vmatprep.subr.mxu0 0.0
        %1231 = vmatpush1.msra.mxu0 0.0
        %1232 = vmatprep.subr.mxu0 0.0
        %1233 = vmatpush1.msra.mxu0 0.0
        %1234 = vmatprep.subr.mxu0 0.0
        %1235 = vmatpush1.msra.mxu0 0.0
        %1236 = vmatprep.subr.mxu0 0.0
        %1237 = vmatpush1.msra.mxu0 0.0
        %1238 = vmatprep.subr.mxu0 0.0
        %1239 = vmatpush1.msra.mxu0 %v1212
        %1240 = vmatprep.subr.mxu0 0.0
        %1241 = vmatpush1.msra.mxu0 %v1159
        %1242 = vmatprep.subr.mxu0 0.0
        %1243 = vmatpush1.msra.mxu0 %v1158
        %1244 = vmatprep.subr.mxu0 0.0
        %1245 = vmatpush1.msra.mxu0 %v1157
        %1246 = vmatprep.subr.mxu0 0.0
        %1247 = vmatpush2.msra.mxu0 0.0
        %1248 = vmatprep.subr.mxu0 0.0
        %1249 = vmatpush2.msra.mxu0 0.0
        %1250 = vmatprep.subr.mxu0 0.0
        %1251 = vmatpush2.msra.mxu0 0.0
        %1252 = vmatprep.subr.mxu0 0.0
        %1253 = vmatpush2.msra.mxu0 0.0
        %1254 = vmatprep.subr.mxu0 0.0
        %1255 = vmatpush2.msra.mxu0 0.0
        %1256 = vmatprep.subr.mxu0 0.0
        %1257 = vmatpush2.msra.mxu0 0.0
        %1258 = vmatprep.subr.mxu0 0.0
        %1259 = vmatpush2.msra.mxu0 0.0
        %1260 = vmatprep.subr.mxu0 0.0
        %1261 = vmatpush2.msra.mxu0 0.0
        %1262 = vmatprep.subr.mxu0 0.0
        %1263 = vmatpush2.msra.mxu0 0.0
        %1264 = vmatprep.subr.mxu0 0.0
        %1265 = vmatpush2.msra.mxu0 0.0
        %1266 = vmatprep.subr.mxu0 0.0
        %1267 = vmatpush2.msra.mxu0 0.0
        %1268 = vmatprep.subr.mxu0 0.0
        %1269 = vmatpush2.msra.mxu0 0.0
        %1270 = vmatprep.subr.mxu0 0.0
        %1271 = vmatpush2.msra.mxu0 0.0
        %1272 = vmatprep.subr.mxu0 0.0
        %1273 = vmatpush2.msra.mxu0 0.0
        %1274 = vmatprep.subr.mxu0 0.0
        %1275 = vmatpush2.msra.mxu0 0.0
        %1276 = vmatprep.subr.mxu0 0.0
        %1277 = vmatpush2.msra.mxu0 0.0
        %1278 = vmatprep.mubr.f32.mxu0 0.0
        %1279 = vmatmul.mubr.f32.gmra.mxu0 %v1163
        %v1280 = vpop.f32.mrf.mxu0
        %v1281 = vadd.f32 0.0, %v1280
        %v1282 = vpop.f32.mrf.mxu0
        %1283 = vmatprep.mubr.f32.mxu0 0.0
        %1284 = vmatmul.mubr.f32.gmra.mxu0 %v1166
        %v1285 = vpop.f32.mrf.mxu0
        %v1286 = vadd.f32 0.0, %v1285
        %v1287 = vpop.f32.mrf.mxu0
        %1288 = vmatprep.mubr.f32.mxu0 0.0
        %1289 = vmatmul.mubr.f32.gmra.mxu0 %v1169
        %v1290 = vpop.f32.mrf.mxu0
        %v1291 = vadd.f32 0.0, %v1290
        %v1292 = vpop.f32.mrf.mxu0
        %1293 = vmatprep.mubr.f32.mxu0 0.0
        %1294 = vmatmul.mubr.f32.gmra.mxu0 %v1172
        %v1295 = vpop.f32.mrf.mxu0
        %v1296 = vadd.f32 0.0, %v1295
        %v1297 = vpop.f32.mrf.mxu0
        %1298 = vmatprep.mubr.f32.mxu0 0.0
        %1299 = vmatmul.mubr.f32.gmra.mxu0 %v1175
        %v1300 = vpop.f32.mrf.mxu0
        %v1301 = vadd.f32 0.0, %v1300
        %v1302 = vpop.f32.mrf.mxu0
        %1303 = vmatprep.mubr.f32.mxu0 0.0
        %1304 = vmatmul.mubr.f32.gmra.mxu0 %v1178
        %v1305 = vpop.f32.mrf.mxu0
        %v1306 = vadd.f32 0.0, %v1305
        %v1307 = vpop.f32.mrf.mxu0
        %1308 = vmatprep.mubr.f32.mxu0 0.0
        %1309 = vmatmul.mubr.f32.gmra.mxu0 %v1181
        %v1310 = vpop.f32.mrf.mxu0
        %v1311 = vadd.f32 0.0, %v1310
        %v1312 = vpop.f32.mrf.mxu0
        %1313 = vmatprep.mubr.f32.mxu0 0.0
        %1314 = vmatmul.mubr.f32.gmra.mxu0 %v1184
        %v1315 = vpop.f32.mrf.mxu0
        %v1316 = vadd.f32 0.0, %v1315
        %v1317 = vpop.f32.mrf.mxu0
        %1318 = vmatprep.mubr.f32.mxu0 0.0
        %1319 = vmatmul.mubr.f32.gmra.mxu0 %v1187
        %v1320 = vpop.f32.mrf.mxu0
        %v1321 = vadd.f32 0.0, %v1320
        %v1322 = vpop.f32.mrf.mxu0
        %1323 = vmatprep.mubr.f32.mxu0 0.0
        %1324 = vmatmul.mubr.f32.gmra.mxu0 %v1190
        %v1325 = vpop.f32.mrf.mxu0
        %v1326 = vadd.f32 0.0, %v1325
        %v1327 = vpop.f32.mrf.mxu0
        %1328 = vmatprep.mubr.f32.mxu0 0.0
        %1329 = vmatmul.mubr.f32.gmra.mxu0 %v1193
        %v1330 = vpop.f32.mrf.mxu0
        %v1331 = vadd.f32 0.0, %v1330
        %v1332 = vpop.f32.mrf.mxu0
        %1333 = vmatprep.mubr.f32.mxu0 0.0
        %1334 = vmatmul.mubr.f32.gmra.mxu0 %v1196
        %v1335 = vpop.f32.mrf.mxu0
        %v1336 = vadd.f32 0.0, %v1335
        %v1337 = vpop.f32.mrf.mxu0
        %1338 = vmatprep.mubr.f32.mxu0 0.0
        %1339 = vmatmul.mubr.f32.gmra.mxu0 %v1199
        %v1340 = vpop.f32.mrf.mxu0
        %v1341 = vadd.f32 0.0, %v1340
        %v1342 = vpop.f32.mrf.mxu0
        %1343 = vmatprep.mubr.f32.mxu0 0.0
        %1344 = vmatmul.mubr.f32.gmra.mxu0 %v1202
        %v1345 = vpop.f32.mrf.mxu0
        %v1346 = vadd.f32 0.0, %v1345
        %v1347 = vpop.f32.mrf.mxu0
        %1348 = vmatprep.mubr.f32.mxu0 0.0
        %1349 = vmatmul.mubr.f32.gmra.mxu0 %v1205
        %v1350 = vpop.f32.mrf.mxu0
        %v1351 = vadd.f32 0.0, %v1350
        %v1352 = vpop.f32.mrf.mxu0
        %1353 = vmatprep.mubr.f32.mxu0 0.0
        %1354 = vmatmul.mubr.f32.gmra.mxu0 %v1208
        %v1355 = vpop.f32.mrf.mxu0
        %v1356 = vadd.f32 0.0, %v1355
        %v1357 = vpop.f32.mrf.mxu0
        %1358 = vdwg.mxu0
        %v1359 = vld [vmem:[%s557] sm:$0xff]
        %v1360 = vld [vmem:[%s557 + $0x8] sm:$0xff]
        %v1361 = vld [vmem:[%s557 + $0x30] sm:$0xff]
        %v1362 = vld [vmem:[%s557 + $0x38] sm:$0xff]
        %v1363 = vld [vmem:[%s557 + $0x60] sm:$0xff]
        %v1364 = vld [vmem:[%s557 + $0x68] sm:$0xff]
        %v1365 = vld [vmem:[%s557 + $0x90] sm:$0xff]
        %v1366 = vld [vmem:[%s557 + $0x98] sm:$0xff]
        %v1367 = vld [vmem:[%s557 + $0xc0] sm:$0xff]
        %v1368 = vld [vmem:[%s557 + $0xc8] sm:$0xff]
        %v1369 = vld [vmem:[%s557 + $0xf0] sm:$0xff]
        %v1370 = vld [vmem:[%s557 + $0xf8] sm:$0xff]
        %v1371 = vld [vmem:[%s557 + $0x120] sm:$0xff]
        %v1372 = vld [vmem:[%s557 + $0x128] sm:$0xff]
        %v1373 = vld [vmem:[%s557 + $0x150] sm:$0xff]
        %v1374 = vld [vmem:[%s557 + $0x158] sm:$0xff]
        %1375 = vst.msk [vmem:[#allocation2] sm:$0xff] %vm346, %v1359
        %1376 = vst.msk [vmem:[#allocation2 + $0x8] sm:$0xff] %vm346, %v1360
        %1377 = vst.msk [vmem:[#allocation2 + $0x10] sm:$0xff] %vm346, %v1361
        %1378 = vst.msk [vmem:[#allocation2 + $0x18] sm:$0xff] %vm346, %v1362
        %1379 = vst.msk [vmem:[#allocation2 + $0x20] sm:$0xff] %vm346, %v1363
        %1380 = vst.msk [vmem:[#allocation2 + $0x28] sm:$0xff] %vm346, %v1364
        %1381 = vst.msk [vmem:[#allocation2 + $0x30] sm:$0xff] %vm346, %v1365
        %1382 = vst.msk [vmem:[#allocation2 + $0x38] sm:$0xff] %vm346, %v1366
        %1383 = vst.msk [vmem:[#allocation2 + $0x40] sm:$0xff] %vm346, %v1367
        %1384 = vst.msk [vmem:[#allocation2 + $0x48] sm:$0xff] %vm346, %v1368
        %1385 = vst.msk [vmem:[#allocation2 + $0x50] sm:$0xff] %vm346, %v1369
        %1386 = vst.msk [vmem:[#allocation2 + $0x58] sm:$0xff] %vm346, %v1370
        %1387 = vst.msk [vmem:[#allocation2 + $0x60] sm:$0xff] %vm346, %v1371
        %1388 = vst.msk [vmem:[#allocation2 + $0x68] sm:$0xff] %vm346, %v1372
        %1389 = vst.msk [vmem:[#allocation2 + $0x70] sm:$0xff] %vm346, %v1373
        %1390 = vst.msk [vmem:[#allocation2 + $0x78] sm:$0xff] %vm346, %v1374
        %v1391 = vld [vmem:[%s557 + $0x1] sm:$0xff]
        %v1392 = vld [vmem:[%s557 + $0x9] sm:$0xff]
        %v1393 = vld [vmem:[%s557 + $0x31] sm:$0xff]
        %v1394 = vld [vmem:[%s557 + $0x39] sm:$0xff]
        %v1395 = vld [vmem:[%s557 + $0x61] sm:$0xff]
        %v1396 = vld [vmem:[%s557 + $0x69] sm:$0xff]
        %v1397 = vld [vmem:[%s557 + $0x91] sm:$0xff]
        %v1398 = vld [vmem:[%s557 + $0x99] sm:$0xff]
        %v1399 = vld [vmem:[%s557 + $0xc1] sm:$0xff]
        %v1400 = vld [vmem:[%s557 + $0xc9] sm:$0xff]
        %v1401 = vld [vmem:[%s557 + $0xf1] sm:$0xff]
        %v1402 = vld [vmem:[%s557 + $0xf9] sm:$0xff]
        %v1403 = vld [vmem:[%s557 + $0x121] sm:$0xff]
        %v1404 = vld [vmem:[%s557 + $0x129] sm:$0xff]
        %v1405 = vld [vmem:[%s557 + $0x151] sm:$0xff]
        %v1406 = vld [vmem:[%s557 + $0x159] sm:$0xff]
        %1423 = vrot.lane.b32.xlu0 %v1391, 3
        %v1424 = vpop.permute.xlu0 %1423
        %1425 = vrot.lane.b32.xlu0 %v1392, 3
        %v1426 = vpop.permute.xlu0 %1425
        %1427 = vrot.lane.b32.xlu0 %v1393, 3
        %v1428 = vpop.permute.xlu0 %1427
        %1429 = vrot.lane.b32.xlu0 %v1394, 3
        %v1430 = vpop.permute.xlu0 %1429
        %1431 = vrot.lane.b32.xlu0 %v1395, 3
        %v1432 = vpop.permute.xlu0 %1431
        %1433 = vrot.lane.b32.xlu0 %v1396, 3
        %v1434 = vpop.permute.xlu0 %1433
        %1435 = vrot.lane.b32.xlu0 %v1397, 3
        %v1436 = vpop.permute.xlu0 %1435
        %1437 = vrot.lane.b32.xlu0 %v1398, 3
        %v1438 = vpop.permute.xlu0 %1437
        %1439 = vrot.lane.b32.xlu0 %v1399, 3
        %v1440 = vpop.permute.xlu0 %1439
        %1441 = vrot.lane.b32.xlu0 %v1400, 3
        %v1442 = vpop.permute.xlu0 %1441
        %1443 = vrot.lane.b32.xlu0 %v1401, 3
        %v1444 = vpop.permute.xlu0 %1443
        %1445 = vrot.lane.b32.xlu0 %v1402, 3
        %v1446 = vpop.permute.xlu0 %1445
        %1447 = vrot.lane.b32.xlu0 %v1403, 3
        %v1448 = vpop.permute.xlu0 %1447
        %1449 = vrot.lane.b32.xlu0 %v1404, 3
        %v1450 = vpop.permute.xlu0 %1449
        %1451 = vrot.lane.b32.xlu0 %v1405, 3
        %v1452 = vpop.permute.xlu0 %1451
        %1453 = vrot.lane.b32.xlu0 %v1406, 3
        %v1454 = vpop.permute.xlu0 %1453
        %1471 = vst.msk [vmem:[#allocation2] sm:$0xff] %vm443, %v1424
        %1472 = vst.msk [vmem:[#allocation2 + $0x8] sm:$0xff] %vm443, %v1426
        %1473 = vst.msk [vmem:[#allocation2 + $0x10] sm:$0xff] %vm443, %v1428
        %1474 = vst.msk [vmem:[#allocation2 + $0x18] sm:$0xff] %vm443, %v1430
        %1475 = vst.msk [vmem:[#allocation2 + $0x20] sm:$0xff] %vm443, %v1432
        %1476 = vst.msk [vmem:[#allocation2 + $0x28] sm:$0xff] %vm443, %v1434
        %1477 = vst.msk [vmem:[#allocation2 + $0x30] sm:$0xff] %vm443, %v1436
        %1478 = vst.msk [vmem:[#allocation2 + $0x38] sm:$0xff] %vm443, %v1438
        %1479 = vst.msk [vmem:[#allocation2 + $0x40] sm:$0xff] %vm443, %v1440
        %1480 = vst.msk [vmem:[#allocation2 + $0x48] sm:$0xff] %vm443, %v1442
        %1481 = vst.msk [vmem:[#allocation2 + $0x50] sm:$0xff] %vm443, %v1444
        %1482 = vst.msk [vmem:[#allocation2 + $0x58] sm:$0xff] %vm443, %v1446
        %1483 = vst.msk [vmem:[#allocation2 + $0x60] sm:$0xff] %vm443, %v1448
        %1484 = vst.msk [vmem:[#allocation2 + $0x68] sm:$0xff] %vm443, %v1450
        %1485 = vst.msk [vmem:[#allocation2 + $0x70] sm:$0xff] %vm443, %v1452
        %1486 = vst.msk [vmem:[#allocation2 + $0x78] sm:$0xff] %vm443, %v1454
        %v1487 = vld [vmem:[%s557 + $0x2] sm:$0xff]
        %v1488 = vld [vmem:[%s557 + $0xa] sm:$0xff]
        %v1489 = vld [vmem:[%s557 + $0x32] sm:$0xff]
        %v1490 = vld [vmem:[%s557 + $0x3a] sm:$0xff]
        %v1491 = vld [vmem:[%s557 + $0x62] sm:$0xff]
        %v1492 = vld [vmem:[%s557 + $0x6a] sm:$0xff]
        %v1493 = vld [vmem:[%s557 + $0x92] sm:$0xff]
        %v1494 = vld [vmem:[%s557 + $0x9a] sm:$0xff]
        %v1495 = vld [vmem:[%s557 + $0xc2] sm:$0xff]
        %v1496 = vld [vmem:[%s557 + $0xca] sm:$0xff]
        %v1497 = vld [vmem:[%s557 + $0xf2] sm:$0xff]
        %v1498 = vld [vmem:[%s557 + $0xfa] sm:$0xff]
        %v1499 = vld [vmem:[%s557 + $0x122] sm:$0xff]
        %v1500 = vld [vmem:[%s557 + $0x12a] sm:$0xff]
        %v1501 = vld [vmem:[%s557 + $0x152] sm:$0xff]
        %v1502 = vld [vmem:[%s557 + $0x15a] sm:$0xff]
        %1519 = vrot.lane.b32.xlu0 %v1487, 6
        %v1520 = vpop.permute.xlu0 %1519
        %1521 = vrot.lane.b32.xlu0 %v1488, 6
        %v1522 = vpop.permute.xlu0 %1521
        %1523 = vrot.lane.b32.xlu0 %v1489, 6
        %v1524 = vpop.permute.xlu0 %1523
        %1525 = vrot.lane.b32.xlu0 %v1490, 6
        %v1526 = vpop.permute.xlu0 %1525
        %1527 = vrot.lane.b32.xlu0 %v1491, 6
        %v1528 = vpop.permute.xlu0 %1527
        %1529 = vrot.lane.b32.xlu0 %v1492, 6
        %v1530 = vpop.permute.xlu0 %1529
        %1531 = vrot.lane.b32.xlu0 %v1493, 6
        %v1532 = vpop.permute.xlu0 %1531
        %1533 = vrot.lane.b32.xlu0 %v1494, 6
        %v1534 = vpop.permute.xlu0 %1533
        %1535 = vrot.lane.b32.xlu0 %v1495, 6
        %v1536 = vpop.permute.xlu0 %1535
        %1537 = vrot.lane.b32.xlu0 %v1496, 6
        %v1538 = vpop.permute.xlu0 %1537
        %1539 = vrot.lane.b32.xlu0 %v1497, 6
        %v1540 = vpop.permute.xlu0 %1539
        %1541 = vrot.lane.b32.xlu0 %v1498, 6
        %v1542 = vpop.permute.xlu0 %1541
        %1543 = vrot.lane.b32.xlu0 %v1499, 6
        %v1544 = vpop.permute.xlu0 %1543
        %1545 = vrot.lane.b32.xlu0 %v1500, 6
        %v1546 = vpop.permute.xlu0 %1545
        %1547 = vrot.lane.b32.xlu0 %v1501, 6
        %v1548 = vpop.permute.xlu0 %1547
        %1549 = vrot.lane.b32.xlu0 %v1502, 6
        %v1550 = vpop.permute.xlu0 %1549
        %1567 = vst.msk [vmem:[#allocation2] sm:$0xff] %vm540, %v1520
        %1568 = vst.msk [vmem:[#allocation2 + $0x8] sm:$0xff] %vm540, %v1522
        %1569 = vst.msk [vmem:[#allocation2 + $0x10] sm:$0xff] %vm540, %v1524
        %1570 = vst.msk [vmem:[#allocation2 + $0x18] sm:$0xff] %vm540, %v1526
        %1571 = vst.msk [vmem:[#allocation2 + $0x20] sm:$0xff] %vm540, %v1528
        %1572 = vst.msk [vmem:[#allocation2 + $0x28] sm:$0xff] %vm540, %v1530
        %1573 = vst.msk [vmem:[#allocation2 + $0x30] sm:$0xff] %vm540, %v1532
        %1574 = vst.msk [vmem:[#allocation2 + $0x38] sm:$0xff] %vm540, %v1534
        %1575 = vst.msk [vmem:[#allocation2 + $0x40] sm:$0xff] %vm540, %v1536
        %1576 = vst.msk [vmem:[#allocation2 + $0x48] sm:$0xff] %vm540, %v1538
        %1577 = vst.msk [vmem:[#allocation2 + $0x50] sm:$0xff] %vm540, %v1540
        %1578 = vst.msk [vmem:[#allocation2 + $0x58] sm:$0xff] %vm540, %v1542
        %1579 = vst.msk [vmem:[#allocation2 + $0x60] sm:$0xff] %vm540, %v1544
        %1580 = vst.msk [vmem:[#allocation2 + $0x68] sm:$0xff] %vm540, %v1546
        %1581 = vst.msk [vmem:[#allocation2 + $0x70] sm:$0xff] %vm540, %v1548
        %1582 = vst.msk [vmem:[#allocation2 + $0x78] sm:$0xff] %vm540, %v1550
        %v1583 = vld [vmem:[%s849] sm:$0xff]
        %v1584 = vld [vmem:[%s849 + $0x8] sm:$0xff]
        %v1585 = vld [vmem:[%s849 + $0x30] sm:$0xff]
        %v1586 = vld [vmem:[%s849 + $0x38] sm:$0xff]
        %v1587 = vld [vmem:[%s849 + $0x60] sm:$0xff]
        %v1588 = vld [vmem:[%s849 + $0x68] sm:$0xff]
        %v1589 = vld [vmem:[%s849 + $0x90] sm:$0xff]
        %v1590 = vld [vmem:[%s849 + $0x98] sm:$0xff]
        %v1591 = vld [vmem:[%s849 + $0xc0] sm:$0xff]
        %v1592 = vld [vmem:[%s849 + $0xc8] sm:$0xff]
        %v1593 = vld [vmem:[%s849 + $0xf0] sm:$0xff]
        %v1594 = vld [vmem:[%s849 + $0xf8] sm:$0xff]
        %v1595 = vld [vmem:[%s849 + $0x120] sm:$0xff]
        %v1596 = vld [vmem:[%s849 + $0x128] sm:$0xff]
        %v1597 = vld [vmem:[%s849 + $0x150] sm:$0xff]
        %v1598 = vld [vmem:[%s849 + $0x158] sm:$0xff]
        %1615 = vrot.lane.b32.xlu0 %v1583, 9
        %v1616 = vpop.permute.xlu0 %1615
        %1617 = vrot.lane.b32.xlu0 %v1584, 9
        %v1618 = vpop.permute.xlu0 %1617
        %1619 = vrot.lane.b32.xlu0 %v1585, 9
        %v1620 = vpop.permute.xlu0 %1619
        %1621 = vrot.lane.b32.xlu0 %v1586, 9
        %v1622 = vpop.permute.xlu0 %1621
        %1623 = vrot.lane.b32.xlu0 %v1587, 9
        %v1624 = vpop.permute.xlu0 %1623
        %1625 = vrot.lane.b32.xlu0 %v1588, 9
        %v1626 = vpop.permute.xlu0 %1625
        %1627 = vrot.lane.b32.xlu0 %v1589, 9
        %v1628 = vpop.permute.xlu0 %1627
        %1629 = vrot.lane.b32.xlu0 %v1590, 9
        %v1630 = vpop.permute.xlu0 %1629
        %1631 = vrot.lane.b32.xlu0 %v1591, 9
        %v1632 = vpop.permute.xlu0 %1631
        %1633 = vrot.lane.b32.xlu0 %v1592, 9
        %v1634 = vpop.permute.xlu0 %1633
        %1635 = vrot.lane.b32.xlu0 %v1593, 9
        %v1636 = vpop.permute.xlu0 %1635
        %1637 = vrot.lane.b32.xlu0 %v1594, 9
        %v1638 = vpop.permute.xlu0 %1637
        %1639 = vrot.lane.b32.xlu0 %v1595, 9
        %v1640 = vpop.permute.xlu0 %1639
        %1641 = vrot.lane.b32.xlu0 %v1596, 9
        %v1642 = vpop.permute.xlu0 %1641
        %1643 = vrot.lane.b32.xlu0 %v1597, 9
        %v1644 = vpop.permute.xlu0 %1643
        %1645 = vrot.lane.b32.xlu0 %v1598, 9
        %v1646 = vpop.permute.xlu0 %1645
        %1663 = vst.msk [vmem:[#allocation2] sm:$0xff] %vm638, %v1616
        %1664 = vst.msk [vmem:[#allocation2 + $0x8] sm:$0xff] %vm638, %v1618
        %1665 = vst.msk [vmem:[#allocation2 + $0x10] sm:$0xff] %vm638, %v1620
        %1666 = vst.msk [vmem:[#allocation2 + $0x18] sm:$0xff] %vm638, %v1622
        %1667 = vst.msk [vmem:[#allocation2 + $0x20] sm:$0xff] %vm638, %v1624
        %1668 = vst.msk [vmem:[#allocation2 + $0x28] sm:$0xff] %vm638, %v1626
        %1669 = vst.msk [vmem:[#allocation2 + $0x30] sm:$0xff] %vm638, %v1628
        %1670 = vst.msk [vmem:[#allocation2 + $0x38] sm:$0xff] %vm638, %v1630
        %1671 = vst.msk [vmem:[#allocation2 + $0x40] sm:$0xff] %vm638, %v1632
        %1672 = vst.msk [vmem:[#allocation2 + $0x48] sm:$0xff] %vm638, %v1634
        %1673 = vst.msk [vmem:[#allocation2 + $0x50] sm:$0xff] %vm638, %v1636
        %1674 = vst.msk [vmem:[#allocation2 + $0x58] sm:$0xff] %vm638, %v1638
        %1675 = vst.msk [vmem:[#allocation2 + $0x60] sm:$0xff] %vm638, %v1640
        %1676 = vst.msk [vmem:[#allocation2 + $0x68] sm:$0xff] %vm638, %v1642
        %1677 = vst.msk [vmem:[#allocation2 + $0x70] sm:$0xff] %vm638, %v1644
        %1678 = vst.msk [vmem:[#allocation2 + $0x78] sm:$0xff] %vm638, %v1646
        %v1679 = vld [vmem:[%s849 + $0x1] sm:$0xff]
        %v1680 = vld [vmem:[%s849 + $0x9] sm:$0xff]
        %v1681 = vld [vmem:[%s849 + $0x31] sm:$0xff]
        %v1682 = vld [vmem:[%s849 + $0x39] sm:$0xff]
        %v1683 = vld [vmem:[%s849 + $0x61] sm:$0xff]
        %v1684 = vld [vmem:[%s849 + $0x69] sm:$0xff]
        %v1685 = vld [vmem:[%s849 + $0x91] sm:$0xff]
        %v1686 = vld [vmem:[%s849 + $0x99] sm:$0xff]
        %v1687 = vld [vmem:[%s849 + $0xc1] sm:$0xff]
        %v1688 = vld [vmem:[%s849 + $0xc9] sm:$0xff]
        %v1689 = vld [vmem:[%s849 + $0xf1] sm:$0xff]
        %v1690 = vld [vmem:[%s849 + $0xf9] sm:$0xff]
        %v1691 = vld [vmem:[%s849 + $0x121] sm:$0xff]
        %v1692 = vld [vmem:[%s849 + $0x129] sm:$0xff]
        %v1693 = vld [vmem:[%s849 + $0x151] sm:$0xff]
        %v1694 = vld [vmem:[%s849 + $0x159] sm:$0xff]
        %1711 = vrot.lane.b32.xlu0 %v1679, 12
        %v1712 = vpop.permute.xlu0 %1711
        %1713 = vrot.lane.b32.xlu0 %v1680, 12
        %v1714 = vpop.permute.xlu0 %1713
        %1715 = vrot.lane.b32.xlu0 %v1681, 12
        %v1716 = vpop.permute.xlu0 %1715
        %1717 = vrot.lane.b32.xlu0 %v1682, 12
        %v1718 = vpop.permute.xlu0 %1717
        %1719 = vrot.lane.b32.xlu0 %v1683, 12
        %v1720 = vpop.permute.xlu0 %1719
        %1721 = vrot.lane.b32.xlu0 %v1684, 12
        %v1722 = vpop.permute.xlu0 %1721
        %1723 = vrot.lane.b32.xlu0 %v1685, 12
        %v1724 = vpop.permute.xlu0 %1723
        %1725 = vrot.lane.b32.xlu0 %v1686, 12
        %v1726 = vpop.permute.xlu0 %1725
        %1727 = vrot.lane.b32.xlu0 %v1687, 12
        %v1728 = vpop.permute.xlu0 %1727
        %1729 = vrot.lane.b32.xlu0 %v1688, 12
        %v1730 = vpop.permute.xlu0 %1729
        %1731 = vrot.lane.b32.xlu0 %v1689, 12
        %v1732 = vpop.permute.xlu0 %1731
        %1733 = vrot.lane.b32.xlu0 %v1690, 12
        %v1734 = vpop.permute.xlu0 %1733
        %1735 = vrot.lane.b32.xlu0 %v1691, 12
        %v1736 = vpop.permute.xlu0 %1735
        %1737 = vrot.lane.b32.xlu0 %v1692, 12
        %v1738 = vpop.permute.xlu0 %1737
        %1739 = vrot.lane.b32.xlu0 %v1693, 12
        %v1740 = vpop.permute.xlu0 %1739
        %1741 = vrot.lane.b32.xlu0 %v1694, 12
        %v1742 = vpop.permute.xlu0 %1741
        %1759 = vst.msk [vmem:[#allocation2] sm:$0xff] %vm735, %v1712
        %1760 = vst.msk [vmem:[#allocation2 + $0x8] sm:$0xff] %vm735, %v1714
        %1761 = vst.msk [vmem:[#allocation2 + $0x10] sm:$0xff] %vm735, %v1716
        %1762 = vst.msk [vmem:[#allocation2 + $0x18] sm:$0xff] %vm735, %v1718
        %1763 = vst.msk [vmem:[#allocation2 + $0x20] sm:$0xff] %vm735, %v1720
        %1764 = vst.msk [vmem:[#allocation2 + $0x28] sm:$0xff] %vm735, %v1722
        %1765 = vst.msk [vmem:[#allocation2 + $0x30] sm:$0xff] %vm735, %v1724
        %1766 = vst.msk [vmem:[#allocation2 + $0x38] sm:$0xff] %vm735, %v1726
        %1767 = vst.msk [vmem:[#allocation2 + $0x40] sm:$0xff] %vm735, %v1728
        %1768 = vst.msk [vmem:[#allocation2 + $0x48] sm:$0xff] %vm735, %v1730
        %1769 = vst.msk [vmem:[#allocation2 + $0x50] sm:$0xff] %vm735, %v1732
        %1770 = vst.msk [vmem:[#allocation2 + $0x58] sm:$0xff] %vm735, %v1734
        %1771 = vst.msk [vmem:[#allocation2 + $0x60] sm:$0xff] %vm735, %v1736
        %1772 = vst.msk [vmem:[#allocation2 + $0x68] sm:$0xff] %vm735, %v1738
        %1773 = vst.msk [vmem:[#allocation2 + $0x70] sm:$0xff] %vm735, %v1740
        %1774 = vst.msk [vmem:[#allocation2 + $0x78] sm:$0xff] %vm735, %v1742
        %v1775 = vld [vmem:[%s849 + $0x2] sm:$0xff]
        %v1776 = vld [vmem:[%s849 + $0xa] sm:$0xff]
        %v1777 = vld [vmem:[%s849 + $0x32] sm:$0xff]
        %v1778 = vld [vmem:[%s849 + $0x3a] sm:$0xff]
        %v1779 = vld [vmem:[%s849 + $0x62] sm:$0xff]
        %v1780 = vld [vmem:[%s849 + $0x6a] sm:$0xff]
        %v1781 = vld [vmem:[%s849 + $0x92] sm:$0xff]
        %v1782 = vld [vmem:[%s849 + $0x9a] sm:$0xff]
        %v1783 = vld [vmem:[%s849 + $0xc2] sm:$0xff]
        %v1784 = vld [vmem:[%s849 + $0xca] sm:$0xff]
        %v1785 = vld [vmem:[%s849 + $0xf2] sm:$0xff]
        %v1786 = vld [vmem:[%s849 + $0xfa] sm:$0xff]
        %v1787 = vld [vmem:[%s849 + $0x122] sm:$0xff]
        %v1788 = vld [vmem:[%s849 + $0x12a] sm:$0xff]
        %v1789 = vld [vmem:[%s849 + $0x152] sm:$0xff]
        %v1790 = vld [vmem:[%s849 + $0x15a] sm:$0xff]
        %1807 = vrot.lane.b32.xlu0 %v1775, 15
        %v1808 = vpop.permute.xlu0 %1807
        %1809 = vrot.lane.b32.xlu0 %v1776, 15
        %v1810 = vpop.permute.xlu0 %1809
        %1811 = vrot.lane.b32.xlu0 %v1777, 15
        %v1812 = vpop.permute.xlu0 %1811
        %1813 = vrot.lane.b32.xlu0 %v1778, 15
        %v1814 = vpop.permute.xlu0 %1813
        %1815 = vrot.lane.b32.xlu0 %v1779, 15
        %v1816 = vpop.permute.xlu0 %1815
        %1817 = vrot.lane.b32.xlu0 %v1780, 15
        %v1818 = vpop.permute.xlu0 %1817
        %1819 = vrot.lane.b32.xlu0 %v1781, 15
        %v1820 = vpop.permute.xlu0 %1819
        %1821 = vrot.lane.b32.xlu0 %v1782, 15
        %v1822 = vpop.permute.xlu0 %1821
        %1823 = vrot.lane.b32.xlu0 %v1783, 15
        %v1824 = vpop.permute.xlu0 %1823
        %1825 = vrot.lane.b32.xlu0 %v1784, 15
        %v1826 = vpop.permute.xlu0 %1825
        %1827 = vrot.lane.b32.xlu0 %v1785, 15
        %v1828 = vpop.permute.xlu0 %1827
        %1829 = vrot.lane.b32.xlu0 %v1786, 15
        %v1830 = vpop.permute.xlu0 %1829
        %1831 = vrot.lane.b32.xlu0 %v1787, 15
        %v1832 = vpop.permute.xlu0 %1831
        %1833 = vrot.lane.b32.xlu0 %v1788, 15
        %v1834 = vpop.permute.xlu0 %1833
        %1835 = vrot.lane.b32.xlu0 %v1789, 15
        %v1836 = vpop.permute.xlu0 %1835
        %1837 = vrot.lane.b32.xlu0 %v1790, 15
        %v1838 = vpop.permute.xlu0 %1837
        %1855 = vst.msk [vmem:[#allocation2] sm:$0xff] %vm832, %v1808
        %1856 = vst.msk [vmem:[#allocation2 + $0x8] sm:$0xff] %vm832, %v1810
        %1857 = vst.msk [vmem:[#allocation2 + $0x10] sm:$0xff] %vm832, %v1812
        %1858 = vst.msk [vmem:[#allocation2 + $0x18] sm:$0xff] %vm832, %v1814
        %1859 = vst.msk [vmem:[#allocation2 + $0x20] sm:$0xff] %vm832, %v1816
        %1860 = vst.msk [vmem:[#allocation2 + $0x28] sm:$0xff] %vm832, %v1818
        %1861 = vst.msk [vmem:[#allocation2 + $0x30] sm:$0xff] %vm832, %v1820
        %1862 = vst.msk [vmem:[#allocation2 + $0x38] sm:$0xff] %vm832, %v1822
        %1863 = vst.msk [vmem:[#allocation2 + $0x40] sm:$0xff] %vm832, %v1824
        %1864 = vst.msk [vmem:[#allocation2 + $0x48] sm:$0xff] %vm832, %v1826
        %1865 = vst.msk [vmem:[#allocation2 + $0x50] sm:$0xff] %vm832, %v1828
        %1866 = vst.msk [vmem:[#allocation2 + $0x58] sm:$0xff] %vm832, %v1830
        %1867 = vst.msk [vmem:[#allocation2 + $0x60] sm:$0xff] %vm832, %v1832
        %1868 = vst.msk [vmem:[#allocation2 + $0x68] sm:$0xff] %vm832, %v1834
        %1869 = vst.msk [vmem:[#allocation2 + $0x70] sm:$0xff] %vm832, %v1836
        %1870 = vst.msk [vmem:[#allocation2 + $0x78] sm:$0xff] %vm832, %v1838
        %s1871 = scalar_lea.vmem %s329, 72
        %v1872 = vld [vmem:[%s1871] sm:$0xff]
        %v1873 = vld [vmem:[%s1871 + $0x8] sm:$0xff]
        %v1874 = vld [vmem:[%s1871 + $0x30] sm:$0xff]
        %v1875 = vld [vmem:[%s1871 + $0x38] sm:$0xff]
        %v1876 = vld [vmem:[%s1871 + $0x60] sm:$0xff]
        %v1877 = vld [vmem:[%s1871 + $0x68] sm:$0xff]
        %v1878 = vld [vmem:[%s1871 + $0x90] sm:$0xff]
        %v1879 = vld [vmem:[%s1871 + $0x98] sm:$0xff]
        %v1880 = vld [vmem:[%s1871 + $0xc0] sm:$0xff]
        %v1881 = vld [vmem:[%s1871 + $0xc8] sm:$0xff]
        %v1882 = vld [vmem:[%s1871 + $0xf0] sm:$0xff]
        %v1883 = vld [vmem:[%s1871 + $0xf8] sm:$0xff]
        %v1884 = vld [vmem:[%s1871 + $0x120] sm:$0xff]
        %v1885 = vld [vmem:[%s1871 + $0x128] sm:$0xff]
        %v1886 = vld [vmem:[%s1871 + $0x150] sm:$0xff]
        %v1887 = vld [vmem:[%s1871 + $0x158] sm:$0xff]
        %1904 = vrot.lane.b32.xlu0 %v1872, 18
        %v1905 = vpop.permute.xlu0 %1904
        %1906 = vrot.lane.b32.xlu0 %v1873, 18
        %v1907 = vpop.permute.xlu0 %1906
        %1908 = vrot.lane.b32.xlu0 %v1874, 18
        %v1909 = vpop.permute.xlu0 %1908
        %1910 = vrot.lane.b32.xlu0 %v1875, 18
        %v1911 = vpop.permute.xlu0 %1910
        %1912 = vrot.lane.b32.xlu0 %v1876, 18
        %v1913 = vpop.permute.xlu0 %1912
        %1914 = vrot.lane.b32.xlu0 %v1877, 18
        %v1915 = vpop.permute.xlu0 %1914
        %1916 = vrot.lane.b32.xlu0 %v1878, 18
        %v1917 = vpop.permute.xlu0 %1916
        %1918 = vrot.lane.b32.xlu0 %v1879, 18
        %v1919 = vpop.permute.xlu0 %1918
        %1920 = vrot.lane.b32.xlu0 %v1880, 18
        %v1921 = vpop.permute.xlu0 %1920
        %1922 = vrot.lane.b32.xlu0 %v1881, 18
        %v1923 = vpop.permute.xlu0 %1922
        %1924 = vrot.lane.b32.xlu0 %v1882, 18
        %v1925 = vpop.permute.xlu0 %1924
        %1926 = vrot.lane.b32.xlu0 %v1883, 18
        %v1927 = vpop.permute.xlu0 %1926
        %1928 = vrot.lane.b32.xlu0 %v1884, 18
        %v1929 = vpop.permute.xlu0 %1928
        %1930 = vrot.lane.b32.xlu0 %v1885, 18
        %v1931 = vpop.permute.xlu0 %1930
        %1932 = vrot.lane.b32.xlu0 %v1886, 18
        %v1933 = vpop.permute.xlu0 %1932
        %1934 = vrot.lane.b32.xlu0 %v1887, 18
        %v1935 = vpop.permute.xlu0 %1934
        %1952 = vst.msk [vmem:[#allocation2] sm:$0xff] %vm930, %v1905
        %1953 = vst.msk [vmem:[#allocation2 + $0x8] sm:$0xff] %vm930, %v1907
        %1954 = vst.msk [vmem:[#allocation2 + $0x10] sm:$0xff] %vm930, %v1909
        %1955 = vst.msk [vmem:[#allocation2 + $0x18] sm:$0xff] %vm930, %v1911
        %1956 = vst.msk [vmem:[#allocation2 + $0x20] sm:$0xff] %vm930, %v1913
        %1957 = vst.msk [vmem:[#allocation2 + $0x28] sm:$0xff] %vm930, %v1915
        %1958 = vst.msk [vmem:[#allocation2 + $0x30] sm:$0xff] %vm930, %v1917
        %1959 = vst.msk [vmem:[#allocation2 + $0x38] sm:$0xff] %vm930, %v1919
        %1960 = vst.msk [vmem:[#allocation2 + $0x40] sm:$0xff] %vm930, %v1921
        %1961 = vst.msk [vmem:[#allocation2 + $0x48] sm:$0xff] %vm930, %v1923
        %1962 = vst.msk [vmem:[#allocation2 + $0x50] sm:$0xff] %vm930, %v1925
        %1963 = vst.msk [vmem:[#allocation2 + $0x58] sm:$0xff] %vm930, %v1927
        %1964 = vst.msk [vmem:[#allocation2 + $0x60] sm:$0xff] %vm930, %v1929
        %1965 = vst.msk [vmem:[#allocation2 + $0x68] sm:$0xff] %vm930, %v1931
        %1966 = vst.msk [vmem:[#allocation2 + $0x70] sm:$0xff] %vm930, %v1933
        %1967 = vst.msk [vmem:[#allocation2 + $0x78] sm:$0xff] %vm930, %v1935
        %v1968 = vld [vmem:[%s1871 + $0x1] sm:$0xff]
        %v1969 = vld [vmem:[%s1871 + $0x9] sm:$0xff]
        %v1970 = vld [vmem:[%s1871 + $0x31] sm:$0xff]
        %v1971 = vld [vmem:[%s1871 + $0x39] sm:$0xff]
        %v1972 = vld [vmem:[%s1871 + $0x61] sm:$0xff]
        %v1973 = vld [vmem:[%s1871 + $0x69] sm:$0xff]
        %v1974 = vld [vmem:[%s1871 + $0x91] sm:$0xff]
        %v1975 = vld [vmem:[%s1871 + $0x99] sm:$0xff]
        %v1976 = vld [vmem:[%s1871 + $0xc1] sm:$0xff]
        %v1977 = vld [vmem:[%s1871 + $0xc9] sm:$0xff]
        %v1978 = vld [vmem:[%s1871 + $0xf1] sm:$0xff]
        %v1979 = vld [vmem:[%s1871 + $0xf9] sm:$0xff]
        %v1980 = vld [vmem:[%s1871 + $0x121] sm:$0xff]
        %v1981 = vld [vmem:[%s1871 + $0x129] sm:$0xff]
        %v1982 = vld [vmem:[%s1871 + $0x151] sm:$0xff]
        %v1983 = vld [vmem:[%s1871 + $0x159] sm:$0xff]
        %2000 = vrot.lane.b32.xlu0 %v1968, 21
        %v2001 = vpop.permute.xlu0 %2000
        %2002 = vrot.lane.b32.xlu0 %v1969, 21
        %v2003 = vpop.permute.xlu0 %2002
        %2004 = vrot.lane.b32.xlu0 %v1970, 21
        %v2005 = vpop.permute.xlu0 %2004
        %2006 = vrot.lane.b32.xlu0 %v1971, 21
        %v2007 = vpop.permute.xlu0 %2006
        %2008 = vrot.lane.b32.xlu0 %v1972, 21
        %v2009 = vpop.permute.xlu0 %2008
        %2010 = vrot.lane.b32.xlu0 %v1973, 21
        %v2011 = vpop.permute.xlu0 %2010
        %2012 = vrot.lane.b32.xlu0 %v1974, 21
        %v2013 = vpop.permute.xlu0 %2012
        %2014 = vrot.lane.b32.xlu0 %v1975, 21
        %v2015 = vpop.permute.xlu0 %2014
        %2016 = vrot.lane.b32.xlu0 %v1976, 21
        %v2017 = vpop.permute.xlu0 %2016
        %2018 = vrot.lane.b32.xlu0 %v1977, 21
        %v2019 = vpop.permute.xlu0 %2018
        %2020 = vrot.lane.b32.xlu0 %v1978, 21
        %v2021 = vpop.permute.xlu0 %2020
        %2022 = vrot.lane.b32.xlu0 %v1979, 21
        %v2023 = vpop.permute.xlu0 %2022
        %2024 = vrot.lane.b32.xlu0 %v1980, 21
        %v2025 = vpop.permute.xlu0 %2024
        %2026 = vrot.lane.b32.xlu0 %v1981, 21
        %v2027 = vpop.permute.xlu0 %2026
        %2028 = vrot.lane.b32.xlu0 %v1982, 21
        %v2029 = vpop.permute.xlu0 %2028
        %2030 = vrot.lane.b32.xlu0 %v1983, 21
        %v2031 = vpop.permute.xlu0 %2030
        %2048 = vst.msk [vmem:[#allocation2] sm:$0xff] %vm1027, %v2001
        %2049 = vst.msk [vmem:[#allocation2 + $0x8] sm:$0xff] %vm1027, %v2003
        %2050 = vst.msk [vmem:[#allocation2 + $0x10] sm:$0xff] %vm1027, %v2005
        %2051 = vst.msk [vmem:[#allocation2 + $0x18] sm:$0xff] %vm1027, %v2007
        %2052 = vst.msk [vmem:[#allocation2 + $0x20] sm:$0xff] %vm1027, %v2009
        %2053 = vst.msk [vmem:[#allocation2 + $0x28] sm:$0xff] %vm1027, %v2011
        %2054 = vst.msk [vmem:[#allocation2 + $0x30] sm:$0xff] %vm1027, %v2013
        %2055 = vst.msk [vmem:[#allocation2 + $0x38] sm:$0xff] %vm1027, %v2015
        %2056 = vst.msk [vmem:[#allocation2 + $0x40] sm:$0xff] %vm1027, %v2017
        %2057 = vst.msk [vmem:[#allocation2 + $0x48] sm:$0xff] %vm1027, %v2019
        %2058 = vst.msk [vmem:[#allocation2 + $0x50] sm:$0xff] %vm1027, %v2021
        %2059 = vst.msk [vmem:[#allocation2 + $0x58] sm:$0xff] %vm1027, %v2023
        %2060 = vst.msk [vmem:[#allocation2 + $0x60] sm:$0xff] %vm1027, %v2025
        %2061 = vst.msk [vmem:[#allocation2 + $0x68] sm:$0xff] %vm1027, %v2027
        %2062 = vst.msk [vmem:[#allocation2 + $0x70] sm:$0xff] %vm1027, %v2029
        %2063 = vst.msk [vmem:[#allocation2 + $0x78] sm:$0xff] %vm1027, %v2031
        %v2064 = vld [vmem:[%s1871 + $0x2] sm:$0xff]
        %v2065 = vld [vmem:[%s1871 + $0xa] sm:$0xff]
        %v2066 = vld [vmem:[%s1871 + $0x32] sm:$0xff]
        %v2067 = vld [vmem:[%s1871 + $0x3a] sm:$0xff]
        %v2068 = vld [vmem:[%s1871 + $0x62] sm:$0xff]
        %v2069 = vld [vmem:[%s1871 + $0x6a] sm:$0xff]
        %v2070 = vld [vmem:[%s1871 + $0x92] sm:$0xff]
        %v2071 = vld [vmem:[%s1871 + $0x9a] sm:$0xff]
        %v2072 = vld [vmem:[%s1871 + $0xc2] sm:$0xff]
        %v2073 = vld [vmem:[%s1871 + $0xca] sm:$0xff]
        %v2074 = vld [vmem:[%s1871 + $0xf2] sm:$0xff]
        %v2075 = vld [vmem:[%s1871 + $0xfa] sm:$0xff]
        %v2076 = vld [vmem:[%s1871 + $0x122] sm:$0xff]
        %v2077 = vld [vmem:[%s1871 + $0x12a] sm:$0xff]
        %v2078 = vld [vmem:[%s1871 + $0x152] sm:$0xff]
        %v2079 = vld [vmem:[%s1871 + $0x15a] sm:$0xff]
        %2096 = vrot.lane.b32.xlu0 %v2064, 24
        %v2097 = vpop.permute.xlu0 %2096
        %2098 = vrot.lane.b32.xlu0 %v2065, 24
        %v2099 = vpop.permute.xlu0 %2098
        %2100 = vrot.lane.b32.xlu0 %v2066, 24
        %v2101 = vpop.permute.xlu0 %2100
        %2102 = vrot.lane.b32.xlu0 %v2067, 24
        %v2103 = vpop.permute.xlu0 %2102
        %2104 = vrot.lane.b32.xlu0 %v2068, 24
        %v2105 = vpop.permute.xlu0 %2104
        %2106 = vrot.lane.b32.xlu0 %v2069, 24
        %v2107 = vpop.permute.xlu0 %2106
        %2108 = vrot.lane.b32.xlu0 %v2070, 24
        %v2109 = vpop.permute.xlu0 %2108
        %2110 = vrot.lane.b32.xlu0 %v2071, 24
        %v2111 = vpop.permute.xlu0 %2110
        %2112 = vrot.lane.b32.xlu0 %v2072, 24
        %v2113 = vpop.permute.xlu0 %2112
        %2114 = vrot.lane.b32.xlu0 %v2073, 24
        %v2115 = vpop.permute.xlu0 %2114
        %2116 = vrot.lane.b32.xlu0 %v2074, 24
        %v2117 = vpop.permute.xlu0 %2116
        %2118 = vrot.lane.b32.xlu0 %v2075, 24
        %v2119 = vpop.permute.xlu0 %2118
        %2120 = vrot.lane.b32.xlu0 %v2076, 24
        %v2121 = vpop.permute.xlu0 %2120
        %2122 = vrot.lane.b32.xlu0 %v2077, 24
        %v2123 = vpop.permute.xlu0 %2122
        %2124 = vrot.lane.b32.xlu0 %v2078, 24
        %v2125 = vpop.permute.xlu0 %2124
        %2126 = vrot.lane.b32.xlu0 %v2079, 24
        %v2127 = vpop.permute.xlu0 %2126
        %2144 = vst.msk [vmem:[#allocation2] sm:$0xff] %vm1124, %v2097
        %2145 = vst.msk [vmem:[#allocation2 + $0x8] sm:$0xff] %vm1124, %v2099
        %2146 = vst.msk [vmem:[#allocation2 + $0x10] sm:$0xff] %vm1124, %v2101
        %2147 = vst.msk [vmem:[#allocation2 + $0x18] sm:$0xff] %vm1124, %v2103
        %2148 = vst.msk [vmem:[#allocation2 + $0x20] sm:$0xff] %vm1124, %v2105
        %2149 = vst.msk [vmem:[#allocation2 + $0x28] sm:$0xff] %vm1124, %v2107
        %2150 = vst.msk [vmem:[#allocation2 + $0x30] sm:$0xff] %vm1124, %v2109
        %2151 = vst.msk [vmem:[#allocation2 + $0x38] sm:$0xff] %vm1124, %v2111
        %2152 = vst.msk [vmem:[#allocation2 + $0x40] sm:$0xff] %vm1124, %v2113
        %2153 = vst.msk [vmem:[#allocation2 + $0x48] sm:$0xff] %vm1124, %v2115
        %2154 = vst.msk [vmem:[#allocation2 + $0x50] sm:$0xff] %vm1124, %v2117
        %2155 = vst.msk [vmem:[#allocation2 + $0x58] sm:$0xff] %vm1124, %v2119
        %2156 = vst.msk [vmem:[#allocation2 + $0x60] sm:$0xff] %vm1124, %v2121
        %2157 = vst.msk [vmem:[#allocation2 + $0x68] sm:$0xff] %vm1124, %v2123
        %2158 = vst.msk [vmem:[#allocation2 + $0x70] sm:$0xff] %vm1124, %v2125
        %2159 = vst.msk [vmem:[#allocation2 + $0x78] sm:$0xff] %vm1124, %v2127
        %v2160 = vld [vmem:[#allocation2] sm:$0xff]
        %v2161 = vld [vmem:[#allocation2 + $0x8] sm:$0xff]
        %v2162 = vld [vmem:[#allocation2 + $0x10] sm:$0xff]
        %v2163 = vld [vmem:[#allocation2 + $0x18] sm:$0xff]
        %v2164 = vld [vmem:[#allocation2 + $0x20] sm:$0xff]
        %v2165 = vld [vmem:[#allocation2 + $0x28] sm:$0xff]
        %v2166 = vld [vmem:[#allocation2 + $0x30] sm:$0xff]
        %v2167 = vld [vmem:[#allocation2 + $0x38] sm:$0xff]
        %v2168 = vld [vmem:[#allocation2 + $0x40] sm:$0xff]
        %v2169 = vld [vmem:[#allocation2 + $0x48] sm:$0xff]
        %v2170 = vld [vmem:[#allocation2 + $0x50] sm:$0xff]
        %v2171 = vld [vmem:[#allocation2 + $0x58] sm:$0xff]
        %v2172 = vld [vmem:[#allocation2 + $0x60] sm:$0xff]
        %v2173 = vld [vmem:[#allocation2 + $0x68] sm:$0xff]
        %v2174 = vld [vmem:[#allocation2 + $0x70] sm:$0xff]
        %v2175 = vld [vmem:[#allocation2 + $0x78] sm:$0xff]
        %v2176 = vld [vmem:[%s1] sm:$0xff]
        %v2177 = vld [vmem:[%s1 + $0x8] sm:$0xff]
        %v2178 = vld [vmem:[%s1 + $0x10] sm:$0xff]
        %v2179 = vld [vmem:[%s1 + $0x18] sm:$0x7]
        %v2181 = vsel %vm1161, %v2160, 0
        %v2184 = vsel %vm1161, %v2161, 0
        %v2187 = vsel %vm1161, %v2162, 0
        %v2190 = vsel %vm1161, %v2163, 0
        %v2193 = vsel %vm1161, %v2164, 0
        %v2196 = vsel %vm1161, %v2165, 0
        %v2199 = vsel %vm1161, %v2166, 0
        %v2202 = vsel %vm1161, %v2167, 0
        %v2205 = vsel %vm1161, %v2168, 0
        %v2208 = vsel %vm1161, %v2169, 0
        %v2211 = vsel %vm1161, %v2170, 0
        %v2214 = vsel %vm1161, %v2171, 0
        %v2217 = vsel %vm1161, %v2172, 0
        %v2220 = vsel %vm1161, %v2173, 0
        %v2223 = vsel %vm1161, %v2174, 0
        %v2226 = vsel %vm1161, %v2175, 0
        %v2229 = vsel %vm1210, %v2179, 0
        %2231 = vmatprep.subr.mxu0 0.0
        %2232 = vmatpush1.msra.mxu0 0.0
        %2233 = vmatprep.subr.mxu0 0.0
        %2234 = vmatpush1.msra.mxu0 0.0
        %2235 = vmatprep.subr.mxu0 0.0
        %2236 = vmatpush1.msra.mxu0 0.0
        %2237 = vmatprep.subr.mxu0 0.0
        %2238 = vmatpush1.msra.mxu0 0.0
        %2239 = vmatprep.subr.mxu0 0.0
        %2240 = vmatpush1.msra.mxu0 0.0
        %2241 = vmatprep.subr.mxu0 0.0
        %2242 = vmatpush1.msra.mxu0 0.0
        %2243 = vmatprep.subr.mxu0 0.0
        %2244 = vmatpush1.msra.mxu0 0.0
        %2245 = vmatprep.subr.mxu0 0.0
        %2246 = vmatpush1.msra.mxu0 0.0
        %2247 = vmatprep.subr.mxu0 0.0
        %2248 = vmatpush1.msra.mxu0 0.0
        %2249 = vmatprep.subr.mxu0 0.0
        %2250 = vmatpush1.msra.mxu0 0.0
        %2251 = vmatprep.subr.mxu0 0.0
        %2252 = vmatpush1.msra.mxu0 0.0
        %2253 = vmatprep.subr.mxu0 0.0
        %2254 = vmatpush1.msra.mxu0 0.0
        %2255 = vmatprep.subr.mxu0 0.0
        %2256 = vmatpush1.msra.mxu0 %v2229
        %2257 = vmatprep.subr.mxu0 0.0
        %2258 = vmatpush1.msra.mxu0 %v2178
        %2259 = vmatprep.subr.mxu0 0.0
        %2260 = vmatpush1.msra.mxu0 %v2177
        %2261 = vmatprep.subr.mxu0 0.0
        %2262 = vmatpush1.msra.mxu0 %v2176
        %2263 = vmatprep.subr.mxu0 0.0
        %2264 = vmatpush2.msra.mxu0 0.0
        %2265 = vmatprep.subr.mxu0 0.0
        %2266 = vmatpush2.msra.mxu0 0.0
        %2267 = vmatprep.subr.mxu0 0.0
        %2268 = vmatpush2.msra.mxu0 0.0
        %2269 = vmatprep.subr.mxu0 0.0
        %2270 = vmatpush2.msra.mxu0 0.0
        %2271 = vmatprep.subr.mxu0 0.0
        %2272 = vmatpush2.msra.mxu0 0.0
        %2273 = vmatprep.subr.mxu0 0.0
        %2274 = vmatpush2.msra.mxu0 0.0
        %2275 = vmatprep.subr.mxu0 0.0
        %2276 = vmatpush2.msra.mxu0 0.0
        %2277 = vmatprep.subr.mxu0 0.0
        %2278 = vmatpush2.msra.mxu0 0.0
        %2279 = vmatprep.subr.mxu0 0.0
        %2280 = vmatpush2.msra.mxu0 0.0
        %2281 = vmatprep.subr.mxu0 0.0
        %2282 = vmatpush2.msra.mxu0 0.0
        %2283 = vmatprep.subr.mxu0 0.0
        %2284 = vmatpush2.msra.mxu0 0.0
        %2285 = vmatprep.subr.mxu0 0.0
        %2286 = vmatpush2.msra.mxu0 0.0
        %2287 = vmatprep.subr.mxu0 0.0
        %2288 = vmatpush2.msra.mxu0 0.0
        %2289 = vmatprep.subr.mxu0 0.0
        %2290 = vmatpush2.msra.mxu0 0.0
        %2291 = vmatprep.subr.mxu0 0.0
        %2292 = vmatpush2.msra.mxu0 0.0
        %2293 = vmatprep.subr.mxu0 0.0
        %2294 = vmatpush2.msra.mxu0 0.0
        %2295 = vmatprep.mubr.f32.mxu0 0.0
        %2296 = vmatmul.mubr.f32.gmra.mxu0 %v2181
        %v2297 = vpop.f32.mrf.mxu0
        %v2298 = vadd.f32 0.0, %v2297
        %v2299 = vpop.f32.mrf.mxu0
        %2300 = vmatprep.mubr.f32.mxu0 0.0
        %2301 = vmatmul.mubr.f32.gmra.mxu0 %v2184
        %v2302 = vpop.f32.mrf.mxu0
        %v2303 = vadd.f32 0.0, %v2302
        %v2304 = vpop.f32.mrf.mxu0
        %2305 = vmatprep.mubr.f32.mxu0 0.0
        %2306 = vmatmul.mubr.f32.gmra.mxu0 %v2187
        %v2307 = vpop.f32.mrf.mxu0
        %v2308 = vadd.f32 0.0, %v2307
        %v2309 = vpop.f32.mrf.mxu0
        %2310 = vmatprep.mubr.f32.mxu0 0.0
        %2311 = vmatmul.mubr.f32.gmra.mxu0 %v2190
        %v2312 = vpop.f32.mrf.mxu0
        %v2313 = vadd.f32 0.0, %v2312
        %v2314 = vpop.f32.mrf.mxu0
        %2315 = vmatprep.mubr.f32.mxu0 0.0
        %2316 = vmatmul.mubr.f32.gmra.mxu0 %v2193
        %v2317 = vpop.f32.mrf.mxu0
        %v2318 = vadd.f32 0.0, %v2317
        %v2319 = vpop.f32.mrf.mxu0
        %2320 = vmatprep.mubr.f32.mxu0 0.0
        %2321 = vmatmul.mubr.f32.gmra.mxu0 %v2196
        %v2322 = vpop.f32.mrf.mxu0
        %v2323 = vadd.f32 0.0, %v2322
        %v2324 = vpop.f32.mrf.mxu0
        %2325 = vmatprep.mubr.f32.mxu0 0.0
        %2326 = vmatmul.mubr.f32.gmra.mxu0 %v2199
        %v2327 = vpop.f32.mrf.mxu0
        %v2328 = vadd.f32 0.0, %v2327
        %v2329 = vpop.f32.mrf.mxu0
        %2330 = vmatprep.mubr.f32.mxu0 0.0
        %2331 = vmatmul.mubr.f32.gmra.mxu0 %v2202
        %v2332 = vpop.f32.mrf.mxu0
        %v2333 = vadd.f32 0.0, %v2332
        %v2334 = vpop.f32.mrf.mxu0
        %2335 = vmatprep.mubr.f32.mxu0 0.0
        %2336 = vmatmul.mubr.f32.gmra.mxu0 %v2205
        %v2337 = vpop.f32.mrf.mxu0
        %v2338 = vadd.f32 0.0, %v2337
        %v2339 = vpop.f32.mrf.mxu0
        %2340 = vmatprep.mubr.f32.mxu0 0.0
        %2341 = vmatmul.mubr.f32.gmra.mxu0 %v2208
        %v2342 = vpop.f32.mrf.mxu0
        %v2343 = vadd.f32 0.0, %v2342
        %v2344 = vpop.f32.mrf.mxu0
        %2345 = vmatprep.mubr.f32.mxu0 0.0
        %2346 = vmatmul.mubr.f32.gmra.mxu0 %v2211
        %v2347 = vpop.f32.mrf.mxu0
        %v2348 = vadd.f32 0.0, %v2347
        %v2349 = vpop.f32.mrf.mxu0
        %2350 = vmatprep.mubr.f32.mxu0 0.0
        %2351 = vmatmul.mubr.f32.gmra.mxu0 %v2214
        %v2352 = vpop.f32.mrf.mxu0
        %v2353 = vadd.f32 0.0, %v2352
        %v2354 = vpop.f32.mrf.mxu0
        %2355 = vmatprep.mubr.f32.mxu0 0.0
        %2356 = vmatmul.mubr.f32.gmra.mxu0 %v2217
        %v2357 = vpop.f32.mrf.mxu0
        %v2358 = vadd.f32 0.0, %v2357
        %v2359 = vpop.f32.mrf.mxu0
        %2360 = vmatprep.mubr.f32.mxu0 0.0
        %2361 = vmatmul.mubr.f32.gmra.mxu0 %v2220
        %v2362 = vpop.f32.mrf.mxu0
        %v2363 = vadd.f32 0.0, %v2362
        %v2364 = vpop.f32.mrf.mxu0
        %2365 = vmatprep.mubr.f32.mxu0 0.0
        %2366 = vmatmul.mubr.f32.gmra.mxu0 %v2223
        %v2367 = vpop.f32.mrf.mxu0
        %v2368 = vadd.f32 0.0, %v2367
        %v2369 = vpop.f32.mrf.mxu0
        %2370 = vmatprep.mubr.f32.mxu0 0.0
        %2371 = vmatmul.mubr.f32.gmra.mxu0 %v2226
        %v2372 = vpop.f32.mrf.mxu0
        %v2373 = vadd.f32 0.0, %v2372
        %v2374 = vpop.f32.mrf.mxu0
        %2375 = vdwg.mxu0
        %v2376 = vmax.f32 %v1281, %v2298
        %v2377 = vmax.f32 %v1286, %v2303
        %v2378 = vmax.f32 %v1291, %v2308
        %v2379 = vmax.f32 %v1296, %v2313
        %v2380 = vmax.f32 %v1301, %v2318
        %v2381 = vmax.f32 %v1306, %v2323
        %v2382 = vmax.f32 %v1311, %v2328
        %v2383 = vmax.f32 %v1316, %v2333
        %v2384 = vmax.f32 %v1321, %v2338
        %v2385 = vmax.f32 %v1326, %v2343
        %v2386 = vmax.f32 %v1331, %v2348
        %v2387 = vmax.f32 %v1336, %v2353
        %v2388 = vmax.f32 %v1341, %v2358
        %v2389 = vmax.f32 %v1346, %v2363
        %v2390 = vmax.f32 %v1351, %v2368
        %v2391 = vmax.f32 %v1356, %v2373
        %vm2392 = vcmask 31744
        %2393 = vst.msk [vmem:[#allocation3] sm:$0xff] %vm2392, %v2376
        %2394 = vst.msk [vmem:[#allocation3 + $0x8] sm:$0xff] %vm2392, %v2377
        %2395 = vst.msk [vmem:[#allocation3 + $0x10] sm:$0xff] %vm2392, %v2378
        %2396 = vst.msk [vmem:[#allocation3 + $0x18] sm:$0xff] %vm2392, %v2379
        %2397 = vst.msk [vmem:[#allocation3 + $0x20] sm:$0xff] %vm2392, %v2380
        %2398 = vst.msk [vmem:[#allocation3 + $0x28] sm:$0xff] %vm2392, %v2381
        %2399 = vst.msk [vmem:[#allocation3 + $0x30] sm:$0xff] %vm2392, %v2382
        %2400 = vst.msk [vmem:[#allocation3 + $0x38] sm:$0xff] %vm2392, %v2383
        %2401 = vst.msk [vmem:[#allocation3 + $0x40] sm:$0xff] %vm2392, %v2384
        %2402 = vst.msk [vmem:[#allocation3 + $0x48] sm:$0xff] %vm2392, %v2385
        %2403 = vst.msk [vmem:[#allocation3 + $0x50] sm:$0xff] %vm2392, %v2386
        %2404 = vst.msk [vmem:[#allocation3 + $0x58] sm:$0xff] %vm2392, %v2387
        %2405 = vst.msk [vmem:[#allocation3 + $0x60] sm:$0xff] %vm2392, %v2388
        %2406 = vst.msk [vmem:[#allocation3 + $0x68] sm:$0xff] %vm2392, %v2389
        %2407 = vst.msk [vmem:[#allocation3 + $0x70] sm:$0xff] %vm2392, %v2390
        %2408 = vst.msk [vmem:[#allocation3 + $0x78] sm:$0xff] %vm2392, %v2391
        %v2409 = vld [vmem:[#allocation3] ss:$2 sm:$0xff]
        %s2410 = scalar_lea.vmem [#allocation3], 16
        %v2411 = vld [vmem:[%s2410] ss:$2 sm:$0xff]
        %s2412 = scalar_lea.vmem [#allocation3], 32
        %v2413 = vld [vmem:[%s2412] ss:$2 sm:$0xff]
        %s2414 = scalar_lea.vmem [#allocation3], 48
        %v2415 = vld [vmem:[%s2414] ss:$2 sm:$0xff]
        %s2416 = scalar_lea.vmem [#allocation3], 64
        %v2417 = vld [vmem:[%s2416] ss:$2 sm:$0xff]
        %s2418 = scalar_lea.vmem [#allocation3], 80
        %v2419 = vld [vmem:[%s2418] ss:$2 sm:$0xff]
        %s2420 = scalar_lea.vmem [#allocation3], 96
        %v2421 = vld [vmem:[%s2420] ss:$2 sm:$0xff]
        %s2422 = scalar_lea.vmem [#allocation3], 112
        %v2423 = vld [vmem:[%s2422] ss:$2 sm:$0xff]
        %s2424 = scalar_lea.vmem [#allocation3], 1
        %v2425 = vld [vmem:[%s2424] ss:$2 sm:$0xff]
        %s2426 = scalar_lea.vmem [#allocation3], 17
        %v2427 = vld [vmem:[%s2426] ss:$2 sm:$0xff]
        %s2428 = scalar_lea.vmem [#allocation3], 33
        %v2429 = vld [vmem:[%s2428] ss:$2 sm:$0xff]
        %s2430 = scalar_lea.vmem [#allocation3], 49
        %v2431 = vld [vmem:[%s2430] ss:$2 sm:$0xff]
        %s2432 = scalar_lea.vmem [#allocation3], 65
        %v2433 = vld [vmem:[%s2432] ss:$2 sm:$0xff]
        %s2434 = scalar_lea.vmem [#allocation3], 81
        %v2435 = vld [vmem:[%s2434] ss:$2 sm:$0xff]
        %s2436 = scalar_lea.vmem [#allocation3], 97
        %v2437 = vld [vmem:[%s2436] ss:$2 sm:$0xff]
        %s2438 = scalar_lea.vmem [#allocation3], 113
        %v2439 = vld [vmem:[%s2438] ss:$2 sm:$0xff]
        %v2440 = vmax.f32 %v2409, %v2425
        %v2441 = vmax.f32 %v2411, %v2427
        %v2442 = vmax.f32 %v2413, %v2429
        %v2443 = vmax.f32 %v2415, %v2431
        %v2444 = vmax.f32 %v2417, %v2433
        %v2445 = vmax.f32 %v2419, %v2435
        %v2446 = vmax.f32 %v2421, %v2437
        %v2447 = vmax.f32 %v2423, %v2439
        %v2448 = vld [vmem:[%s2] sm:$0x1]
        %v2450 = vlaneseq
        %v2451 = vshrl.u32 %v2450, 7
        %v2452 = vsub.s32 0, %v2451
        %v2453 = vrot.slane %v2448, %v2452
        %v2455 = vadd.f32 %v2440, %v2453
        %v2456 = vadd.f32 %v2441, %v2453
        %v2457 = vadd.f32 %v2442, %v2453
        %v2458 = vadd.f32 %v2443, %v2453
        %v2459 = vadd.f32 %v2444, %v2453
        %v2460 = vadd.f32 %v2445, %v2453
        %v2461 = vadd.f32 %v2446, %v2453
        %v2462 = vadd.f32 %v2447, %v2453
        %v2463 = vmax.f32 %v2455, 0.0
        %v2464 = vmax.f32 %v2456, 0.0
        %v2465 = vmax.f32 %v2457, 0.0
        %v2466 = vmax.f32 %v2458, 0.0
        %v2467 = vmax.f32 %v2459, 0.0
        %v2468 = vmax.f32 %v2460, 0.0
        %v2469 = vmax.f32 %v2461, 0.0
        %v2470 = vmax.f32 %v2462, 0.0
        %2471 = vst.msk [vmem:[#allocation6] sm:$0xff] %vm2392, 0.0
        %vm2472 = vcmask 25600
        %2473 = vst.msk [vmem:[#allocation6 + $0x8] sm:$0x3] %vm2472, 0.0
        %2474 = vst.msk [vmem:[#allocation6 + $0x10] sm:$0xff] %vm2392, 0.0
        %2475 = vst.msk [vmem:[#allocation6 + $0x18] sm:$0x3] %vm2472, 0.0
        %2476 = vst.msk [vmem:[#allocation6 + $0x20] sm:$0xff] %vm2392, 0.0
        %2477 = vst.msk [vmem:[#allocation6 + $0x28] sm:$0x3] %vm2472, 0.0
        %2478 = vst.msk [vmem:[#allocation6 + $0x30] sm:$0xff] %vm2392, 0.0
        %2479 = vst.msk [vmem:[#allocation6 + $0x38] sm:$0x3] %vm2472, 0.0
        %2480 = vst.msk [vmem:[#allocation6 + $0x40] sm:$0xff] %vm2392, 0.0
        %2481 = vst.msk [vmem:[#allocation6 + $0x48] sm:$0x3] %vm2472, 0.0
        %2482 = vst.msk [vmem:[#allocation6 + $0x50] sm:$0xff] %vm2392, 0.0
        %2483 = vst.msk [vmem:[#allocation6 + $0x58] sm:$0x3] %vm2472, 0.0
        %2484 = vst.msk [vmem:[#allocation6 + $0x60] sm:$0xff] %vm2392, 0.0
        %2485 = vst.msk [vmem:[#allocation6 + $0x68] sm:$0x3] %vm2472, 0.0
        %2486 = vst.msk [vmem:[#allocation6 + $0x70] sm:$0xff] %vm2392, 0.0
        %2487 = vst.msk [vmem:[#allocation6 + $0x78] sm:$0x3] %vm2472, 0.0
        %2488 = vst.msk [vmem:[#allocation6 + $0x80] sm:$0xff] %vm2392, 0.0
        %2489 = vst.msk [vmem:[#allocation6 + $0x88] sm:$0x3] %vm2472, 0.0
        %2490 = vst.msk [vmem:[#allocation6 + $0x90] sm:$0xff] %vm2392, 0.0
        %2491 = vst.msk [vmem:[#allocation6 + $0x98] sm:$0x3] %vm2472, 0.0
        %s2492 = scalar_lea.vmem [#allocation6], 16
        %2493 = vst.msk [vmem:[%s2492 + $0x1] sm:$0xff] %vm2392, %v2463
        %s2494 = scalar_lea.vmem [#allocation6], 32
        %2495 = vst.msk [vmem:[%s2494 + $0x1] sm:$0xff] %vm2392, %v2464
        %s2496 = scalar_lea.vmem [#allocation6], 48
        %2497 = vst.msk [vmem:[%s2496 + $0x1] sm:$0xff] %vm2392, %v2465
        %s2498 = scalar_lea.vmem [#allocation6], 64
        %2499 = vst.msk [vmem:[%s2498 + $0x1] sm:$0xff] %vm2392, %v2466
        %s2500 = scalar_lea.vmem [#allocation6], 80
        %2501 = vst.msk [vmem:[%s2500 + $0x1] sm:$0xff] %vm2392, %v2467
        %s2502 = scalar_lea.vmem [#allocation6], 96
        %2503 = vst.msk [vmem:[%s2502 + $0x1] sm:$0xff] %vm2392, %v2468
        %s2504 = scalar_lea.vmem [#allocation6], 112
        %2505 = vst.msk [vmem:[%s2504 + $0x1] sm:$0xff] %vm2392, %v2469
        %s2506 = scalar_lea.vmem [#allocation6], 128
        %2507 = vst.msk [vmem:[%s2506 + $0x1] sm:$0xff] %vm2392, %v2470
        %v2508 = vld [vmem:[#allocation6] sm:$0xff]
        %v2509 = vld [vmem:[#allocation6 + $0x20] sm:$0xff]
        %v2510 = vld [vmem:[#allocation6 + $0x40] sm:$0xff]
        %v2511 = vld [vmem:[#allocation6 + $0x60] sm:$0xff]
        %2512 = vst.msk [vmem:[#allocation4] sm:$0xff] %vm2392, %v2508
        %2513 = vst.msk [vmem:[#allocation4 + $0x8] sm:$0xff] %vm2392, %v2509
        %2514 = vst.msk [vmem:[#allocation4 + $0x10] sm:$0xff] %vm2392, %v2510
        %2515 = vst.msk [vmem:[#allocation4 + $0x18] sm:$0xff] %vm2392, %v2511
        %v2516 = vld [vmem:[#allocation6 + $0x1] sm:$0xff]
        %v2517 = vld [vmem:[#allocation6 + $0x21] sm:$0xff]
        %v2518 = vld [vmem:[#allocation6 + $0x41] sm:$0xff]
        %v2519 = vld [vmem:[#allocation6 + $0x61] sm:$0xff]
        %2524 = vrot.lane.b32.xlu0 %v2516, 4
        %v2525 = vpop.permute.xlu0 %2524
        %2526 = vrot.lane.b32.xlu0 %v2517, 4
        %v2527 = vpop.permute.xlu0 %2526
        %2528 = vrot.lane.b32.xlu0 %v2518, 4
        %v2529 = vpop.permute.xlu0 %2528
        %2530 = vrot.lane.b32.xlu0 %v2519, 4
        %v2531 = vpop.permute.xlu0 %2530
        %vm2536 = vcmask 64544
        %2537 = vst.msk [vmem:[#allocation4] sm:$0xff] %vm2536, %v2525
        %2538 = vst.msk [vmem:[#allocation4 + $0x8] sm:$0xff] %vm2536, %v2527
        %2539 = vst.msk [vmem:[#allocation4 + $0x10] sm:$0xff] %vm2536, %v2529
        %2540 = vst.msk [vmem:[#allocation4 + $0x18] sm:$0xff] %vm2536, %v2531
        %v2541 = vld [vmem:[#allocation6 + $0x2] sm:$0xff]
        %v2542 = vld [vmem:[#allocation6 + $0x22] sm:$0xff]
        %v2543 = vld [vmem:[#allocation6 + $0x42] sm:$0xff]
        %v2544 = vld [vmem:[#allocation6 + $0x62] sm:$0xff]
        %2549 = vrot.lane.b32.xlu0 %v2541, 8
        %v2550 = vpop.permute.xlu0 %2549
        %2551 = vrot.lane.b32.xlu0 %v2542, 8
        %v2552 = vpop.permute.xlu0 %2551
        %2553 = vrot.lane.b32.xlu0 %v2543, 8
        %v2554 = vpop.permute.xlu0 %2553
        %2555 = vrot.lane.b32.xlu0 %v2544, 8
        %v2556 = vpop.permute.xlu0 %2555
        %vm2561 = vcmask 97344
        %2562 = vst.msk [vmem:[#allocation4] sm:$0xff] %vm2561, %v2550
        %2563 = vst.msk [vmem:[#allocation4 + $0x8] sm:$0xff] %vm2561, %v2552
        %2564 = vst.msk [vmem:[#allocation4 + $0x10] sm:$0xff] %vm2561, %v2554
        %2565 = vst.msk [vmem:[#allocation4 + $0x18] sm:$0xff] %vm2561, %v2556
        %v2566 = vld [vmem:[%s2492] sm:$0xff]
        %v2567 = vld [vmem:[%s2492 + $0x20] sm:$0xff]
        %v2568 = vld [vmem:[%s2492 + $0x40] sm:$0xff]
        %v2569 = vld [vmem:[%s2492 + $0x60] sm:$0xff]
        %2574 = vrot.lane.b32.xlu0 %v2566, 12
        %v2575 = vpop.permute.xlu0 %2574
        %2576 = vrot.lane.b32.xlu0 %v2567, 12
        %v2577 = vpop.permute.xlu0 %2576
        %2578 = vrot.lane.b32.xlu0 %v2568, 12
        %v2579 = vpop.permute.xlu0 %2578
        %2580 = vrot.lane.b32.xlu0 %v2569, 12
        %v2581 = vpop.permute.xlu0 %2580
        %vm2586 = vcmask 130144
        %2587 = vst.msk [vmem:[#allocation4] sm:$0xff] %vm2586, %v2575
        %2588 = vst.msk [vmem:[#allocation4 + $0x8] sm:$0xff] %vm2586, %v2577
        %2589 = vst.msk [vmem:[#allocation4 + $0x10] sm:$0xff] %vm2586, %v2579
        %2590 = vst.msk [vmem:[#allocation4 + $0x18] sm:$0xff] %vm2586, %v2581
        %v2591 = vld [vmem:[%s2492 + $0x1] sm:$0xff]
        %v2592 = vld [vmem:[%s2492 + $0x21] sm:$0xff]
        %v2593 = vld [vmem:[%s2492 + $0x41] sm:$0xff]
        %v2594 = vld [vmem:[%s2492 + $0x61] sm:$0xff]
        %2599 = vrot.lane.b32.xlu0 %v2591, 16
        %v2600 = vpop.permute.xlu0 %2599
        %2601 = vrot.lane.b32.xlu0 %v2592, 16
        %v2602 = vpop.permute.xlu0 %2601
        %2603 = vrot.lane.b32.xlu0 %v2593, 16
        %v2604 = vpop.permute.xlu0 %2603
        %2605 = vrot.lane.b32.xlu0 %v2594, 16
        %v2606 = vpop.permute.xlu0 %2605
        %vm2611 = vcmask 162944
        %2612 = vst.msk [vmem:[#allocation4] sm:$0xff] %vm2611, %v2600
        %2613 = vst.msk [vmem:[#allocation4 + $0x8] sm:$0xff] %vm2611, %v2602
        %2614 = vst.msk [vmem:[#allocation4 + $0x10] sm:$0xff] %vm2611, %v2604
        %2615 = vst.msk [vmem:[#allocation4 + $0x18] sm:$0xff] %vm2611, %v2606
        %v2616 = vld [vmem:[%s2492 + $0x2] sm:$0xff]
        %v2617 = vld [vmem:[%s2492 + $0x22] sm:$0xff]
        %v2618 = vld [vmem:[%s2492 + $0x42] sm:$0xff]
        %v2619 = vld [vmem:[%s2492 + $0x62] sm:$0xff]
        %2624 = vrot.lane.b32.xlu0 %v2616, 20
        %v2625 = vpop.permute.xlu0 %2624
        %2626 = vrot.lane.b32.xlu0 %v2617, 20
        %v2627 = vpop.permute.xlu0 %2626
        %2628 = vrot.lane.b32.xlu0 %v2618, 20
        %v2629 = vpop.permute.xlu0 %2628
        %2630 = vrot.lane.b32.xlu0 %v2619, 20
        %v2631 = vpop.permute.xlu0 %2630
        %vm2636 = vcmask 195744
        %2637 = vst.msk [vmem:[#allocation4] sm:$0xff] %vm2636, %v2625
        %2638 = vst.msk [vmem:[#allocation4 + $0x8] sm:$0xff] %vm2636, %v2627
        %2639 = vst.msk [vmem:[#allocation4 + $0x10] sm:$0xff] %vm2636, %v2629
        %2640 = vst.msk [vmem:[#allocation4 + $0x18] sm:$0xff] %vm2636, %v2631
        %v2641 = vld [vmem:[%s2494] sm:$0xff]
        %v2642 = vld [vmem:[%s2494 + $0x20] sm:$0xff]
        %v2643 = vld [vmem:[%s2494 + $0x40] sm:$0xff]
        %v2644 = vld [vmem:[%s2494 + $0x60] sm:$0xff]
        %2649 = vrot.lane.b32.xlu0 %v2641, 24
        %v2650 = vpop.permute.xlu0 %2649
        %2651 = vrot.lane.b32.xlu0 %v2642, 24
        %v2652 = vpop.permute.xlu0 %2651
        %2653 = vrot.lane.b32.xlu0 %v2643, 24
        %v2654 = vpop.permute.xlu0 %2653
        %2655 = vrot.lane.b32.xlu0 %v2644, 24
        %v2656 = vpop.permute.xlu0 %2655
        %vm2661 = vcmask 228544
        %2662 = vst.msk [vmem:[#allocation4] sm:$0xff] %vm2661, %v2650
        %2663 = vst.msk [vmem:[#allocation4 + $0x8] sm:$0xff] %vm2661, %v2652
        %2664 = vst.msk [vmem:[#allocation4 + $0x10] sm:$0xff] %vm2661, %v2654
        %2665 = vst.msk [vmem:[#allocation4 + $0x18] sm:$0xff] %vm2661, %v2656
        %v2666 = vld [vmem:[%s2494 + $0x1] sm:$0xff]
        %v2667 = vld [vmem:[%s2494 + $0x21] sm:$0xff]
        %v2668 = vld [vmem:[%s2494 + $0x41] sm:$0xff]
        %v2669 = vld [vmem:[%s2494 + $0x61] sm:$0xff]
        %2674 = vrot.lane.b32.xlu0 %v2666, 28
        %v2675 = vpop.permute.xlu0 %2674
        %2676 = vrot.lane.b32.xlu0 %v2667, 28
        %v2677 = vpop.permute.xlu0 %2676
        %2678 = vrot.lane.b32.xlu0 %v2668, 28
        %v2679 = vpop.permute.xlu0 %2678
        %2680 = vrot.lane.b32.xlu0 %v2669, 28
        %v2681 = vpop.permute.xlu0 %2680
        %vm2686 = vcmask 261344
        %2687 = vst.msk [vmem:[#allocation4] sm:$0xff] %vm2686, %v2675
        %2688 = vst.msk [vmem:[#allocation4 + $0x8] sm:$0xff] %vm2686, %v2677
        %2689 = vst.msk [vmem:[#allocation4 + $0x10] sm:$0xff] %vm2686, %v2679
        %2690 = vst.msk [vmem:[#allocation4 + $0x18] sm:$0xff] %vm2686, %v2681
        %v2691 = vld [vmem:[%s2494 + $0x2] sm:$0xff]
        %v2692 = vld [vmem:[%s2494 + $0x22] sm:$0xff]
        %v2693 = vld [vmem:[%s2494 + $0x42] sm:$0xff]
        %v2694 = vld [vmem:[%s2494 + $0x62] sm:$0xff]
        %2699 = vrot.lane.b32.xlu0 %v2691, 32
        %v2700 = vpop.permute.xlu0 %2699
        %2701 = vrot.lane.b32.xlu0 %v2692, 32
        %v2702 = vpop.permute.xlu0 %2701
        %2703 = vrot.lane.b32.xlu0 %v2693, 32
        %v2704 = vpop.permute.xlu0 %2703
        %2705 = vrot.lane.b32.xlu0 %v2694, 32
        %v2706 = vpop.permute.xlu0 %2705
        %vm2711 = vcmask 294144
        %2712 = vst.msk [vmem:[#allocation4] sm:$0xff] %vm2711, %v2700
        %2713 = vst.msk [vmem:[#allocation4 + $0x8] sm:$0xff] %vm2711, %v2702
        %2714 = vst.msk [vmem:[#allocation4 + $0x10] sm:$0xff] %vm2711, %v2704
        %2715 = vst.msk [vmem:[#allocation4 + $0x18] sm:$0xff] %vm2711, %v2706
        %v2716 = vld [vmem:[#allocation4] sm:$0xff]
        %v2717 = vld [vmem:[#allocation4 + $0x8] sm:$0xff]
        %v2718 = vld [vmem:[#allocation4 + $0x10] sm:$0xff]
        %v2719 = vld [vmem:[#allocation4 + $0x18] sm:$0xff]
        %v2720 = vld [vmem:[%s3] sm:$0xff]
        %v2721 = vld [vmem:[%s3 + $0x8] sm:$0xff]
        %v2722 = vld [vmem:[%s3 + $0x10] sm:$0xff]
        %v2723 = vld [vmem:[%s3 + $0x18] sm:$0xff]
        %v2724 = vld [vmem:[%s3 + $0x20] sm:$0xf]
        %vm2725 = vcmask 293888
        %v2727 = vsel %vm2725, %v2716, 0
        %v2730 = vsel %vm2725, %v2717, 0
        %v2733 = vsel %vm2725, %v2718, 0
        %v2736 = vsel %vm2725, %v2719, 0
        %vm2738 = vcmask 1043456
        %v2740 = vsel %vm2738, %v2724, 0
        %2742 = vmatprep.subr.mxu0 0.0
        %2743 = vmatpush1.msra.mxu0 0.0
        %2744 = vmatprep.subr.mxu0 0.0
        %2745 = vmatpush1.msra.mxu0 0.0
        %2746 = vmatprep.subr.mxu0 0.0
        %2747 = vmatpush1.msra.mxu0 0.0
        %2748 = vmatprep.subr.mxu0 0.0
        %2749 = vmatpush1.msra.mxu0 0.0
        %2750 = vmatprep.subr.mxu0 0.0
        %2751 = vmatpush1.msra.mxu0 0.0
        %2752 = vmatprep.subr.mxu0 0.0
        %2753 = vmatpush1.msra.mxu0 0.0
        %2754 = vmatprep.subr.mxu0 0.0
        %2755 = vmatpush1.msra.mxu0 0.0
        %2756 = vmatprep.subr.mxu0 0.0
        %2757 = vmatpush1.msra.mxu0 0.0
        %2758 = vmatprep.subr.mxu0 0.0
        %2759 = vmatpush1.msra.mxu0 0.0
        %2760 = vmatprep.subr.mxu0 0.0
        %2761 = vmatpush1.msra.mxu0 0.0
        %2762 = vmatprep.subr.mxu0 0.0
        %2763 = vmatpush1.msra.mxu0 0.0
        %2764 = vmatprep.subr.mxu0 0.0
        %2765 = vmatpush1.msra.mxu0 %v2740
        %2766 = vmatprep.subr.mxu0 0.0
        %2767 = vmatpush1.msra.mxu0 %v2723
        %2768 = vmatprep.subr.mxu0 0.0
        %2769 = vmatpush1.msra.mxu0 %v2722
        %2770 = vmatprep.subr.mxu0 0.0
        %2771 = vmatpush1.msra.mxu0 %v2721
        %2772 = vmatprep.subr.mxu0 0.0
        %2773 = vmatpush1.msra.mxu0 %v2720
        %2774 = vmatprep.subr.mxu0 0.0
        %2775 = vmatpush2.msra.mxu0 0.0
        %2776 = vmatprep.subr.mxu0 0.0
        %2777 = vmatpush2.msra.mxu0 0.0
        %2778 = vmatprep.subr.mxu0 0.0
        %2779 = vmatpush2.msra.mxu0 0.0
        %2780 = vmatprep.subr.mxu0 0.0
        %2781 = vmatpush2.msra.mxu0 0.0
        %2782 = vmatprep.subr.mxu0 0.0
        %2783 = vmatpush2.msra.mxu0 0.0
        %2784 = vmatprep.subr.mxu0 0.0
        %2785 = vmatpush2.msra.mxu0 0.0
        %2786 = vmatprep.subr.mxu0 0.0
        %2787 = vmatpush2.msra.mxu0 0.0
        %2788 = vmatprep.subr.mxu0 0.0
        %2789 = vmatpush2.msra.mxu0 0.0
        %2790 = vmatprep.subr.mxu0 0.0
        %2791 = vmatpush2.msra.mxu0 0.0
        %2792 = vmatprep.subr.mxu0 0.0
        %2793 = vmatpush2.msra.mxu0 0.0
        %2794 = vmatprep.subr.mxu0 0.0
        %2795 = vmatpush2.msra.mxu0 0.0
        %2796 = vmatprep.subr.mxu0 0.0
        %2797 = vmatpush2.msra.mxu0 0.0
        %2798 = vmatprep.subr.mxu0 0.0
        %2799 = vmatpush2.msra.mxu0 0.0
        %2800 = vmatprep.subr.mxu0 0.0
        %2801 = vmatpush2.msra.mxu0 0.0
        %2802 = vmatprep.subr.mxu0 0.0
        %2803 = vmatpush2.msra.mxu0 0.0
        %2804 = vmatprep.subr.mxu0 0.0
        %2805 = vmatpush2.msra.mxu0 0.0
        %2806 = vmatprep.mubr.f32.mxu0 0.0
        %2807 = vmatmul.mubr.f32.gmra.mxu0 %v2727
        %v2808 = vpop.f32.mrf.mxu0
        %v2809 = vadd.f32 0.0, %v2808
        %v2810 = vpop.f32.mrf.mxu0
        %2811 = vmatprep.mubr.f32.mxu0 0.0
        %2812 = vmatmul.mubr.f32.gmra.mxu0 %v2730
        %v2813 = vpop.f32.mrf.mxu0
        %v2814 = vadd.f32 0.0, %v2813
        %v2815 = vpop.f32.mrf.mxu0
        %2816 = vmatprep.mubr.f32.mxu0 0.0
        %2817 = vmatmul.mubr.f32.gmra.mxu0 %v2733
        %v2818 = vpop.f32.mrf.mxu0
        %v2819 = vadd.f32 0.0, %v2818
        %v2820 = vpop.f32.mrf.mxu0
        %2821 = vmatprep.mubr.f32.mxu0 0.0
        %2822 = vmatmul.mubr.f32.gmra.mxu0 %v2736
        %v2823 = vpop.f32.mrf.mxu0
        %v2824 = vadd.f32 0.0, %v2823
        %v2825 = vpop.f32.mrf.mxu0
        %2826 = vdwg.mxu0
        %v2827 = vld [vmem:[%s2492] sm:$0xff]
        %v2828 = vld [vmem:[%s2492 + $0x20] sm:$0xff]
        %v2829 = vld [vmem:[%s2492 + $0x40] sm:$0xff]
        %v2830 = vld [vmem:[%s2492 + $0x60] sm:$0xff]
        %2831 = vst.msk [vmem:[#allocation4] sm:$0xff] %vm2392, %v2827
        %2832 = vst.msk [vmem:[#allocation4 + $0x8] sm:$0xff] %vm2392, %v2828
        %2833 = vst.msk [vmem:[#allocation4 + $0x10] sm:$0xff] %vm2392, %v2829
        %2834 = vst.msk [vmem:[#allocation4 + $0x18] sm:$0xff] %vm2392, %v2830
        %v2835 = vld [vmem:[%s2492 + $0x1] sm:$0xff]
        %v2836 = vld [vmem:[%s2492 + $0x21] sm:$0xff]
        %v2837 = vld [vmem:[%s2492 + $0x41] sm:$0xff]
        %v2838 = vld [vmem:[%s2492 + $0x61] sm:$0xff]
        %2843 = vrot.lane.b32.xlu0 %v2835, 4
        %v2844 = vpop.permute.xlu0 %2843
        %2845 = vrot.lane.b32.xlu0 %v2836, 4
        %v2846 = vpop.permute.xlu0 %2845
        %2847 = vrot.lane.b32.xlu0 %v2837, 4
        %v2848 = vpop.permute.xlu0 %2847
        %2849 = vrot.lane.b32.xlu0 %v2838, 4
        %v2850 = vpop.permute.xlu0 %2849
        %2855 = vst.msk [vmem:[#allocation4] sm:$0xff] %vm2536, %v2844
        %2856 = vst.msk [vmem:[#allocation4 + $0x8] sm:$0xff] %vm2536, %v2846
        %2857 = vst.msk [vmem:[#allocation4 + $0x10] sm:$0xff] %vm2536, %v2848
        %2858 = vst.msk [vmem:[#allocation4 + $0x18] sm:$0xff] %vm2536, %v2850
        %v2859 = vld [vmem:[%s2492 + $0x2] sm:$0xff]
        %v2860 = vld [vmem:[%s2492 + $0x22] sm:$0xff]
        %v2861 = vld [vmem:[%s2492 + $0x42] sm:$0xff]
        %v2862 = vld [vmem:[%s2492 + $0x62] sm:$0xff]
        %2867 = vrot.lane.b32.xlu0 %v2859, 8
        %v2868 = vpop.permute.xlu0 %2867
        %2869 = vrot.lane.b32.xlu0 %v2860, 8
        %v2870 = vpop.permute.xlu0 %2869
        %2871 = vrot.lane.b32.xlu0 %v2861, 8
        %v2872 = vpop.permute.xlu0 %2871
        %2873 = vrot.lane.b32.xlu0 %v2862, 8
        %v2874 = vpop.permute.xlu0 %2873
        %2879 = vst.msk [vmem:[#allocation4] sm:$0xff] %vm2561, %v2868
        %2880 = vst.msk [vmem:[#allocation4 + $0x8] sm:$0xff] %vm2561, %v2870
        %2881 = vst.msk [vmem:[#allocation4 + $0x10] sm:$0xff] %vm2561, %v2872
        %2882 = vst.msk [vmem:[#allocation4 + $0x18] sm:$0xff] %vm2561, %v2874
        %v2883 = vld [vmem:[%s2494] sm:$0xff]
        %v2884 = vld [vmem:[%s2494 + $0x20] sm:$0xff]
        %v2885 = vld [vmem:[%s2494 + $0x40] sm:$0xff]
        %v2886 = vld [vmem:[%s2494 + $0x60] sm:$0xff]
        %2891 = vrot.lane.b32.xlu0 %v2883, 12
        %v2892 = vpop.permute.xlu0 %2891
        %2893 = vrot.lane.b32.xlu0 %v2884, 12
        %v2894 = vpop.permute.xlu0 %2893
        %2895 = vrot.lane.b32.xlu0 %v2885, 12
        %v2896 = vpop.permute.xlu0 %2895
        %2897 = vrot.lane.b32.xlu0 %v2886, 12
        %v2898 = vpop.permute.xlu0 %2897
        %2903 = vst.msk [vmem:[#allocation4] sm:$0xff] %vm2586, %v2892
        %2904 = vst.msk [vmem:[#allocation4 + $0x8] sm:$0xff] %vm2586, %v2894
        %2905 = vst.msk [vmem:[#allocation4 + $0x10] sm:$0xff] %vm2586, %v2896
        %2906 = vst.msk [vmem:[#allocation4 + $0x18] sm:$0xff] %vm2586, %v2898
        %v2907 = vld [vmem:[%s2494 + $0x1] sm:$0xff]
        %v2908 = vld [vmem:[%s2494 + $0x21] sm:$0xff]
        %v2909 = vld [vmem:[%s2494 + $0x41] sm:$0xff]
        %v2910 = vld [vmem:[%s2494 + $0x61] sm:$0xff]
        %2915 = vrot.lane.b32.xlu0 %v2907, 16
        %v2916 = vpop.permute.xlu0 %2915
        %2917 = vrot.lane.b32.xlu0 %v2908, 16
        %v2918 = vpop.permute.xlu0 %2917
        %2919 = vrot.lane.b32.xlu0 %v2909, 16
        %v2920 = vpop.permute.xlu0 %2919
        %2921 = vrot.lane.b32.xlu0 %v2910, 16
        %v2922 = vpop.permute.xlu0 %2921
        %2927 = vst.msk [vmem:[#allocation4] sm:$0xff] %vm2611, %v2916
        %2928 = vst.msk [vmem:[#allocation4 + $0x8] sm:$0xff] %vm2611, %v2918
        %2929 = vst.msk [vmem:[#allocation4 + $0x10] sm:$0xff] %vm2611, %v2920
        %2930 = vst.msk [vmem:[#allocation4 + $0x18] sm:$0xff] %vm2611, %v2922
        %v2931 = vld [vmem:[%s2494 + $0x2] sm:$0xff]
        %v2932 = vld [vmem:[%s2494 + $0x22] sm:$0xff]
        %v2933 = vld [vmem:[%s2494 + $0x42] sm:$0xff]
        %v2934 = vld [vmem:[%s2494 + $0x62] sm:$0xff]
        %2939 = vrot.lane.b32.xlu0 %v2931, 20
        %v2940 = vpop.permute.xlu0 %2939
        %2941 = vrot.lane.b32.xlu0 %v2932, 20
        %v2942 = vpop.permute.xlu0 %2941
        %2943 = vrot.lane.b32.xlu0 %v2933, 20
        %v2944 = vpop.permute.xlu0 %2943
        %2945 = vrot.lane.b32.xlu0 %v2934, 20
        %v2946 = vpop.permute.xlu0 %2945
        %2951 = vst.msk [vmem:[#allocation4] sm:$0xff] %vm2636, %v2940
        %2952 = vst.msk [vmem:[#allocation4 + $0x8] sm:$0xff] %vm2636, %v2942
        %2953 = vst.msk [vmem:[#allocation4 + $0x10] sm:$0xff] %vm2636, %v2944
        %2954 = vst.msk [vmem:[#allocation4 + $0x18] sm:$0xff] %vm2636, %v2946
        %v2955 = vld [vmem:[%s2496] sm:$0xff]
        %v2956 = vld [vmem:[%s2496 + $0x20] sm:$0xff]
        %v2957 = vld [vmem:[%s2496 + $0x40] sm:$0xff]
        %v2958 = vld [vmem:[%s2496 + $0x60] sm:$0xff]
        %2963 = vrot.lane.b32.xlu0 %v2955, 24
        %v2964 = vpop.permute.xlu0 %2963
        %2965 = vrot.lane.b32.xlu0 %v2956, 24
        %v2966 = vpop.permute.xlu0 %2965
        %2967 = vrot.lane.b32.xlu0 %v2957, 24
        %v2968 = vpop.permute.xlu0 %2967
        %2969 = vrot.lane.b32.xlu0 %v2958, 24
        %v2970 = vpop.permute.xlu0 %2969
        %2975 = vst.msk [vmem:[#allocation4] sm:$0xff] %vm2661, %v2964
        %2976 = vst.msk [vmem:[#allocation4 + $0x8] sm:$0xff] %vm2661, %v2966
        %2977 = vst.msk [vmem:[#allocation4 + $0x10] sm:$0xff] %vm2661, %v2968
        %2978 = vst.msk [vmem:[#allocation4 + $0x18] sm:$0xff] %vm2661, %v2970
        %v2979 = vld [vmem:[%s2496 + $0x1] sm:$0xff]
        %v2980 = vld [vmem:[%s2496 + $0x21] sm:$0xff]
        %v2981 = vld [vmem:[%s2496 + $0x41] sm:$0xff]
        %v2982 = vld [vmem:[%s2496 + $0x61] sm:$0xff]
        %2987 = vrot.lane.b32.xlu0 %v2979, 28
        %v2988 = vpop.permute.xlu0 %2987
        %2989 = vrot.lane.b32.xlu0 %v2980, 28
        %v2990 = vpop.permute.xlu0 %2989
        %2991 = vrot.lane.b32.xlu0 %v2981, 28
        %v2992 = vpop.permute.xlu0 %2991
        %2993 = vrot.lane.b32.xlu0 %v2982, 28
        %v2994 = vpop.permute.xlu0 %2993
        %2999 = vst.msk [vmem:[#allocation4] sm:$0xff] %vm2686, %v2988
        %3000 = vst.msk [vmem:[#allocation4 + $0x8] sm:$0xff] %vm2686, %v2990
        %3001 = vst.msk [vmem:[#allocation4 + $0x10] sm:$0xff] %vm2686, %v2992
        %3002 = vst.msk [vmem:[#allocation4 + $0x18] sm:$0xff] %vm2686, %v2994
        %v3003 = vld [vmem:[%s2496 + $0x2] sm:$0xff]
        %v3004 = vld [vmem:[%s2496 + $0x22] sm:$0xff]
        %v3005 = vld [vmem:[%s2496 + $0x42] sm:$0xff]
        %v3006 = vld [vmem:[%s2496 + $0x62] sm:$0xff]
        %3011 = vrot.lane.b32.xlu0 %v3003, 32
        %v3012 = vpop.permute.xlu0 %3011
        %3013 = vrot.lane.b32.xlu0 %v3004, 32
        %v3014 = vpop.permute.xlu0 %3013
        %3015 = vrot.lane.b32.xlu0 %v3005, 32
        %v3016 = vpop.permute.xlu0 %3015
        %3017 = vrot.lane.b32.xlu0 %v3006, 32
        %v3018 = vpop.permute.xlu0 %3017
        %3023 = vst.msk [vmem:[#allocation4] sm:$0xff] %vm2711, %v3012
        %3024 = vst.msk [vmem:[#allocation4 + $0x8] sm:$0xff] %vm2711, %v3014
        %3025 = vst.msk [vmem:[#allocation4 + $0x10] sm:$0xff] %vm2711, %v3016
        %3026 = vst.msk [vmem:[#allocation4 + $0x18] sm:$0xff] %vm2711, %v3018
        %v3027 = vld [vmem:[#allocation4] sm:$0xff]
        %v3028 = vld [vmem:[#allocation4 + $0x8] sm:$0xff]
        %v3029 = vld [vmem:[#allocation4 + $0x10] sm:$0xff]
        %v3030 = vld [vmem:[#allocation4 + $0x18] sm:$0xff]
        %v3031 = vld [vmem:[%s3] sm:$0xff]
        %v3032 = vld [vmem:[%s3 + $0x8] sm:$0xff]
        %v3033 = vld [vmem:[%s3 + $0x10] sm:$0xff]
        %v3034 = vld [vmem:[%s3 + $0x18] sm:$0xff]
        %v3035 = vld [vmem:[%s3 + $0x20] sm:$0xf]
        %v3037 = vsel %vm2725, %v3027, 0
        %v3040 = vsel %vm2725, %v3028, 0
        %v3043 = vsel %vm2725, %v3029, 0
        %v3046 = vsel %vm2725, %v3030, 0
        %v3049 = vsel %vm2738, %v3035, 0
        %3051 = vmatprep.subr.mxu0 0.0
        %3052 = vmatpush1.msra.mxu0 0.0
        %3053 = vmatprep.subr.mxu0 0.0
        %3054 = vmatpush1.msra.mxu0 0.0
        %3055 = vmatprep.subr.mxu0 0.0
        %3056 = vmatpush1.msra.mxu0 0.0
        %3057 = vmatprep.subr.mxu0 0.0
        %3058 = vmatpush1.msra.mxu0 0.0
        %3059 = vmatprep.subr.mxu0 0.0
        %3060 = vmatpush1.msra.mxu0 0.0
        %3061 = vmatprep.subr.mxu0 0.0
        %3062 = vmatpush1.msra.mxu0 0.0
        %3063 = vmatprep.subr.mxu0 0.0
        %3064 = vmatpush1.msra.mxu0 0.0
        %3065 = vmatprep.subr.mxu0 0.0
        %3066 = vmatpush1.msra.mxu0 0.0
        %3067 = vmatprep.subr.mxu0 0.0
        %3068 = vmatpush1.msra.mxu0 0.0
        %3069 = vmatprep.subr.mxu0 0.0
        %3070 = vmatpush1.msra.mxu0 0.0
        %3071 = vmatprep.subr.mxu0 0.0
        %3072 = vmatpush1.msra.mxu0 0.0
        %3073 = vmatprep.subr.mxu0 0.0
        %3074 = vmatpush1.msra.mxu0 %v3049
        %3075 = vmatprep.subr.mxu0 0.0
        %3076 = vmatpush1.msra.mxu0 %v3034
        %3077 = vmatprep.subr.mxu0 0.0
        %3078 = vmatpush1.msra.mxu0 %v3033
        %3079 = vmatprep.subr.mxu0 0.0
        %3080 = vmatpush1.msra.mxu0 %v3032
        %3081 = vmatprep.subr.mxu0 0.0
        %3082 = vmatpush1.msra.mxu0 %v3031
        %3083 = vmatprep.subr.mxu0 0.0
        %3084 = vmatpush2.msra.mxu0 0.0
        %3085 = vmatprep.subr.mxu0 0.0
        %3086 = vmatpush2.msra.mxu0 0.0
        %3087 = vmatprep.subr.mxu0 0.0
        %3088 = vmatpush2.msra.mxu0 0.0
        %3089 = vmatprep.subr.mxu0 0.0
        %3090 = vmatpush2.msra.mxu0 0.0
        %3091 = vmatprep.subr.mxu0 0.0
        %3092 = vmatpush2.msra.mxu0 0.0
        %3093 = vmatprep.subr.mxu0 0.0
        %3094 = vmatpush2.msra.mxu0 0.0
        %3095 = vmatprep.subr.mxu0 0.0
        %3096 = vmatpush2.msra.mxu0 0.0
        %3097 = vmatprep.subr.mxu0 0.0
        %3098 = vmatpush2.msra.mxu0 0.0
        %3099 = vmatprep.subr.mxu0 0.0
        %3100 = vmatpush2.msra.mxu0 0.0
        %3101 = vmatprep.subr.mxu0 0.0
        %3102 = vmatpush2.msra.mxu0 0.0
        %3103 = vmatprep.subr.mxu0 0.0
        %3104 = vmatpush2.msra.mxu0 0.0
        %3105 = vmatprep.subr.mxu0 0.0
        %3106 = vmatpush2.msra.mxu0 0.0
        %3107 = vmatprep.subr.mxu0 0.0
        %3108 = vmatpush2.msra.mxu0 0.0
        %3109 = vmatprep.subr.mxu0 0.0
        %3110 = vmatpush2.msra.mxu0 0.0
        %3111 = vmatprep.subr.mxu0 0.0
        %3112 = vmatpush2.msra.mxu0 0.0
        %3113 = vmatprep.subr.mxu0 0.0
        %3114 = vmatpush2.msra.mxu0 0.0
        %3115 = vmatprep.mubr.f32.mxu0 0.0
        %3116 = vmatmul.mubr.f32.gmra.mxu0 %v3037
        %v3117 = vpop.f32.mrf.mxu0
        %v3118 = vadd.f32 0.0, %v3117
        %v3119 = vpop.f32.mrf.mxu0
        %3120 = vmatprep.mubr.f32.mxu0 0.0
        %3121 = vmatmul.mubr.f32.gmra.mxu0 %v3040
        %v3122 = vpop.f32.mrf.mxu0
        %v3123 = vadd.f32 0.0, %v3122
        %v3124 = vpop.f32.mrf.mxu0
        %3125 = vmatprep.mubr.f32.mxu0 0.0
        %3126 = vmatmul.mubr.f32.gmra.mxu0 %v3043
        %v3127 = vpop.f32.mrf.mxu0
        %v3128 = vadd.f32 0.0, %v3127
        %v3129 = vpop.f32.mrf.mxu0
        %3130 = vmatprep.mubr.f32.mxu0 0.0
        %3131 = vmatmul.mubr.f32.gmra.mxu0 %v3046
        %v3132 = vpop.f32.mrf.mxu0
        %v3133 = vadd.f32 0.0, %v3132
        %v3134 = vpop.f32.mrf.mxu0
        %3135 = vdwg.mxu0
        %v3136 = vmax.f32 %v2809, %v3118
        %v3137 = vmax.f32 %v2814, %v3123
        %v3138 = vmax.f32 %v2819, %v3128
        %v3139 = vmax.f32 %v2824, %v3133
        %vm3140 = vcmask 64512
        %3141 = vst.msk [vmem:[#allocation5] sm:$0xff] %vm3140, %v3136
        %3142 = vst.msk [vmem:[#allocation5 + $0x8] sm:$0xff] %vm3140, %v3137
        %3143 = vst.msk [vmem:[#allocation5 + $0x10] sm:$0xff] %vm3140, %v3138
        %3144 = vst.msk [vmem:[#allocation5 + $0x18] sm:$0xff] %vm3140, %v3139
        %v3145 = vld [vmem:[#allocation5] ss:$2 sm:$0xff]
        %s3146 = scalar_lea.vmem [#allocation5], 16
        %v3147 = vld [vmem:[%s3146] ss:$2 sm:$0xff]
        %s3148 = scalar_lea.vmem [#allocation5], 1
        %v3149 = vld [vmem:[%s3148] ss:$2 sm:$0xff]
        %s3150 = scalar_lea.vmem [#allocation5], 17
        %v3151 = vld [vmem:[%s3150] ss:$2 sm:$0xff]
        %v3152 = vmax.f32 %v3145, %v3149
        %v3153 = vmax.f32 %v3147, %v3151
        %v3154 = vld [vmem:[%s4] sm:$0x1]
        %v3156 = vlaneseq
        %v3157 = vshrl.u32 %v3156, 7
        %v3158 = vsub.s32 0, %v3157
        %v3159 = vrot.slane %v3154, %v3158
        %v3161 = vadd.f32 %v3152, %v3159
        %v3162 = vadd.f32 %v3153, %v3159
        %v3163 = vmax.f32 %v3161, 0.0
        %v3164 = vmax.f32 %v3162, 0.0
        %vm3165 = vcmask 57344
        %3166 = vst.msk [vmem:[#allocation7] sm:$0x1] %vm3165, %v3163
        %3168 = vrot.lane.b32.xlu0 %v3163, 8
        %v3169 = vpop.permute.xlu0 %3168
        %vm3171 = vcmask 123969
        %3172 = vst.msk [vmem:[#allocation7 - $0x1] sm:$0x2] %vm3171, %v3169
        %3173 = vrot.lane.b32.xlu0 %v3163, 16
        %v3174 = vpop.permute.xlu0 %3173
        %vm3176 = vcmask 190594
        %3177 = vst.msk [vmem:[#allocation7 - $0x2] sm:$0x4] %vm3176, %v3174
        %3178 = vrot.lane.b32.xlu0 %v3163, 24
        %v3179 = vpop.permute.xlu0 %3178
        %vm3181 = vcmask 257219
        %3182 = vst.msk [vmem:[#allocation7 - $0x3] sm:$0x8] %vm3181, %v3179
        %3183 = vrot.lane.b32.xlu0 %v3163, 32
        %v3184 = vpop.permute.xlu0 %3183
        %vm3186 = vcmask 323844
        %3187 = vst.msk [vmem:[#allocation7 - $0x4] sm:$0x10] %vm3186, %v3184
        %3188 = vrot.lane.b32.xlu0 %v3163, 40
        %v3189 = vpop.permute.xlu0 %3188
        %vm3191 = vcmask 390469
        %3192 = vst.msk [vmem:[#allocation7 - $0x5] sm:$0x20] %vm3191, %v3189
        %3193 = vrot.lane.b32.xlu0 %v3163, 48
        %v3194 = vpop.permute.xlu0 %3193
        %vm3196 = vcmask 457094
        %3197 = vst.msk [vmem:[#allocation7 - $0x6] sm:$0x40] %vm3196, %v3194
        %3198 = vrot.lane.b32.xlu0 %v3163, 56
        %v3199 = vpop.permute.xlu0 %3198
        %vm3201 = vcmask 523719
        %3202 = vst.msk [vmem:[#allocation7 - $0x7] sm:$0x80] %vm3201, %v3199
        %3204 = vrot.lane.b32.xlu0 %v3164, 64
        %v3205 = vpop.permute.xlu0 %3204
        %vm3207 = vcmask 582144
        %3208 = vst.msk [vmem:[#allocation7] sm:$0x1] %vm3207, %v3205
        %3209 = vrot.lane.b32.xlu0 %v3164, 72
        %v3210 = vpop.permute.xlu0 %3209
        %vm3212 = vcmask 648769
        %3213 = vst.msk [vmem:[#allocation7 - $0x1] sm:$0x2] %vm3212, %v3210
        %3214 = vrot.lane.b32.xlu0 %v3164, 80
        %v3215 = vpop.permute.xlu0 %3214
        %vm3217 = vcmask 715394
        %3218 = vst.msk [vmem:[#allocation7 - $0x2] sm:$0x4] %vm3217, %v3215
        %3219 = vrot.lane.b32.xlu0 %v3164, 88
        %v3220 = vpop.permute.xlu0 %3219
        %vm3222 = vcmask 782019
        %3223 = vst.msk [vmem:[#allocation7 - $0x3] sm:$0x8] %vm3222, %v3220
        %3224 = vrot.lane.b32.xlu0 %v3164, 96
        %v3225 = vpop.permute.xlu0 %3224
        %vm3227 = vcmask 848644
        %3228 = vst.msk [vmem:[#allocation7 - $0x4] sm:$0x10] %vm3227, %v3225
        %3229 = vrot.lane.b32.xlu0 %v3164, 104
        %v3230 = vpop.permute.xlu0 %3229
        %vm3232 = vcmask 915269
        %3233 = vst.msk [vmem:[#allocation7 - $0x5] sm:$0x20] %vm3232, %v3230
        %3234 = vrot.lane.b32.xlu0 %v3164, 112
        %v3235 = vpop.permute.xlu0 %3234
        %vm3237 = vcmask 981894
        %3238 = vst.msk [vmem:[#allocation7 - $0x6] sm:$0x40] %vm3237, %v3235
        %3239 = vrot.lane.b32.xlu0 %v3164, 120
        %v3240 = vpop.permute.xlu0 %3239
        %vm3242 = vcmask 1048519
        %3243 = vst.msk [vmem:[#allocation7 - $0x7] sm:$0x80] %vm3242, %v3240
        %v3244 = vld [vmem:[#allocation7] sm:$0x1]
        %v3245 = vld [vmem:[%s5] sm:$0xff]
        %v3246 = vld [vmem:[%s5 + $0x8] sm:$0xff]
        %v3247 = vld [vmem:[%s5 + $0x10] sm:$0xff]
        %v3248 = vld [vmem:[%s5 + $0x18] sm:$0xff]
        %v3249 = vld [vmem:[%s5 + $0x20] sm:$0xff]
        %v3250 = vld [vmem:[%s5 + $0x28] sm:$0xff]
        %v3251 = vld [vmem:[%s5 + $0x30] sm:$0xff]
        %v3252 = vld [vmem:[%s5 + $0x38] sm:$0xff]
        %v3253 = vld [vmem:[%s5 + $0x40] sm:$0xff]
        %v3254 = vld [vmem:[%s5 + $0x48] sm:$0xff]
        %v3255 = vld [vmem:[%s5 + $0x50] sm:$0xff]
        %v3256 = vld [vmem:[%s5 + $0x58] sm:$0xff]
        %v3257 = vld [vmem:[%s5 + $0x60] sm:$0xff]
        %v3258 = vld [vmem:[%s5 + $0x68] sm:$0xff]
        %v3259 = vld [vmem:[%s5 + $0x70] sm:$0xff]
        %v3260 = vld [vmem:[%s5 + $0x78] sm:$0xff]
        %v3261 = vld [vmem:[%s6] sm:$0x1]
        %3262 = vmatprep.subr.mxu0 0.0
        %3263 = vmatpush1.msra.mxu0 %v3260
        %3264 = vmatprep.subr.mxu0 0.0
        %3265 = vmatpush1.msra.mxu0 %v3259
        %3266 = vmatprep.subr.mxu0 0.0
        %3267 = vmatpush1.msra.mxu0 %v3258
        %3268 = vmatprep.subr.mxu0 0.0
        %3269 = vmatpush1.msra.mxu0 %v3257
        %3270 = vmatprep.subr.mxu0 0.0
        %3271 = vmatpush1.msra.mxu0 %v3256
        %3272 = vmatprep.subr.mxu0 0.0
        %3273 = vmatpush1.msra.mxu0 %v3255
        %3274 = vmatprep.subr.mxu0 0.0
        %3275 = vmatpush1.msra.mxu0 %v3254
        %3276 = vmatprep.subr.mxu0 0.0
        %3277 = vmatpush1.msra.mxu0 %v3253
        %3278 = vmatprep.subr.mxu0 0.0
        %3279 = vmatpush1.msra.mxu0 %v3252
        %3280 = vmatprep.subr.mxu0 0.0
        %3281 = vmatpush1.msra.mxu0 %v3251
        %3282 = vmatprep.subr.mxu0 0.0
        %3283 = vmatpush1.msra.mxu0 %v3250
        %3284 = vmatprep.subr.mxu0 0.0
        %3285 = vmatpush1.msra.mxu0 %v3249
        %3286 = vmatprep.subr.mxu0 0.0
        %3287 = vmatpush1.msra.mxu0 %v3248
        %3288 = vmatprep.subr.mxu0 0.0
        %3289 = vmatpush1.msra.mxu0 %v3247
        %3290 = vmatprep.subr.mxu0 0.0
        %3291 = vmatpush1.msra.mxu0 %v3246
        %3292 = vmatprep.subr.mxu0 0.0
        %3293 = vmatpush1.msra.mxu0 %v3245
        %3294 = vmatprep.subr.mxu0 0.0
        %3295 = vmatpush2.msra.mxu0 0.0
        %3296 = vmatprep.subr.mxu0 0.0
        %3297 = vmatpush2.msra.mxu0 0.0
        %3298 = vmatprep.subr.mxu0 0.0
        %3299 = vmatpush2.msra.mxu0 0.0
        %3300 = vmatprep.subr.mxu0 0.0
        %3301 = vmatpush2.msra.mxu0 0.0
        %3302 = vmatprep.subr.mxu0 0.0
        %3303 = vmatpush2.msra.mxu0 0.0
        %3304 = vmatprep.subr.mxu0 0.0
        %3305 = vmatpush2.msra.mxu0 0.0
        %3306 = vmatprep.subr.mxu0 0.0
        %3307 = vmatpush2.msra.mxu0 0.0
        %3308 = vmatprep.subr.mxu0 0.0
        %3309 = vmatpush2.msra.mxu0 0.0
        %3310 = vmatprep.subr.mxu0 0.0
        %3311 = vmatpush2.msra.mxu0 0.0
        %3312 = vmatprep.subr.mxu0 0.0
        %3313 = vmatpush2.msra.mxu0 0.0
        %3314 = vmatprep.subr.mxu0 0.0
        %3315 = vmatpush2.msra.mxu0 0.0
        %3316 = vmatprep.subr.mxu0 0.0
        %3317 = vmatpush2.msra.mxu0 0.0
        %3318 = vmatprep.subr.mxu0 0.0
        %3319 = vmatpush2.msra.mxu0 0.0
        %3320 = vmatprep.subr.mxu0 0.0
        %3321 = vmatpush2.msra.mxu0 0.0
        %3322 = vmatprep.subr.mxu0 0.0
        %3323 = vmatpush2.msra.mxu0 0.0
        %3324 = vmatprep.subr.mxu0 0.0
        %3325 = vmatpush2.msra.mxu0 0.0
        %3326 = vmatprep.mubr.f32.mxu0 0.0
        %3327 = vmatmul.mubr.f32.gmra.mxu0 %v3244
        %v3328 = vpop.f32.mrf.mxu0
        %v3329 = vadd.f32 %v3261, %v3328
        %v3330 = vpop.f32.mrf.mxu0
        %3331 = vdwg.mxu0
        %v3332 = vmax.f32 %v3329, 0.0
        %v3333 = vld [vmem:[%s7] sm:$0xff]
        %v3334 = vld [vmem:[%s7 + $0x8] sm:$0xff]
        %v3335 = vld [vmem:[%s7 + $0x10] sm:$0xff]
        %v3336 = vld [vmem:[%s7 + $0x18] sm:$0xff]
        %v3337 = vld [vmem:[%s7 + $0x20] sm:$0xff]
        %v3338 = vld [vmem:[%s7 + $0x28] sm:$0xff]
        %v3339 = vld [vmem:[%s7 + $0x30] sm:$0xff]
        %v3340 = vld [vmem:[%s7 + $0x38] sm:$0xff]
        %v3341 = vld [vmem:[%s7 + $0x40] sm:$0xff]
        %v3342 = vld [vmem:[%s7 + $0x48] sm:$0xff]
        %v3343 = vld [vmem:[%s7 + $0x50] sm:$0xff]
        %v3344 = vld [vmem:[%s7 + $0x58] sm:$0xff]
        %v3345 = vld [vmem:[%s7 + $0x60] sm:$0xff]
        %v3346 = vld [vmem:[%s7 + $0x68] sm:$0xff]
        %v3347 = vld [vmem:[%s7 + $0x70] sm:$0xff]
        %v3348 = vld [vmem:[%s7 + $0x78] sm:$0xff]
        %v3349 = vld [vmem:[%s8] sm:$0x1]
        %3350 = vmatprep.subr.mxu0 0.0
        %3351 = vmatpush1.msra.mxu0 %v3348
        %3352 = vmatprep.subr.mxu0 0.0
        %3353 = vmatpush1.msra.mxu0 %v3347
        %3354 = vmatprep.subr.mxu0 0.0
        %3355 = vmatpush1.msra.mxu0 %v3346
        %3356 = vmatprep.subr.mxu0 0.0
        %3357 = vmatpush1.msra.mxu0 %v3345
        %3358 = vmatprep.subr.mxu0 0.0
        %3359 = vmatpush1.msra.mxu0 %v3344
        %3360 = vmatprep.subr.mxu0 0.0
        %3361 = vmatpush1.msra.mxu0 %v3343
        %3362 = vmatprep.subr.mxu0 0.0
        %3363 = vmatpush1.msra.mxu0 %v3342
        %3364 = vmatprep.subr.mxu0 0.0
        %3365 = vmatpush1.msra.mxu0 %v3341
        %3366 = vmatprep.subr.mxu0 0.0
        %3367 = vmatpush1.msra.mxu0 %v3340
        %3368 = vmatprep.subr.mxu0 0.0
        %3369 = vmatpush1.msra.mxu0 %v3339
        %3370 = vmatprep.subr.mxu0 0.0
        %3371 = vmatpush1.msra.mxu0 %v3338
        %3372 = vmatprep.subr.mxu0 0.0
        %3373 = vmatpush1.msra.mxu0 %v3337
        %3374 = vmatprep.subr.mxu0 0.0
        %3375 = vmatpush1.msra.mxu0 %v3336
        %3376 = vmatprep.subr.mxu0 0.0
        %3377 = vmatpush1.msra.mxu0 %v3335
        %3378 = vmatprep.subr.mxu0 0.0
        %3379 = vmatpush1.msra.mxu0 %v3334
        %3380 = vmatprep.subr.mxu0 0.0
        %3381 = vmatpush1.msra.mxu0 %v3333
        %3382 = vmatprep.subr.mxu0 0.0
        %3383 = vmatpush2.msra.mxu0 0.0
        %3384 = vmatprep.subr.mxu0 0.0
        %3385 = vmatpush2.msra.mxu0 0.0
        %3386 = vmatprep.subr.mxu0 0.0
        %3387 = vmatpush2.msra.mxu0 0.0
        %3388 = vmatprep.subr.mxu0 0.0
        %3389 = vmatpush2.msra.mxu0 0.0
        %3390 = vmatprep.subr.mxu0 0.0
        %3391 = vmatpush2.msra.mxu0 0.0
        %3392 = vmatprep.subr.mxu0 0.0
        %3393 = vmatpush2.msra.mxu0 0.0
        %3394 = vmatprep.subr.mxu0 0.0
        %3395 = vmatpush2.msra.mxu0 0.0
        %3396 = vmatprep.subr.mxu0 0.0
        %3397 = vmatpush2.msra.mxu0 0.0
        %3398 = vmatprep.subr.mxu0 0.0
        %3399 = vmatpush2.msra.mxu0 0.0
        %3400 = vmatprep.subr.mxu0 0.0
        %3401 = vmatpush2.msra.mxu0 0.0
        %3402 = vmatprep.subr.mxu0 0.0
        %3403 = vmatpush2.msra.mxu0 0.0
        %3404 = vmatprep.subr.mxu0 0.0
        %3405 = vmatpush2.msra.mxu0 0.0
        %3406 = vmatprep.subr.mxu0 0.0
        %3407 = vmatpush2.msra.mxu0 0.0
        %3408 = vmatprep.subr.mxu0 0.0
        %3409 = vmatpush2.msra.mxu0 0.0
        %3410 = vmatprep.subr.mxu0 0.0
        %3411 = vmatpush2.msra.mxu0 0.0
        %3412 = vmatprep.subr.mxu0 0.0
        %3413 = vmatpush2.msra.mxu0 0.0
        %3414 = vmatprep.mubr.f32.mxu0 0.0
        %3415 = vmatmul.mubr.f32.gmra.mxu0 %v3332
        %v3416 = vpop.f32.mrf.mxu0
        %v3417 = vadd.f32 %v3349, %v3416
        %v3418 = vpop.f32.mrf.mxu0
        %3419 = vdwg.mxu0
        %3420 = vst [vmem:[%s324] sm:$0x1] %v3417
        %s3421 = sand.u32 %s225, 1
        %s3422 = scalar_lea.sflag [#allocation9], %s3421
        %s3423 = sand.u32 %s225, 1
        %s3424 = scalar_lea.vmem [#allocation8], %s3423
        // Predicated region
        $region57: #{tpu_custom_call.1} parent=55 // pred_check
          %p3425 = pneg %p235
        $region58: #{tpu_custom_call.1} parent=55 // pred_check_branch
          %3427 = sbr.rel (%p3425) target = $region60
        $region59: #{tpu_custom_call.1} parent=55 // pred_region
          %s3429 = ssub.s32 16, 16
          %3430 = vsyncadd %s3422, %s3429
          %s3431 = smul.addr %s23, 16
          %s3432 = scalar_lea.hbm %s9, %s3431
          %s3434 = sshll.u32 %s3424, 4
          %s3435 = int_to_ptr.vmem [resolvable:$true] %s3434
          %3437 = dma.vmem_to_hbm [thread:$0]  %s3435, 16, %s3432, %s3422
        $region60: #{tpu_custom_call.1} parent=55 // pred_fallthru
          _
      $region56: #{tpu_custom_call.1} parent=5 // pred_fallthru
        _
      %p3438 = scmp.le.s32.totalorder 2, %s18
      // Predicated region
      $region61: #{tpu_custom_call.1} parent=5 // pred_check
        %p3439 = pneg %p3438
      $region62: #{tpu_custom_call.1} parent=5 // pred_check_branch
        %3441 = sbr.rel (%p3439) target = $region64
      $region63: #{tpu_custom_call.1} parent=5 // pred_region
        %s3442 = ssub.s32 %s18, 2
        // Predicated region
        $region65: #{tpu_custom_call.1} parent=63 // pred_check
          %p3443 = pneg %p241
        $region66: #{tpu_custom_call.1} parent=63 // pred_check_branch
          %3445 = sbr.rel (%p3443) target = $region68
        $region67: #{tpu_custom_call.1} parent=63 // pred_region
          %s3446 = sand.u32 %s226, 1
          %s3447 = scalar_lea.sflag [#allocation9], %s3446
          %s3448 = sand.u32 %s226, 1
          %s3449 = scalar_lea.vmem [#allocation8], %s3448
          %3450 = dma.done %s3447, 16
        $region68: #{tpu_custom_call.1} parent=63 // pred_fallthru
          _
      $region64: #{tpu_custom_call.1} parent=5 // pred_fallthru
        _
    $region6: #{tpu_custom_call.1} parent=1 // loop_footer
      %s22 = sadd.s32 1, %s18
    $region7: #{tpu_custom_call.1} parent=1 // loop_footer_branch
      %17 = sbr.rel target = $region3
    $region8: #{tpu_custom_call.1} parent=1 // loop_exit
      _
    %3451 = vsyncpa [#allocation9], 1
    %s3452 = scalar_lea.sflag [#allocation9], 1
    %3453 = vsyncpa %s3452, 1

</llo_original>
